<compile_context>
chip_gen: v7x
topology: tpu7x:2x2x1
jax: 0.10.0
libtpu: 0.0.40
codegen_flags: <defaults>
</compile_context>

<pallas_src>
import functools

import jax
import jax.numpy as jnp
from jax import lax
from jax.experimental import pallas as pl
from jax.experimental.pallas import tpu as pltpu


_SOBEL = ((1.0, 0.0, -1.0), (2.0, 0.0, -2.0), (1.0, 0.0, -1.0))
_XOFF = 8   # column offset of the image inside the padded VMEM scratch;
            # keeps the scratch store sublane-aligned (unmasked vst).


def _leaky(x, slope):
    return jnp.where(x >= 0, x, slope * x)


# ---------------------------------------------------------------------------
# Fused GraDenseblock kernel: one grid step per batch image.
# ---------------------------------------------------------------------------
def _gra_kernel(x_ref, w1_ref, b1_ref, s_ref, w2_ref, b2_ref, wt_ref, bt_ref,
                o_ref, xpad_ref, d1pad_ref, *, H, W, C):
    f32 = jnp.float32
    WPAD = W + 2 * _XOFF

    # ---- zero-pad x inside VMEM (no HBM pad round-trip) -------------------
    xpad_ref[...] = jnp.zeros((H + 2, WPAD, C), f32)
    xpad_ref[1:H + 1, _XOFF:_XOFF + W, :] = x_ref[0]
    xp = xpad_ref[...]

    # ---- im2col of x: 9 shifted taps concatenated on the lane/K axis ------
    cols = [xp[dy:dy + H, _XOFF - 1 + dx:_XOFF - 1 + dx + W, :].reshape(H * W, C)
            for dy in range(3) for dx in range(3)]
    mx = jnp.concatenate(cols, axis=-1)                        # (H*W, 9C) f32
    x_flat = cols[4]                                           # == x, (H*W, C)

    # ---- GEMM 1: folded depthwise+pointwise "conv1" (bf16 in, f32 acc) ----
    d1 = _leaky(jnp.dot(mx.astype(w1_ref.dtype), w1_ref[...],
                        preferred_element_type=f32) + b1_ref[...], 0.2)

    # ---- GEMM 2: both Sobel filters as one block-diagonal f32 matmul ------
    sob = jnp.dot(mx, s_ref[...], preferred_element_type=f32)  # (H*W, 2C)
    grad = jnp.abs(sob[:, :C]) + jnp.abs(sob[:, C:])           # Sobelxy(x)

    # ---- pad d1 in VMEM, build its taps, GEMM 3: "conv2" on cat(x, d1) ----
    d1pad_ref[...] = jnp.zeros((H + 2, WPAD, C), f32)
    d1pad_ref[1:H + 1, _XOFF:_XOFF + W, :] = d1.reshape(H, W, C)
    d1p = d1pad_ref[...]
    cols_d1 = [d1p[dy:dy + H, _XOFF - 1 + dx:_XOFF - 1 + dx + W, :]
               .reshape(H * W, C) for dy in range(3) for dx in range(3)]
    m1 = jnp.concatenate([mx] + cols_d1, axis=-1)              # (H*W, 18C)
    d2 = _leaky(jnp.dot(m1.astype(w2_ref.dtype), w2_ref[...],
                        preferred_element_type=f32) + b2_ref[...], 0.2)

    # ---- GEMM 4 (f32): conv3 on cat(x,d1,d2) + conv5 on Sobel, one K=4C ---
    tail = jnp.concatenate([x_flat, d1, d2, grad], axis=-1)    # (H*W, 4C)
    y = jnp.dot(tail, wt_ref[...], preferred_element_type=f32) + bt_ref[...]
    o_ref[0] = _leaky(y, 0.1)


# ---------------------------------------------------------------------------
# Wrapper: weight folding (done once, in plain XLA) + pallas_call
# ---------------------------------------------------------------------------
def _fold_params(p, C, O, gemm_dtype=jnp.bfloat16):
    f32 = jnp.float32
    # depthwise folded into pointwise:  W'[t] = diag(dw[t]) @ PW,  b' = db@PW + pb
    w1 = (p["dw1_w"][:, :, None] * p["pw1_w"][None, :, :]).reshape(9 * C, C)
    b1 = (p["dw1_b"] @ p["pw1_w"] + p["pw1_b"]).reshape(1, C)
    w2p = p["dw2_w"][:, :, None] * p["pw2_w"][None, :, :]           # (9, 2C, C)
    # K-order of the second im2col is [all x taps | all d1 taps]
    w2 = jnp.concatenate([w2p[:, :C, :].reshape(9 * C, C),
                          w2p[:, C:, :].reshape(9 * C, C)], axis=0)  # (18C, C)
    b2 = (p["dw2_b"] @ p["pw2_w"] + p["pw2_b"]).reshape(1, C)
    # Sobel x / Sobel y as one block-diagonal (scaled-identity per tap) matrix
    sob = jnp.array(_SOBEL, f32)
    eye = jnp.eye(C, dtype=f32)
    sxm = (sob.reshape(9)[:, None, None] * eye[None]).reshape(9 * C, C)
    sym = (sob.T.reshape(9)[:, None, None] * eye[None]).reshape(9 * C, C)
    s = jnp.concatenate([sxm, sym], axis=1)                          # (9C, 2C)
    # conv3 (on cat(x,d1,d2)) and conv5 (on sobel) fused into one GEMM
    wt = jnp.concatenate([p["w3"], p["w5"]], axis=0)                 # (4C, O)
    bt = (p["b3"] + p["b5"]).reshape(1, O)
    return (w1.astype(gemm_dtype), b1.astype(f32), s.astype(f32),
            w2.astype(gemm_dtype), b2.astype(f32),
            wt.astype(f32), bt.astype(f32))


def gra_denseblock_forward(x_nchw, params):
    N, C, H, W = x_nchw.shape
    O = params["w3"].shape[-1]
    x = jnp.transpose(x_nchw, (0, 2, 3, 1))                    # NCHW -> NHWC
    w1, b1, s, w2, b2, wt, bt = _fold_params(params, C, O)

    flops = 2 * N * H * W * C * (9 * C + 18 * C + 18 * C + 4 * O)
    bytes_accessed = (4 * N * H * W * (C + O)
                      + 2 * (9 * C * C + 18 * C * C)
                      + 4 * (9 * C * 2 * C + 4 * C * O + 2 * C + O))

    kern = functools.partial(_gra_kernel, H=H, W=W, C=C)
    out = pl.pallas_call(
        kern,
        out_shape=jax.ShapeDtypeStruct((N, H * W, O), jnp.float32),
        grid=(N,),
        in_specs=[
            pl.BlockSpec((1, H, W, C), lambda n: (n, 0, 0, 0)),
            pl.BlockSpec((9 * C, C), lambda n: (0, 0)),        # folded conv1
            pl.BlockSpec((1, C), lambda n: (0, 0)),
            pl.BlockSpec((9 * C, 2 * C), lambda n: (0, 0)),    # sobel matrix
            pl.BlockSpec((18 * C, C), lambda n: (0, 0)),       # folded conv2
            pl.BlockSpec((1, C), lambda n: (0, 0)),
            pl.BlockSpec((4 * C, O), lambda n: (0, 0)),        # conv3+conv5
            pl.BlockSpec((1, O), lambda n: (0, 0)),
        ],
        out_specs=pl.BlockSpec((1, H * W, O), lambda n: (n, 0, 0)),
        scratch_shapes=[
            pltpu.VMEM((H + 2, W + 2 * _XOFF, C), jnp.float32),  # padded x
            pltpu.VMEM((H + 2, W + 2 * _XOFF, C), jnp.float32),  # padded d1
        ],
        compiler_params=pltpu.CompilerParams(
            dimension_semantics=("parallel",)),
        cost_estimate=pl.CostEstimate(flops=flops, transcendentals=0,
                                      bytes_accessed=bytes_accessed),
    )(x, w1, b1, s, w2, b2, wt, bt)
    # TODO(synk): for very large H*W on v7x (64 MiB VMEM) add a spatial grid
    # axis with halo tiles; whole-image blocks are fine at these sizes.
    return jnp.transpose(out.reshape(N, H, W, O), (0, 3, 1, 2))   # -> NCHW


# ---------------------------------------------------------------------------
# Deterministic parameter init (PyTorch-default-style uniform bounds)
# ---------------------------------------------------------------------------
def _uniform(key, shape, bound):
    return jax.random.uniform(key, shape, jnp.float32, -bound, bound)


def init_params(key, channels, out_ch):
    C, O = channels, out_ch
    ks = jax.random.split(key, 12)
    dwb = 1.0 / 3.0                                    # depthwise fan_in = 9
    return dict(
        dw1_w=_uniform(ks[0], (9, C), dwb),
        dw1_b=_uniform(ks[1], (C,), dwb),
        pw1_w=_uniform(ks[2], (C, C), 1.0 / C ** 0.5),
        pw1_b=_uniform(ks[3], (C,), 1.0 / C ** 0.5),
        dw2_w=_uniform(ks[4], (9, 2 * C), dwb),
        dw2_b=_uniform(ks[5], (2 * C,), dwb),
        pw2_w=_uniform(ks[6], (2 * C, C), 1.0 / (2 * C) ** 0.5),
        pw2_b=_uniform(ks[7], (C,), 1.0 / (2 * C) ** 0.5),
        w3=_uniform(ks[8], (3 * C, O), 1.0 / (3 * C) ** 0.5),
        b3=_uniform(ks[9], (O,), 1.0 / (3 * C) ** 0.5),
        w5=_uniform(ks[10], (C, O), 1.0 / C ** 0.5),
        b5=_uniform(ks[11], (O,), 1.0 / C ** 0.5),
    )


# ---------------------------------------------------------------------------
# Pure-JAX f32 reference (for the correctness check)
# ---------------------------------------------------------------------------
def _ref_dwconv3x3(x, dw9, db):
    c = x.shape[-1]
    w = dw9.reshape(3, 3, 1, c)
    return lax.conv_general_dilated(
        x, w, (1, 1), "SAME",
        dimension_numbers=("NHWC", "HWIO", "NHWC"),
        feature_group_count=c) + db


def _ref_pointwise(x, w, b):
    return jnp.einsum("nhwc,co->nhwo", x, w) + b


def _ref_sobel(x):
    c = x.shape[-1]
    sob = jnp.array(_SOBEL, jnp.float32)
    wx = jnp.broadcast_to(sob[:, :, None, None], (3, 3, 1, c))
    wy = jnp.broadcast_to(sob.T[:, :, None, None], (3, 3, 1, c))
    dn = ("NHWC", "HWIO", "NHWC")
    sx = lax.conv_general_dilated(x, wx, (1, 1), "SAME",
                                  dimension_numbers=dn, feature_group_count=c)
    sy = lax.conv_general_dilated(x, wy, (1, 1), "SAME",
                                  dimension_numbers=dn, feature_group_count=c)
    return jnp.abs(sx) + jnp.abs(sy)


def gra_denseblock_ref(x_nchw, p):
    x = jnp.transpose(x_nchw, (0, 2, 3, 1))
    d1 = _leaky(_ref_pointwise(_ref_dwconv3x3(x, p["dw1_w"], p["dw1_b"]),
                               p["pw1_w"], p["pw1_b"]), 0.2)
    c1 = jnp.concatenate([x, d1], axis=-1)
    d2 = _leaky(_ref_pointwise(_ref_dwconv3x3(c1, p["dw2_w"], p["dw2_b"]),
                               p["pw2_w"], p["pw2_b"]), 0.2)
    c2 = jnp.concatenate([c1, d2], axis=-1)
    x1 = _ref_pointwise(c2, p["w3"], p["b3"])
    x4 = _ref_pointwise(_ref_sobel(x), p["w5"], p["b5"])
    return jnp.transpose(_leaky(x1 + x4, 0.1), (0, 3, 1, 2))


# ---------------------------------------------------------------------------
if __name__ == "__main__":
    key = jax.random.PRNGKey(0)
    N, C, H, W = 2, 8, 16, 16
    out_ch = 16

    kx, kp = jax.random.split(key)
    x = jax.random.normal(kx, (N, C, H, W), jnp.float32)      # NCHW like torch
    params = init_params(kp, C, out_ch)

    out = jax.jit(gra_denseblock_forward)(x, params)
    out = jax.block_until_ready(out)
    assert out.shape == (N, out_ch, H, W), out.shape

    ref = gra_denseblock_ref(x, params)
    # Learned conv GEMMs run with bf16 inputs (f32 accumulation) -> ~1e-2
    # level differences vs the f32 reference are expected; tolerance relaxed.
    assert jnp.allclose(out, ref, atol=5e-2, rtol=5e-2), \
        float(jnp.max(jnp.abs(out - ref)))

    print("KERNEL_OK")
</pallas_src>

<mosaic_0001>
module attributes {stable_mosaic.version = 11 : i64} {
  func.func @_gra_kernel(%arg0: i32, %arg1: memref<1x16x16x8xf32, #tpu.memory_space<vmem>>, %arg2: memref<72x8xbf16, #tpu.memory_space<vmem>>, %arg3: memref<1x8xf32, #tpu.memory_space<vmem>>, %arg4: memref<72x16xf32, #tpu.memory_space<vmem>>, %arg5: memref<144x8xbf16, #tpu.memory_space<vmem>>, %arg6: memref<1x8xf32, #tpu.memory_space<vmem>>, %arg7: memref<32x16xf32, #tpu.memory_space<vmem>>, %arg8: memref<1x16xf32, #tpu.memory_space<vmem>>, %arg9: memref<1x256x16xf32, #tpu.memory_space<vmem>>, %arg10: memref<18x32x8xf32, #tpu.memory_space<vmem>>, %arg11: memref<18x32x8xf32, #tpu.memory_space<vmem>>) attributes {dimension_semantics = [#tpu.dimension_semantics<parallel>], iteration_bounds = array<i64: 2>, scalar_prefetch = 0 : i64, scratch_operands = 2 : i64, tpu.core_type = #tpu.core_type<tc>, window_params = [{transform_indices = @transform_0, window_bounds = array<i64: 1, 16, 16, 8>}, {pipeline_mode = #tpu.pipeline_mode<synchronous>, transform_indices = @transform_1, window_bounds = array<i64: 72, 8>}, {pipeline_mode = #tpu.pipeline_mode<synchronous>, transform_indices = @transform_2, window_bounds = array<i64: 1, 8>}, {pipeline_mode = #tpu.pipeline_mode<synchronous>, transform_indices = @transform_3, window_bounds = array<i64: 72, 16>}, {pipeline_mode = #tpu.pipeline_mode<synchronous>, transform_indices = @transform_4, window_bounds = array<i64: 144, 8>}, {pipeline_mode = #tpu.pipeline_mode<synchronous>, transform_indices = @transform_5, window_bounds = array<i64: 1, 8>}, {pipeline_mode = #tpu.pipeline_mode<synchronous>, transform_indices = @transform_6, window_bounds = array<i64: 32, 16>}, {pipeline_mode = #tpu.pipeline_mode<synchronous>, transform_indices = @transform_7, window_bounds = array<i64: 1, 16>}, {transform_indices = @transform_8, window_bounds = array<i64: 1, 256, 16>}]} {
    %cst = arith.constant 0.000000e+00 : f32
    %0 = vector.broadcast %cst : f32 to vector<18x32x8xf32>
    %c0 = arith.constant 0 : index
    %c0_0 = arith.constant 0 : index
    %c0_1 = arith.constant 0 : index
    %1 = vector.load %arg10[%c0, %c0_0, %c0_1] : memref<18x32x8xf32, #tpu.memory_space<vmem>>, vector<18x32x8xf32>
    tpu.vector_store %arg10[%c0, %c0_0, %c0_1], %0 {strides = array<i32>} : memref<18x32x8xf32, #tpu.memory_space<vmem>>, vector<18x32x8xf32>,
    %c0_2 = arith.constant 0 : index
    %c0_3 = arith.constant 0 : index
    %c0_4 = arith.constant 0 : index
    %c0_5 = arith.constant 0 : index
    %2 = vector.load %arg1[%c0_2, %c0_3, %c0_4, %c0_5] : memref<1x16x16x8xf32, #tpu.memory_space<vmem>>, vector<1x16x16x8xf32>
    %3 = vector.shape_cast %2 : vector<1x16x16x8xf32> to vector<16x16x8xf32>
    %c1 = arith.constant 1 : index
    %c8 = arith.constant 8 : index
    %c0_6 = arith.constant 0 : index
    %4 = vector.load %arg10[%c1, %c8, %c0_6] : memref<18x32x8xf32, #tpu.memory_space<vmem>>, vector<16x16x8xf32>
    tpu.vector_store %arg10[%c1, %c8, %c0_6], %3 {strides = array<i32>} : memref<18x32x8xf32, #tpu.memory_space<vmem>>, vector<16x16x8xf32>,
    %c0_7 = arith.constant 0 : index
    %c0_8 = arith.constant 0 : index
    %c0_9 = arith.constant 0 : index
    %5 = vector.load %arg10[%c0_7, %c0_8, %c0_9] : memref<18x32x8xf32, #tpu.memory_space<vmem>>, vector<18x32x8xf32>
    %6 = vector.extract_strided_slice %5 {offsets = [0, 7, 0], sizes = [16, 16, 8], strides = [1, 1, 1]} : vector<18x32x8xf32> to vector<16x16x8xf32>
    %7 = vector.shape_cast %6 : vector<16x16x8xf32> to vector<256x8xf32>
    %8 = vector.extract_strided_slice %5 {offsets = [0, 8, 0], sizes = [16, 16, 8], strides = [1, 1, 1]} : vector<18x32x8xf32> to vector<16x16x8xf32>
    %9 = vector.shape_cast %8 : vector<16x16x8xf32> to vector<256x8xf32>
    %10 = vector.extract_strided_slice %5 {offsets = [0, 9, 0], sizes = [16, 16, 8], strides = [1, 1, 1]} : vector<18x32x8xf32> to vector<16x16x8xf32>
    %11 = vector.shape_cast %10 : vector<16x16x8xf32> to vector<256x8xf32>
    %12 = vector.extract_strided_slice %5 {offsets = [1, 7, 0], sizes = [16, 16, 8], strides = [1, 1, 1]} : vector<18x32x8xf32> to vector<16x16x8xf32>
    %13 = vector.shape_cast %12 : vector<16x16x8xf32> to vector<256x8xf32>
    %14 = vector.extract_strided_slice %5 {offsets = [1, 8, 0], sizes = [16, 16, 8], strides = [1, 1, 1]} : vector<18x32x8xf32> to vector<16x16x8xf32>
    %15 = vector.shape_cast %14 : vector<16x16x8xf32> to vector<256x8xf32>
    %16 = vector.extract_strided_slice %5 {offsets = [1, 9, 0], sizes = [16, 16, 8], strides = [1, 1, 1]} : vector<18x32x8xf32> to vector<16x16x8xf32>
    %17 = vector.shape_cast %16 : vector<16x16x8xf32> to vector<256x8xf32>
    %18 = vector.extract_strided_slice %5 {offsets = [2, 7, 0], sizes = [16, 16, 8], strides = [1, 1, 1]} : vector<18x32x8xf32> to vector<16x16x8xf32>
    %19 = vector.shape_cast %18 : vector<16x16x8xf32> to vector<256x8xf32>
    %20 = vector.extract_strided_slice %5 {offsets = [2, 8, 0], sizes = [16, 16, 8], strides = [1, 1, 1]} : vector<18x32x8xf32> to vector<16x16x8xf32>
    %21 = vector.shape_cast %20 : vector<16x16x8xf32> to vector<256x8xf32>
    %22 = vector.extract_strided_slice %5 {offsets = [2, 9, 0], sizes = [16, 16, 8], strides = [1, 1, 1]} : vector<18x32x8xf32> to vector<16x16x8xf32>
    %23 = vector.shape_cast %22 : vector<16x16x8xf32> to vector<256x8xf32>
    %24 = tpu.concatenate %7, %9, %11, %13, %15, %17, %19, %21, %23 in 1 : vector<256x8xf32>, vector<256x8xf32>, vector<256x8xf32>, vector<256x8xf32>, vector<256x8xf32>, vector<256x8xf32>, vector<256x8xf32>, vector<256x8xf32>, vector<256x8xf32> -> vector<256x72xf32>
    %25 = arith.truncf %24 : vector<256x72xf32> to vector<256x72xbf16>
    %c0_10 = arith.constant 0 : index
    %c0_11 = arith.constant 0 : index
    %26 = vector.load %arg2[%c0_10, %c0_11] : memref<72x8xbf16, #tpu.memory_space<vmem>>, vector<72x8xbf16>
    %cst_12 = arith.constant dense<0.000000e+00> : vector<256x8xf32>
    %27 = tpu.matmul %25, %26, %cst_12 {dimension_numbers = #tpu.dot_dimension_numbers<[1], [0], [0], [1], [0, 0, 1, 1], [], []>} : vector<256x72xbf16>, vector<72x8xbf16>, vector<256x8xf32> -> vector<256x8xf32>
    %c0_13 = arith.constant 0 : index
    %c0_14 = arith.constant 0 : index
    %28 = vector.load %arg3[%c0_13, %c0_14] : memref<1x8xf32, #tpu.memory_space<vmem>>, vector<1x8xf32>
    %29 = vector.broadcast %28 : vector<1x8xf32> to vector<256x8xf32>
    %30 = arith.addf %27, %29 : vector<256x8xf32>
    %cst_15 = arith.constant 0.000000e+00 : f32
    %31 = vector.broadcast %cst_15 : f32 to vector<256x8xf32>
    %32 = arith.cmpf oge, %30, %31 : vector<256x8xf32>
    %cst_16 = arith.constant 2.000000e-01 : f32
    %33 = vector.broadcast %cst_16 : f32 to vector<256x8xf32>
    %34 = arith.mulf %33, %30 : vector<256x8xf32>
    %35 = arith.select %32, %30, %34 : vector<256x8xi1>, vector<256x8xf32>
    %c0_17 = arith.constant 0 : index
    %c0_18 = arith.constant 0 : index
    %36 = vector.load %arg4[%c0_17, %c0_18] : memref<72x16xf32, #tpu.memory_space<vmem>>, vector<72x16xf32>
    %cst_19 = arith.constant dense<0.000000e+00> : vector<256x16xf32>
    %37 = tpu.matmul %24, %36, %cst_19 {dimension_numbers = #tpu.dot_dimension_numbers<[1], [0], [0], [1], [0, 0, 1, 1], [], []>} : vector<256x72xf32>, vector<72x16xf32>, vector<256x16xf32> -> vector<256x16xf32>
    %38 = vector.extract_strided_slice %37 {offsets = [0, 0], sizes = [256, 8], strides = [1, 1]} : vector<256x16xf32> to vector<256x8xf32>
    %39 = math.absf %38 : vector<256x8xf32>
    %40 = vector.extract_strided_slice %37 {offsets = [0, 8], sizes = [256, 8], strides = [1, 1]} : vector<256x16xf32> to vector<256x8xf32>
    %41 = math.absf %40 : vector<256x8xf32>
    %42 = arith.addf %39, %41 : vector<256x8xf32>
    %cst_20 = arith.constant 0.000000e+00 : f32
    %43 = vector.broadcast %cst_20 : f32 to vector<18x32x8xf32>
    %c0_21 = arith.constant 0 : index
    %c0_22 = arith.constant 0 : index
    %c0_23 = arith.constant 0 : index
    %44 = vector.load %arg11[%c0_21, %c0_22, %c0_23] : memref<18x32x8xf32, #tpu.memory_space<vmem>>, vector<18x32x8xf32>
    tpu.vector_store %arg11[%c0_21, %c0_22, %c0_23], %43 {strides = array<i32>} : memref<18x32x8xf32, #tpu.memory_space<vmem>>, vector<18x32x8xf32>,
    %45 = vector.shape_cast %35 : vector<256x8xf32> to vector<16x16x8xf32>
    %c1_24 = arith.constant 1 : index
    %c8_25 = arith.constant 8 : index
    %c0_26 = arith.constant 0 : index
    %46 = vector.load %arg11[%c1_24, %c8_25, %c0_26] : memref<18x32x8xf32, #tpu.memory_space<vmem>>, vector<16x16x8xf32>
    tpu.vector_store %arg11[%c1_24, %c8_25, %c0_26], %45 {strides = array<i32>} : memref<18x32x8xf32, #tpu.memory_space<vmem>>, vector<16x16x8xf32>,
    %c0_27 = arith.constant 0 : index
    %c0_28 = arith.constant 0 : index
    %c0_29 = arith.constant 0 : index
    %47 = vector.load %arg11[%c0_27, %c0_28, %c0_29] : memref<18x32x8xf32, #tpu.memory_space<vmem>>, vector<18x32x8xf32>
    %48 = vector.extract_strided_slice %47 {offsets = [0, 7, 0], sizes = [16, 16, 8], strides = [1, 1, 1]} : vector<18x32x8xf32> to vector<16x16x8xf32>
    %49 = vector.shape_cast %48 : vector<16x16x8xf32> to vector<256x8xf32>
    %50 = vector.extract_strided_slice %47 {offsets = [0, 8, 0], sizes = [16, 16, 8], strides = [1, 1, 1]} : vector<18x32x8xf32> to vector<16x16x8xf32>
    %51 = vector.shape_cast %50 : vector<16x16x8xf32> to vector<256x8xf32>
    %52 = vector.extract_strided_slice %47 {offsets = [0, 9, 0], sizes = [16, 16, 8], strides = [1, 1, 1]} : vector<18x32x8xf32> to vector<16x16x8xf32>
    %53 = vector.shape_cast %52 : vector<16x16x8xf32> to vector<256x8xf32>
    %54 = vector.extract_strided_slice %47 {offsets = [1, 7, 0], sizes = [16, 16, 8], strides = [1, 1, 1]} : vector<18x32x8xf32> to vector<16x16x8xf32>
    %55 = vector.shape_cast %54 : vector<16x16x8xf32> to vector<256x8xf32>
    %56 = vector.extract_strided_slice %47 {offsets = [1, 8, 0], sizes = [16, 16, 8], strides = [1, 1, 1]} : vector<18x32x8xf32> to vector<16x16x8xf32>
    %57 = vector.shape_cast %56 : vector<16x16x8xf32> to vector<256x8xf32>
    %58 = vector.extract_strided_slice %47 {offsets = [1, 9, 0], sizes = [16, 16, 8], strides = [1, 1, 1]} : vector<18x32x8xf32> to vector<16x16x8xf32>
    %59 = vector.shape_cast %58 : vector<16x16x8xf32> to vector<256x8xf32>
    %60 = vector.extract_strided_slice %47 {offsets = [2, 7, 0], sizes = [16, 16, 8], strides = [1, 1, 1]} : vector<18x32x8xf32> to vector<16x16x8xf32>
    %61 = vector.shape_cast %60 : vector<16x16x8xf32> to vector<256x8xf32>
    %62 = vector.extract_strided_slice %47 {offsets = [2, 8, 0], sizes = [16, 16, 8], strides = [1, 1, 1]} : vector<18x32x8xf32> to vector<16x16x8xf32>
    %63 = vector.shape_cast %62 : vector<16x16x8xf32> to vector<256x8xf32>
    %64 = vector.extract_strided_slice %47 {offsets = [2, 9, 0], sizes = [16, 16, 8], strides = [1, 1, 1]} : vector<18x32x8xf32> to vector<16x16x8xf32>
    %65 = vector.shape_cast %64 : vector<16x16x8xf32> to vector<256x8xf32>
    %66 = tpu.concatenate %24, %49, %51, %53, %55, %57, %59, %61, %63, %65 in 1 : vector<256x72xf32>, vector<256x8xf32>, vector<256x8xf32>, vector<256x8xf32>, vector<256x8xf32>, vector<256x8xf32>, vector<256x8xf32>, vector<256x8xf32>, vector<256x8xf32>, vector<256x8xf32> -> vector<256x144xf32>
    %67 = arith.truncf %66 : vector<256x144xf32> to vector<256x144xbf16>
    %c0_30 = arith.constant 0 : index
    %c0_31 = arith.constant 0 : index
    %68 = vector.load %arg5[%c0_30, %c0_31] : memref<144x8xbf16, #tpu.memory_space<vmem>>, vector<144x8xbf16>
    %cst_32 = arith.constant dense<0.000000e+00> : vector<256x8xf32>
    %69 = tpu.matmul %67, %68, %cst_32 {dimension_numbers = #tpu.dot_dimension_numbers<[1], [0], [0], [1], [0, 0, 1, 1], [], []>} : vector<256x144xbf16>, vector<144x8xbf16>, vector<256x8xf32> -> vector<256x8xf32>
    %c0_33 = arith.constant 0 : index
    %c0_34 = arith.constant 0 : index
    %70 = vector.load %arg6[%c0_33, %c0_34] : memref<1x8xf32, #tpu.memory_space<vmem>>, vector<1x8xf32>
    %71 = vector.broadcast %70 : vector<1x8xf32> to vector<256x8xf32>
    %72 = arith.addf %69, %71 : vector<256x8xf32>
    %cst_35 = arith.constant 0.000000e+00 : f32
    %73 = vector.broadcast %cst_35 : f32 to vector<256x8xf32>
    %74 = arith.cmpf oge, %72, %73 : vector<256x8xf32>
    %cst_36 = arith.constant 2.000000e-01 : f32
    %75 = vector.broadcast %cst_36 : f32 to vector<256x8xf32>
    %76 = arith.mulf %75, %72 : vector<256x8xf32>
    %77 = arith.select %74, %72, %76 : vector<256x8xi1>, vector<256x8xf32>
    %78 = tpu.concatenate %15, %35, %77, %42 in 1 : vector<256x8xf32>, vector<256x8xf32>, vector<256x8xf32>, vector<256x8xf32> -> vector<256x32xf32>
    %c0_37 = arith.constant 0 : index
    %c0_38 = arith.constant 0 : index
    %79 = vector.load %arg7[%c0_37, %c0_38] : memref<32x16xf32, #tpu.memory_space<vmem>>, vector<32x16xf32>
    %cst_39 = arith.constant dense<0.000000e+00> : vector<256x16xf32>
    %80 = tpu.matmul %78, %79, %cst_39 {dimension_numbers = #tpu.dot_dimension_numbers<[1], [0], [0], [1], [0, 0, 1, 1], [], []>} : vector<256x32xf32>, vector<32x16xf32>, vector<256x16xf32> -> vector<256x16xf32>
    %c0_40 = arith.constant 0 : index
    %c0_41 = arith.constant 0 : index
    %81 = vector.load %arg8[%c0_40, %c0_41] : memref<1x16xf32, #tpu.memory_space<vmem>>, vector<1x16xf32>
    %82 = vector.broadcast %81 : vector<1x16xf32> to vector<256x16xf32>
    %83 = arith.addf %80, %82 : vector<256x16xf32>
    %cst_42 = arith.constant 0.000000e+00 : f32
    %84 = vector.broadcast %cst_42 : f32 to vector<256x16xf32>
    %85 = arith.cmpf oge, %83, %84 : vector<256x16xf32>
    %cst_43 = arith.constant 1.000000e-01 : f32
    %86 = vector.broadcast %cst_43 : f32 to vector<256x16xf32>
    %87 = arith.mulf %86, %83 : vector<256x16xf32>
    %88 = arith.select %85, %83, %87 : vector<256x16xi1>, vector<256x16xf32>
    %c0_44 = arith.constant 0 : index
    %c0_45 = arith.constant 0 : index
    %c0_46 = arith.constant 0 : index
    %89 = vector.load %arg9[%c0_44, %c0_45, %c0_46] : memref<1x256x16xf32, #tpu.memory_space<vmem>>, vector<1x256x16xf32>
    %90 = vector.shape_cast %89 : vector<1x256x16xf32> to vector<256x16xf32>
    %91 = vector.shape_cast %88 : vector<256x16xf32> to vector<1x256x16xf32>
    tpu.vector_store %arg9[%c0_44, %c0_45, %c0_46], %91 {strides = array<i32>} : memref<1x256x16xf32, #tpu.memory_space<vmem>>, vector<1x256x16xf32>,
    return
  }
  func.func @transform_0(%arg0: i32) -> (i32, i32, i32, i32) {
    %c0_i32 = arith.constant 0 : i32
    %c0_i32_0 = arith.constant 0 : i32
    %c0_i32_1 = arith.constant 0 : i32
    %c0_i32_2 = arith.constant 0 : i32
    return %arg0, %c0_i32, %c0_i32_0, %c0_i32_1 : i32, i32, i32, i32
  }
  func.func @transform_1(%arg0: i32) -> (i32, i32) {
    %c0_i32 = arith.constant 0 : i32
    %c0_i32_0 = arith.constant 0 : i32
    %c0_i32_1 = arith.constant 0 : i32
    return %c0_i32, %c0_i32_0 : i32, i32
  }
  func.func @transform_2(%arg0: i32) -> (i32, i32) {
    %c0_i32 = arith.constant 0 : i32
    %c0_i32_0 = arith.constant 0 : i32
    %c0_i32_1 = arith.constant 0 : i32
    return %c0_i32, %c0_i32_0 : i32, i32
  }
  func.func @transform_3(%arg0: i32) -> (i32, i32) {
    %c0_i32 = arith.constant 0 : i32
    %c0_i32_0 = arith.constant 0 : i32
    %c0_i32_1 = arith.constant 0 : i32
    return %c0_i32, %c0_i32_0 : i32, i32
  }
  func.func @transform_4(%arg0: i32) -> (i32, i32) {
    %c0_i32 = arith.constant 0 : i32
    %c0_i32_0 = arith.constant 0 : i32
    %c0_i32_1 = arith.constant 0 : i32
    return %c0_i32, %c0_i32_0 : i32, i32
  }
  func.func @transform_5(%arg0: i32) -> (i32, i32) {
    %c0_i32 = arith.constant 0 : i32
    %c0_i32_0 = arith.constant 0 : i32
    %c0_i32_1 = arith.constant 0 : i32
    return %c0_i32, %c0_i32_0 : i32, i32
  }
  func.func @transform_6(%arg0: i32) -> (i32, i32) {
    %c0_i32 = arith.constant 0 : i32
    %c0_i32_0 = arith.constant 0 : i32
    %c0_i32_1 = arith.constant 0 : i32
    return %c0_i32, %c0_i32_0 : i32, i32
  }
  func.func @transform_7(%arg0: i32) -> (i32, i32) {
    %c0_i32 = arith.constant 0 : i32
    %c0_i32_0 = arith.constant 0 : i32
    %c0_i32_1 = arith.constant 0 : i32
    return %c0_i32, %c0_i32_0 : i32, i32
  }
  func.func @transform_8(%arg0: i32) -> (i32, i32, i32) {
    %c0_i32 = arith.constant 0 : i32
    %c0_i32_0 = arith.constant 0 : i32
    %c0_i32_1 = arith.constant 0 : i32
    return %arg0, %c0_i32, %c0_i32_0 : i32, i32, i32
  }
}

</mosaic_0001>

<llo_original>
// kernel: gra_denseblock_forward.1
$region0: #{gra_denseblock_forward.1}
  #allocation0 [shape = 'u32[]', space=smem, size = 0x4, offset = 0x4, fixed_abs, tag = 'smem constant byte address 0x4 - core index']
  #allocation1 [shape = 'u32[144,128]{1,0:T(1,128)}', space=vmem, size = 0x12000, scoped, tag = 'internal scratch']
  #allocation2 [shape = 'f32[18,32,8]{2,1,0:T(8,128)}', space=vmem, size = 0x48000, scoped, tag = 'scratch operand']
  #allocation3 [shape = 'f32[18,32,8]{2,1,0:T(8,128)}', space=vmem, size = 0x48000, scoped, tag = 'scratch operand']
  %s0 = inlined_call_operand.vmem [shape: f32[2,16,16,8], index: 0, kind: input, shape index: {}]
  %s1 = inlined_call_operand.vmem [shape: bf16[72,8], index: 1, kind: input, shape index: {}]
  %s2 = inlined_call_operand.vmem [shape: f32[1,8], index: 2, kind: input, shape index: {}]
  %s3 = inlined_call_operand.vmem [shape: f32[72,16], index: 3, kind: input, shape index: {}]
  %s4 = inlined_call_operand.vmem [shape: bf16[144,8], index: 4, kind: input, shape index: {}]
  %s5 = inlined_call_operand.vmem [shape: f32[1,8], index: 5, kind: input, shape index: {}]
  %s6 = inlined_call_operand.vmem [shape: f32[32,16], index: 6, kind: input, shape index: {}]
  %s7 = inlined_call_operand.vmem [shape: f32[1,16], index: 7, kind: input, shape index: {}]
  %s8 = inlined_call_operand.vmem [shape: f32[2,256,16], index: 8, kind: output, shape index: {}]
  %s9 = sld [smem:[#allocation0]]
  $region65: #{gra_denseblock_forward.1} parent=0
    _
  %s11 = ssub.s32 1, %s9
  %s12 = scalar_select 0, %s11, %s9
  loop: start=0, step=1, limit=4
  $region2: #{gra_denseblock_forward.1} parent=0 // loop_pre_header
    _
  $region3: #{gra_denseblock_forward.1} parent=0 // loop_header
    %s14 = sphi 0, %s18
    %p15 = scmp.ge.s32.totalorder %s14, 4
    %s24 = sphi 0, %s26
    %s27 = sphi 0, %s24
    %s28 = sphi 0, %s27
    %s44 = sphi 0, %s28
    %s48 = sphi 0, %s48
    %s50 = sphi 0, %s48
    %s51 = sphi 0, %s50
    %s65 = sphi 0, %s51
    %s69 = sphi 0, %s69
    %s71 = sphi 0, %s69
    %s72 = sphi 0, %s71
    %s86 = sphi 0, %s72
    %s90 = sphi 0, %s90
    %s92 = sphi 0, %s90
    %s93 = sphi 0, %s92
    %s107 = sphi 0, %s93
    %s111 = sphi 0, %s111
    %s113 = sphi 0, %s111
    %s114 = sphi 0, %s113
    %s128 = sphi 0, %s114
    %s132 = sphi 0, %s132
    %s134 = sphi 0, %s132
    %s135 = sphi 0, %s134
    %s149 = sphi 0, %s135
    %s153 = sphi 0, %s153
    %s155 = sphi 0, %s153
    %s156 = sphi 0, %s155
    %s170 = sphi 0, %s156
    %s174 = sphi 0, %s174
    %s176 = sphi 0, %s174
    %s177 = sphi 0, %s176
    %s191 = sphi 0, %s177
    %s197 = sphi 0, %s199
    %s200 = sphi 0, %s197
    %s201 = sphi 0, %s200
    %s217 = sphi 0, %s201
  $region4: #{gra_denseblock_forward.1} parent=0 // loop_header_branch
    %17 = sbr.rel (%p15) target = $region8
  $region5: #{gra_denseblock_forward.1} parent=0 // loop_body
    %s19 = ssub.s32 %s14, 1
    %s20 = ssub.s32 %s14, 2
    %s21 = sadd.s32 %s14, 1
    %s22 = ssub.s32 %s14, %s21
    %p23 = scmp.eq.s32.totalorder %s22, 0
    %s25 = sadd.s32 %s24, 1
    %s26 = scalar_select %p23, %s24, %s25
    %p29 = pneg %p23
    %p30 = scmp.eq.s32.totalorder %s14, 1
    %p31 = por %p29, %p30
    %p32 = scmp.ne.s32.totalorder %s24, %s27
    %p33 = scmp.eq.s32.totalorder %s14, 0
    %p34 = por %p32, %p33
    %p35 = scmp.ne.s32.totalorder %s24, %s27
    %p36 = scmp.eq.s32.totalorder %s19, 1
    %p37 = por %p35, %p36
    %p38 = scmp.ne.s32.totalorder %s27, %s28
    %p39 = scmp.eq.s32.totalorder %s19, 0
    %p40 = por %p38, %p39
    %p41 = scmp.ne.s32.totalorder %s27, %s28
    %p42 = scmp.eq.s32.totalorder %s20, 1
    %p43 = por %p41, %p42
    %p45 = scmp.ne.s32.totalorder %s28, %s44
    %p46 = scmp.eq.s32.totalorder %s20, 0
    %p47 = por %p45, %p46
    %s49 = sadd.s32 %s48, 1
    %p52 = scmp.eq.s32.totalorder %s14, 1
    %p53 = scmp.ne.s32.totalorder %s48, %s50
    %p54 = scmp.eq.s32.totalorder %s14, 0
    %p55 = por %p53, %p54
    %p56 = scmp.ne.s32.totalorder %s48, %s50
    %p57 = scmp.eq.s32.totalorder %s19, 1
    %p58 = por %p56, %p57
    %p59 = scmp.ne.s32.totalorder %s50, %s51
    %p60 = scmp.eq.s32.totalorder %s19, 0
    %p61 = por %p59, %p60
    %p62 = scmp.ne.s32.totalorder %s50, %s51
    %p63 = scmp.eq.s32.totalorder %s20, 1
    %p64 = por %p62, %p63
    %p66 = scmp.ne.s32.totalorder %s51, %s65
    %p67 = scmp.eq.s32.totalorder %s20, 0
    %p68 = por %p66, %p67
    %s70 = sadd.s32 %s69, 1
    %p73 = scmp.eq.s32.totalorder %s14, 1
    %p74 = scmp.ne.s32.totalorder %s69, %s71
    %p75 = scmp.eq.s32.totalorder %s14, 0
    %p76 = por %p74, %p75
    %p77 = scmp.ne.s32.totalorder %s69, %s71
    %p78 = scmp.eq.s32.totalorder %s19, 1
    %p79 = por %p77, %p78
    %p80 = scmp.ne.s32.totalorder %s71, %s72
    %p81 = scmp.eq.s32.totalorder %s19, 0
    %p82 = por %p80, %p81
    %p83 = scmp.ne.s32.totalorder %s71, %s72
    %p84 = scmp.eq.s32.totalorder %s20, 1
    %p85 = por %p83, %p84
    %p87 = scmp.ne.s32.totalorder %s72, %s86
    %p88 = scmp.eq.s32.totalorder %s20, 0
    %p89 = por %p87, %p88
    %s91 = sadd.s32 %s90, 1
    %p94 = scmp.eq.s32.totalorder %s14, 1
    %p95 = scmp.ne.s32.totalorder %s90, %s92
    %p96 = scmp.eq.s32.totalorder %s14, 0
    %p97 = por %p95, %p96
    %p98 = scmp.ne.s32.totalorder %s90, %s92
    %p99 = scmp.eq.s32.totalorder %s19, 1
    %p100 = por %p98, %p99
    %p101 = scmp.ne.s32.totalorder %s92, %s93
    %p102 = scmp.eq.s32.totalorder %s19, 0
    %p103 = por %p101, %p102
    %p104 = scmp.ne.s32.totalorder %s92, %s93
    %p105 = scmp.eq.s32.totalorder %s20, 1
    %p106 = por %p104, %p105
    %p108 = scmp.ne.s32.totalorder %s93, %s107
    %p109 = scmp.eq.s32.totalorder %s20, 0
    %p110 = por %p108, %p109
    %s112 = sadd.s32 %s111, 1
    %p115 = scmp.eq.s32.totalorder %s14, 1
    %p116 = scmp.ne.s32.totalorder %s111, %s113
    %p117 = scmp.eq.s32.totalorder %s14, 0
    %p118 = por %p116, %p117
    %p119 = scmp.ne.s32.totalorder %s111, %s113
    %p120 = scmp.eq.s32.totalorder %s19, 1
    %p121 = por %p119, %p120
    %p122 = scmp.ne.s32.totalorder %s113, %s114
    %p123 = scmp.eq.s32.totalorder %s19, 0
    %p124 = por %p122, %p123
    %p125 = scmp.ne.s32.totalorder %s113, %s114
    %p126 = scmp.eq.s32.totalorder %s20, 1
    %p127 = por %p125, %p126
    %p129 = scmp.ne.s32.totalorder %s114, %s128
    %p130 = scmp.eq.s32.totalorder %s20, 0
    %p131 = por %p129, %p130
    %s133 = sadd.s32 %s132, 1
    %p136 = scmp.eq.s32.totalorder %s14, 1
    %p137 = scmp.ne.s32.totalorder %s132, %s134
    %p138 = scmp.eq.s32.totalorder %s14, 0
    %p139 = por %p137, %p138
    %p140 = scmp.ne.s32.totalorder %s132, %s134
    %p141 = scmp.eq.s32.totalorder %s19, 1
    %p142 = por %p140, %p141
    %p143 = scmp.ne.s32.totalorder %s134, %s135
    %p144 = scmp.eq.s32.totalorder %s19, 0
    %p145 = por %p143, %p144
    %p146 = scmp.ne.s32.totalorder %s134, %s135
    %p147 = scmp.eq.s32.totalorder %s20, 1
    %p148 = por %p146, %p147
    %p150 = scmp.ne.s32.totalorder %s135, %s149
    %p151 = scmp.eq.s32.totalorder %s20, 0
    %p152 = por %p150, %p151
    %s154 = sadd.s32 %s153, 1
    %p157 = scmp.eq.s32.totalorder %s14, 1
    %p158 = scmp.ne.s32.totalorder %s153, %s155
    %p159 = scmp.eq.s32.totalorder %s14, 0
    %p160 = por %p158, %p159
    %p161 = scmp.ne.s32.totalorder %s153, %s155
    %p162 = scmp.eq.s32.totalorder %s19, 1
    %p163 = por %p161, %p162
    %p164 = scmp.ne.s32.totalorder %s155, %s156
    %p165 = scmp.eq.s32.totalorder %s19, 0
    %p166 = por %p164, %p165
    %p167 = scmp.ne.s32.totalorder %s155, %s156
    %p168 = scmp.eq.s32.totalorder %s20, 1
    %p169 = por %p167, %p168
    %p171 = scmp.ne.s32.totalorder %s156, %s170
    %p172 = scmp.eq.s32.totalorder %s20, 0
    %p173 = por %p171, %p172
    %s175 = sadd.s32 %s174, 1
    %p178 = scmp.eq.s32.totalorder %s14, 1
    %p179 = scmp.ne.s32.totalorder %s174, %s176
    %p180 = scmp.eq.s32.totalorder %s14, 0
    %p181 = por %p179, %p180
    %p182 = scmp.ne.s32.totalorder %s174, %s176
    %p183 = scmp.eq.s32.totalorder %s19, 1
    %p184 = por %p182, %p183
    %p185 = scmp.ne.s32.totalorder %s176, %s177
    %p186 = scmp.eq.s32.totalorder %s19, 0
    %p187 = por %p185, %p186
    %p188 = scmp.ne.s32.totalorder %s176, %s177
    %p189 = scmp.eq.s32.totalorder %s20, 1
    %p190 = por %p188, %p189
    %p192 = scmp.ne.s32.totalorder %s177, %s191
    %p193 = scmp.eq.s32.totalorder %s20, 0
    %p194 = por %p192, %p193
    %s195 = ssub.s32 %s14, %s21
    %p196 = scmp.eq.s32.totalorder %s195, 0
    %s198 = sadd.s32 %s197, 1
    %s199 = scalar_select %p196, %s197, %s198
    %p202 = pneg %p196
    %p203 = scmp.eq.s32.totalorder %s14, 1
    %p204 = por %p202, %p203
    %p205 = scmp.ne.s32.totalorder %s197, %s200
    %p206 = scmp.eq.s32.totalorder %s14, 0
    %p207 = por %p205, %p206
    %p208 = scmp.ne.s32.totalorder %s197, %s200
    %p209 = scmp.eq.s32.totalorder %s19, 1
    %p210 = por %p208, %p209
    %p211 = scmp.ne.s32.totalorder %s200, %s201
    %p212 = scmp.eq.s32.totalorder %s19, 0
    %p213 = por %p211, %p212
    %p214 = scmp.ne.s32.totalorder %s200, %s201
    %p215 = scmp.eq.s32.totalorder %s20, 1
    %p216 = por %p214, %p215
    %p218 = scmp.ne.s32.totalorder %s201, %s217
    %p219 = scmp.eq.s32.totalorder %s20, 0
    %p220 = por %p218, %p219
    %p221 = scmp.le.s32.totalorder 1, %s14
    %p222 = scmp.lt.s32.totalorder %s14, 3
    %p223 = pnand %p221, %p222
    %p224 = pneg %p223
    // Predicated region
    $region9: #{gra_denseblock_forward.1} parent=5 // pred_check
      _
    $region10: #{gra_denseblock_forward.1} parent=5 // pred_check_branch
      %226 = sbr.rel (%p223) target = $region12
    $region11: #{gra_denseblock_forward.1} parent=5 // pred_region
      %s227 = ssub.s32 %s14, 1
      // Predicated region
      $region13: #{gra_denseblock_forward.1} parent=11 // pred_check
        %p228 = pneg %p61
      $region14: #{gra_denseblock_forward.1} parent=11 // pred_check_branch
        %230 = sbr.rel (%p228) target = $region16
      $region15: #{gra_denseblock_forward.1} parent=11 // pred_region
        _
      $region16: #{gra_denseblock_forward.1} parent=11 // pred_fallthru
        _
      // Predicated region
      $region17: #{gra_denseblock_forward.1} parent=11 // pred_check
        %p231 = pneg %p82
      $region18: #{gra_denseblock_forward.1} parent=11 // pred_check_branch
        %233 = sbr.rel (%p231) target = $region20
      $region19: #{gra_denseblock_forward.1} parent=11 // pred_region
        _
      $region20: #{gra_denseblock_forward.1} parent=11 // pred_fallthru
        _
      // Predicated region
      $region21: #{gra_denseblock_forward.1} parent=11 // pred_check
        %p234 = pneg %p103
      $region22: #{gra_denseblock_forward.1} parent=11 // pred_check_branch
        %236 = sbr.rel (%p234) target = $region24
      $region23: #{gra_denseblock_forward.1} parent=11 // pred_region
        _
      $region24: #{gra_denseblock_forward.1} parent=11 // pred_fallthru
        _
      // Predicated region
      $region25: #{gra_denseblock_forward.1} parent=11 // pred_check
        %p237 = pneg %p124
      $region26: #{gra_denseblock_forward.1} parent=11 // pred_check_branch
        %239 = sbr.rel (%p237) target = $region28
      $region27: #{gra_denseblock_forward.1} parent=11 // pred_region
        _
      $region28: #{gra_denseblock_forward.1} parent=11 // pred_fallthru
        _
      // Predicated region
      $region29: #{gra_denseblock_forward.1} parent=11 // pred_check
        %p240 = pneg %p145
      $region30: #{gra_denseblock_forward.1} parent=11 // pred_check_branch
        %242 = sbr.rel (%p240) target = $region32
      $region31: #{gra_denseblock_forward.1} parent=11 // pred_region
        _
      $region32: #{gra_denseblock_forward.1} parent=11 // pred_fallthru
        _
      // Predicated region
      $region33: #{gra_denseblock_forward.1} parent=11 // pred_check
        %p243 = pneg %p166
      $region34: #{gra_denseblock_forward.1} parent=11 // pred_check_branch
        %245 = sbr.rel (%p243) target = $region36
      $region35: #{gra_denseblock_forward.1} parent=11 // pred_region
        _
      $region36: #{gra_denseblock_forward.1} parent=11 // pred_fallthru
        _
      // Predicated region
      $region37: #{gra_denseblock_forward.1} parent=11 // pred_check
        %p246 = pneg %p187
      $region38: #{gra_denseblock_forward.1} parent=11 // pred_check_branch
        %248 = sbr.rel (%p246) target = $region40
      $region39: #{gra_denseblock_forward.1} parent=11 // pred_region
        _
      $region40: #{gra_denseblock_forward.1} parent=11 // pred_fallthru
        _
    $region12: #{gra_denseblock_forward.1} parent=5 // pred_fallthru
      _
    %p249 = scmp.lt.s32.totalorder %s14, 2
    // Predicated region
    $region41: #{gra_denseblock_forward.1} parent=5 // pred_check
      %p250 = pneg %p249
    $region42: #{gra_denseblock_forward.1} parent=5 // pred_check_branch
      %252 = sbr.rel (%p250) target = $region44
    $region43: #{gra_denseblock_forward.1} parent=5 // pred_region
      // Predicated region
      $region45: #{gra_denseblock_forward.1} parent=43 // pred_check
        %p253 = pneg %p34
      $region46: #{gra_denseblock_forward.1} parent=43 // pred_check_branch
        %255 = sbr.rel (%p253) target = $region48
      $region47: #{gra_denseblock_forward.1} parent=43 // pred_region
        %p256 = scmp.lt.s32.totalorder %s14, 1
        %s257 = scalar_select %p256, %s14, 1
        %s258 = smul.addr %s257, 32
        %s259 = smul.addr %s258, 8
        %s260 = scalar_lea.vmem %s0, %s259
      $region48: #{gra_denseblock_forward.1} parent=43 // pred_fallthru
        _
    $region44: #{gra_denseblock_forward.1} parent=5 // pred_fallthru
      _
    %p261 = scmp.le.s32.totalorder 1, %s14
    %p262 = scmp.lt.s32.totalorder %s14, 3
    %p263 = pnand %p261, %p262
    %p264 = pneg %p263
    // Predicated region
    $region49: #{gra_denseblock_forward.1} parent=5 // pred_check
      _
    $region50: #{gra_denseblock_forward.1} parent=5 // pred_check_branch
      %266 = sbr.rel (%p263) target = $region52
    $region51: #{gra_denseblock_forward.1} parent=5 // pred_region
      %s267 = ssub.s32 %s14, 1
      %p268 = scmp.lt.s32.totalorder %s19, 1
      %s269 = scalar_select %p268, %s19, 1
      %s270 = smul.addr %s269, 32
      %s271 = smul.addr %s270, 8
      %s272 = scalar_lea.vmem %s0, %s271
      %p273 = pneg %p40
      %p274 = pneg %p37
      %p275 = pneg %p61
      %p276 = pneg %p58
      %p277 = pneg %p82
      %p278 = pneg %p79
      %p279 = pneg %p103
      %p280 = pneg %p100
      %p281 = pneg %p124
      %p282 = pneg %p121
      %p283 = pneg %p145
      %p284 = pneg %p142
      %p285 = pneg %p166
      %p286 = pneg %p163
      %p287 = pneg %p187
      %p288 = pneg %p184
      %p289 = pneg %p213
      %p290 = pneg %p210
      %p291 = scmp.lt.s32.totalorder %s19, 1
      %s292 = scalar_select %p291, %s19, 1
      %s293 = smul.addr %s292, 32
      %s294 = smul.addr %s293, 8
      %s295 = scalar_lea.vmem %s8, %s294
      %p296 = scmp.lt.s32.totalorder %s19, 1
      %s297 = scalar_select %p296, %s19, 1
      %s298 = smul.addr %s297, 32
      %s299 = smul.addr %s298, 8
      %s300 = scalar_lea.vmem %s0, %s299
      %p301 = scmp.lt.s32.totalorder %s19, 1
      %s302 = scalar_select %p301, %s19, 1
      %s303 = smul.addr %s302, 32
      %s304 = smul.addr %s303, 8
      %s305 = scalar_lea.vmem %s8, %s304
      %vm307 = vcmask 64512
      %308 = vst.msk [vmem:[#allocation2] sm:$0xff] %vm307, 0.0
      %309 = vst.msk [vmem:[#allocation2 + $0x8] sm:$0xff] %vm307, 0.0
      %310 = vst.msk [vmem:[#allocation2 + $0x10] sm:$0xff] %vm307, 0.0
      %311 = vst.msk [vmem:[#allocation2 + $0x18] sm:$0xff] %vm307, 0.0
      %312 = vst.msk [vmem:[#allocation2 + $0x20] sm:$0xff] %vm307, 0.0
      %313 = vst.msk [vmem:[#allocation2 + $0x28] sm:$0xff] %vm307, 0.0
      %314 = vst.msk [vmem:[#allocation2 + $0x30] sm:$0xff] %vm307, 0.0
      %315 = vst.msk [vmem:[#allocation2 + $0x38] sm:$0xff] %vm307, 0.0
      %316 = vst.msk [vmem:[#allocation2 + $0x40] sm:$0xff] %vm307, 0.0
      %317 = vst.msk [vmem:[#allocation2 + $0x48] sm:$0xff] %vm307, 0.0
      %318 = vst.msk [vmem:[#allocation2 + $0x50] sm:$0xff] %vm307, 0.0
      %319 = vst.msk [vmem:[#allocation2 + $0x58] sm:$0xff] %vm307, 0.0
      %320 = vst.msk [vmem:[#allocation2 + $0x60] sm:$0xff] %vm307, 0.0
      %321 = vst.msk [vmem:[#allocation2 + $0x68] sm:$0xff] %vm307, 0.0
      %322 = vst.msk [vmem:[#allocation2 + $0x70] sm:$0xff] %vm307, 0.0
      %323 = vst.msk [vmem:[#allocation2 + $0x78] sm:$0xff] %vm307, 0.0
      %324 = vst.msk [vmem:[#allocation2 + $0x80] sm:$0xff] %vm307, 0.0
      %325 = vst.msk [vmem:[#allocation2 + $0x88] sm:$0xff] %vm307, 0.0
      %326 = vst.msk [vmem:[#allocation2 + $0x90] sm:$0xff] %vm307, 0.0
      %327 = vst.msk [vmem:[#allocation2 + $0x98] sm:$0xff] %vm307, 0.0
      %328 = vst.msk [vmem:[#allocation2 + $0xa0] sm:$0xff] %vm307, 0.0
      %329 = vst.msk [vmem:[#allocation2 + $0xa8] sm:$0xff] %vm307, 0.0
      %330 = vst.msk [vmem:[#allocation2 + $0xb0] sm:$0xff] %vm307, 0.0
      %331 = vst.msk [vmem:[#allocation2 + $0xb8] sm:$0xff] %vm307, 0.0
      %332 = vst.msk [vmem:[#allocation2 + $0xc0] sm:$0xff] %vm307, 0.0
      %333 = vst.msk [vmem:[#allocation2 + $0xc8] sm:$0xff] %vm307, 0.0
      %334 = vst.msk [vmem:[#allocation2 + $0xd0] sm:$0xff] %vm307, 0.0
      %335 = vst.msk [vmem:[#allocation2 + $0xd8] sm:$0xff] %vm307, 0.0
      %336 = vst.msk [vmem:[#allocation2 + $0xe0] sm:$0xff] %vm307, 0.0
      %337 = vst.msk [vmem:[#allocation2 + $0xe8] sm:$0xff] %vm307, 0.0
      %338 = vst.msk [vmem:[#allocation2 + $0xf0] sm:$0xff] %vm307, 0.0
      %339 = vst.msk [vmem:[#allocation2 + $0xf8] sm:$0xff] %vm307, 0.0
      %340 = vst.msk [vmem:[#allocation2 + $0x100] sm:$0xff] %vm307, 0.0
      %341 = vst.msk [vmem:[#allocation2 + $0x108] sm:$0xff] %vm307, 0.0
      %342 = vst.msk [vmem:[#allocation2 + $0x110] sm:$0xff] %vm307, 0.0
      %343 = vst.msk [vmem:[#allocation2 + $0x118] sm:$0xff] %vm307, 0.0
      %344 = vst.msk [vmem:[#allocation2 + $0x120] sm:$0xff] %vm307, 0.0
      %345 = vst.msk [vmem:[#allocation2 + $0x128] sm:$0xff] %vm307, 0.0
      %346 = vst.msk [vmem:[#allocation2 + $0x130] sm:$0xff] %vm307, 0.0
      %347 = vst.msk [vmem:[#allocation2 + $0x138] sm:$0xff] %vm307, 0.0
      %348 = vst.msk [vmem:[#allocation2 + $0x140] sm:$0xff] %vm307, 0.0
      %349 = vst.msk [vmem:[#allocation2 + $0x148] sm:$0xff] %vm307, 0.0
      %350 = vst.msk [vmem:[#allocation2 + $0x150] sm:$0xff] %vm307, 0.0
      %351 = vst.msk [vmem:[#allocation2 + $0x158] sm:$0xff] %vm307, 0.0
      %352 = vst.msk [vmem:[#allocation2 + $0x160] sm:$0xff] %vm307, 0.0
      %353 = vst.msk [vmem:[#allocation2 + $0x168] sm:$0xff] %vm307, 0.0
      %354 = vst.msk [vmem:[#allocation2 + $0x170] sm:$0xff] %vm307, 0.0
      %355 = vst.msk [vmem:[#allocation2 + $0x178] sm:$0xff] %vm307, 0.0
      %356 = vst.msk [vmem:[#allocation2 + $0x180] sm:$0xff] %vm307, 0.0
      %357 = vst.msk [vmem:[#allocation2 + $0x188] sm:$0xff] %vm307, 0.0
      %358 = vst.msk [vmem:[#allocation2 + $0x190] sm:$0xff] %vm307, 0.0
      %359 = vst.msk [vmem:[#allocation2 + $0x198] sm:$0xff] %vm307, 0.0
      %360 = vst.msk [vmem:[#allocation2 + $0x1a0] sm:$0xff] %vm307, 0.0
      %361 = vst.msk [vmem:[#allocation2 + $0x1a8] sm:$0xff] %vm307, 0.0
      %362 = vst.msk [vmem:[#allocation2 + $0x1b0] sm:$0xff] %vm307, 0.0
      %363 = vst.msk [vmem:[#allocation2 + $0x1b8] sm:$0xff] %vm307, 0.0
      %364 = vst.msk [vmem:[#allocation2 + $0x1c0] sm:$0xff] %vm307, 0.0
      %365 = vst.msk [vmem:[#allocation2 + $0x1c8] sm:$0xff] %vm307, 0.0
      %366 = vst.msk [vmem:[#allocation2 + $0x1d0] sm:$0xff] %vm307, 0.0
      %367 = vst.msk [vmem:[#allocation2 + $0x1d8] sm:$0xff] %vm307, 0.0
      %368 = vst.msk [vmem:[#allocation2 + $0x1e0] sm:$0xff] %vm307, 0.0
      %369 = vst.msk [vmem:[#allocation2 + $0x1e8] sm:$0xff] %vm307, 0.0
      %370 = vst.msk [vmem:[#allocation2 + $0x1f0] sm:$0xff] %vm307, 0.0
      %371 = vst.msk [vmem:[#allocation2 + $0x1f8] sm:$0xff] %vm307, 0.0
      %372 = vst.msk [vmem:[#allocation2 + $0x200] sm:$0xff] %vm307, 0.0
      %373 = vst.msk [vmem:[#allocation2 + $0x208] sm:$0xff] %vm307, 0.0
      %374 = vst.msk [vmem:[#allocation2 + $0x210] sm:$0xff] %vm307, 0.0
      %375 = vst.msk [vmem:[#allocation2 + $0x218] sm:$0xff] %vm307, 0.0
      %376 = vst.msk [vmem:[#allocation2 + $0x220] sm:$0xff] %vm307, 0.0
      %377 = vst.msk [vmem:[#allocation2 + $0x228] sm:$0xff] %vm307, 0.0
      %378 = vst.msk [vmem:[#allocation2 + $0x230] sm:$0xff] %vm307, 0.0
      %379 = vst.msk [vmem:[#allocation2 + $0x238] sm:$0xff] %vm307, 0.0
      %v380 = vld [vmem:[%s300] sm:$0xff]
      %v381 = vld [vmem:[%s300 + $0x8] sm:$0xff]
      %v382 = vld [vmem:[%s300 + $0x10] sm:$0xff]
      %v383 = vld [vmem:[%s300 + $0x18] sm:$0xff]
      %v384 = vld [vmem:[%s300 + $0x20] sm:$0xff]
      %v385 = vld [vmem:[%s300 + $0x28] sm:$0xff]
      %v386 = vld [vmem:[%s300 + $0x30] sm:$0xff]
      %v387 = vld [vmem:[%s300 + $0x38] sm:$0xff]
      %v388 = vld [vmem:[%s300 + $0x40] sm:$0xff]
      %v389 = vld [vmem:[%s300 + $0x48] sm:$0xff]
      %v390 = vld [vmem:[%s300 + $0x50] sm:$0xff]
      %v391 = vld [vmem:[%s300 + $0x58] sm:$0xff]
      %v392 = vld [vmem:[%s300 + $0x60] sm:$0xff]
      %v393 = vld [vmem:[%s300 + $0x68] sm:$0xff]
      %v394 = vld [vmem:[%s300 + $0x70] sm:$0xff]
      %v395 = vld [vmem:[%s300 + $0x78] sm:$0xff]
      %v396 = vld [vmem:[%s300 + $0x80] sm:$0xff]
      %v397 = vld [vmem:[%s300 + $0x88] sm:$0xff]
      %v398 = vld [vmem:[%s300 + $0x90] sm:$0xff]
      %v399 = vld [vmem:[%s300 + $0x98] sm:$0xff]
      %v400 = vld [vmem:[%s300 + $0xa0] sm:$0xff]
      %v401 = vld [vmem:[%s300 + $0xa8] sm:$0xff]
      %v402 = vld [vmem:[%s300 + $0xb0] sm:$0xff]
      %v403 = vld [vmem:[%s300 + $0xb8] sm:$0xff]
      %v404 = vld [vmem:[%s300 + $0xc0] sm:$0xff]
      %v405 = vld [vmem:[%s300 + $0xc8] sm:$0xff]
      %v406 = vld [vmem:[%s300 + $0xd0] sm:$0xff]
      %v407 = vld [vmem:[%s300 + $0xd8] sm:$0xff]
      %v408 = vld [vmem:[%s300 + $0xe0] sm:$0xff]
      %v409 = vld [vmem:[%s300 + $0xe8] sm:$0xff]
      %v410 = vld [vmem:[%s300 + $0xf0] sm:$0xff]
      %v411 = vld [vmem:[%s300 + $0xf8] sm:$0xff]
      %s412 = scalar_lea.vmem [#allocation2], 32
      %413 = vst.msk [vmem:[%s412 + $0x8] sm:$0xff] %vm307, %v380
      %414 = vst.msk [vmem:[%s412 + $0x10] sm:$0xff] %vm307, %v381
      %415 = vst.msk [vmem:[%s412 + $0x28] sm:$0xff] %vm307, %v382
      %416 = vst.msk [vmem:[%s412 + $0x30] sm:$0xff] %vm307, %v383
      %417 = vst.msk [vmem:[%s412 + $0x48] sm:$0xff] %vm307, %v384
      %418 = vst.msk [vmem:[%s412 + $0x50] sm:$0xff] %vm307, %v385
      %419 = vst.msk [vmem:[%s412 + $0x68] sm:$0xff] %vm307, %v386
      %420 = vst.msk [vmem:[%s412 + $0x70] sm:$0xff] %vm307, %v387
      %421 = vst.msk [vmem:[%s412 + $0x88] sm:$0xff] %vm307, %v388
      %422 = vst.msk [vmem:[%s412 + $0x90] sm:$0xff] %vm307, %v389
      %423 = vst.msk [vmem:[%s412 + $0xa8] sm:$0xff] %vm307, %v390
      %424 = vst.msk [vmem:[%s412 + $0xb0] sm:$0xff] %vm307, %v391
      %425 = vst.msk [vmem:[%s412 + $0xc8] sm:$0xff] %vm307, %v392
      %426 = vst.msk [vmem:[%s412 + $0xd0] sm:$0xff] %vm307, %v393
      %427 = vst.msk [vmem:[%s412 + $0xe8] sm:$0xff] %vm307, %v394
      %428 = vst.msk [vmem:[%s412 + $0xf0] sm:$0xff] %vm307, %v395
      %429 = vst.msk [vmem:[%s412 + $0x108] sm:$0xff] %vm307, %v396
      %430 = vst.msk [vmem:[%s412 + $0x110] sm:$0xff] %vm307, %v397
      %431 = vst.msk [vmem:[%s412 + $0x128] sm:$0xff] %vm307, %v398
      %432 = vst.msk [vmem:[%s412 + $0x130] sm:$0xff] %vm307, %v399
      %433 = vst.msk [vmem:[%s412 + $0x148] sm:$0xff] %vm307, %v400
      %434 = vst.msk [vmem:[%s412 + $0x150] sm:$0xff] %vm307, %v401
      %435 = vst.msk [vmem:[%s412 + $0x168] sm:$0xff] %vm307, %v402
      %436 = vst.msk [vmem:[%s412 + $0x170] sm:$0xff] %vm307, %v403
      %437 = vst.msk [vmem:[%s412 + $0x188] sm:$0xff] %vm307, %v404
      %438 = vst.msk [vmem:[%s412 + $0x190] sm:$0xff] %vm307, %v405
      %439 = vst.msk [vmem:[%s412 + $0x1a8] sm:$0xff] %vm307, %v406
      %440 = vst.msk [vmem:[%s412 + $0x1b0] sm:$0xff] %vm307, %v407
      %441 = vst.msk [vmem:[%s412 + $0x1c8] sm:$0xff] %vm307, %v408
      %442 = vst.msk [vmem:[%s412 + $0x1d0] sm:$0xff] %vm307, %v409
      %443 = vst.msk [vmem:[%s412 + $0x1e8] sm:$0xff] %vm307, %v410
      %444 = vst.msk [vmem:[%s412 + $0x1f0] sm:$0xff] %vm307, %v411
      %v445 = vld [vmem:[#allocation2] sm:$0xff]
      %v446 = vld [vmem:[#allocation2 + $0x8] sm:$0xff]
      %v447 = vld [vmem:[#allocation2 + $0x10] sm:$0xff]
      %v448 = vld [vmem:[#allocation2 + $0x18] sm:$0xff]
      %v449 = vld [vmem:[#allocation2 + $0x20] sm:$0xff]
      %v450 = vld [vmem:[#allocation2 + $0x28] sm:$0xff]
      %v451 = vld [vmem:[#allocation2 + $0x30] sm:$0xff]
      %v452 = vld [vmem:[#allocation2 + $0x38] sm:$0xff]
      %v453 = vld [vmem:[#allocation2 + $0x40] sm:$0xff]
      %v454 = vld [vmem:[#allocation2 + $0x48] sm:$0xff]
      %v455 = vld [vmem:[#allocation2 + $0x50] sm:$0xff]
      %v456 = vld [vmem:[#allocation2 + $0x58] sm:$0xff]
      %v457 = vld [vmem:[#allocation2 + $0x60] sm:$0xff]
      %v458 = vld [vmem:[#allocation2 + $0x68] sm:$0xff]
      %v459 = vld [vmem:[#allocation2 + $0x70] sm:$0xff]
      %v460 = vld [vmem:[#allocation2 + $0x78] sm:$0xff]
      %v461 = vld [vmem:[#allocation2 + $0x80] sm:$0xff]
      %v462 = vld [vmem:[#allocation2 + $0x88] sm:$0xff]
      %v463 = vld [vmem:[#allocation2 + $0x90] sm:$0xff]
      %v464 = vld [vmem:[#allocation2 + $0x98] sm:$0xff]
      %v465 = vld [vmem:[#allocation2 + $0xa0] sm:$0xff]
      %v466 = vld [vmem:[#allocation2 + $0xa8] sm:$0xff]
      %v467 = vld [vmem:[#allocation2 + $0xb0] sm:$0xff]
      %v468 = vld [vmem:[#allocation2 + $0xb8] sm:$0xff]
      %v469 = vld [vmem:[#allocation2 + $0xc0] sm:$0xff]
      %v470 = vld [vmem:[#allocation2 + $0xc8] sm:$0xff]
      %v471 = vld [vmem:[#allocation2 + $0xd0] sm:$0xff]
      %v472 = vld [vmem:[#allocation2 + $0xd8] sm:$0xff]
      %v473 = vld [vmem:[#allocation2 + $0xe0] sm:$0xff]
      %v474 = vld [vmem:[#allocation2 + $0xe8] sm:$0xff]
      %v475 = vld [vmem:[#allocation2 + $0xf0] sm:$0xff]
      %v476 = vld [vmem:[#allocation2 + $0xf8] sm:$0xff]
      %v477 = vld [vmem:[#allocation2 + $0x100] sm:$0xff]
      %v478 = vld [vmem:[#allocation2 + $0x108] sm:$0xff]
      %v479 = vld [vmem:[#allocation2 + $0x110] sm:$0xff]
      %v480 = vld [vmem:[#allocation2 + $0x118] sm:$0xff]
      %v481 = vld [vmem:[#allocation2 + $0x120] sm:$0xff]
      %v482 = vld [vmem:[#allocation2 + $0x128] sm:$0xff]
      %v483 = vld [vmem:[#allocation2 + $0x130] sm:$0xff]
      %v484 = vld [vmem:[#allocation2 + $0x138] sm:$0xff]
      %v485 = vld [vmem:[#allocation2 + $0x140] sm:$0xff]
      %v486 = vld [vmem:[#allocation2 + $0x148] sm:$0xff]
      %v487 = vld [vmem:[#allocation2 + $0x150] sm:$0xff]
      %v488 = vld [vmem:[#allocation2 + $0x158] sm:$0xff]
      %v489 = vld [vmem:[#allocation2 + $0x160] sm:$0xff]
      %v490 = vld [vmem:[#allocation2 + $0x168] sm:$0xff]
      %v491 = vld [vmem:[#allocation2 + $0x170] sm:$0xff]
      %v492 = vld [vmem:[#allocation2 + $0x178] sm:$0xff]
      %v493 = vld [vmem:[#allocation2 + $0x180] sm:$0xff]
      %v494 = vld [vmem:[#allocation2 + $0x188] sm:$0xff]
      %v495 = vld [vmem:[#allocation2 + $0x190] sm:$0xff]
      %v496 = vld [vmem:[#allocation2 + $0x198] sm:$0xff]
      %v497 = vld [vmem:[#allocation2 + $0x1a0] sm:$0xff]
      %v498 = vld [vmem:[#allocation2 + $0x1a8] sm:$0xff]
      %v499 = vld [vmem:[#allocation2 + $0x1b0] sm:$0xff]
      %v500 = vld [vmem:[#allocation2 + $0x1b8] sm:$0xff]
      %v501 = vld [vmem:[#allocation2 + $0x1c0] sm:$0xff]
      %v502 = vld [vmem:[#allocation2 + $0x1c8] sm:$0xff]
      %v503 = vld [vmem:[#allocation2 + $0x1d0] sm:$0xff]
      %v504 = vld [vmem:[#allocation2 + $0x1d8] sm:$0xff]
      %v505 = vld [vmem:[#allocation2 + $0x1e0] sm:$0xff]
      %v506 = vld [vmem:[#allocation2 + $0x1e8] sm:$0xff]
      %v507 = vld [vmem:[#allocation2 + $0x1f0] sm:$0xff]
      %v508 = vld [vmem:[#allocation2 + $0x1f8] sm:$0xff]
      %v509 = vld [vmem:[#allocation2 + $0x200] sm:$0xff]
      %v510 = vld [vmem:[#allocation2 + $0x208] sm:$0xff]
      %v511 = vld [vmem:[#allocation2 + $0x210] sm:$0xff]
      %v512 = vld [vmem:[#allocation2 + $0x218] sm:$0xff]
      %v513 = vld [vmem:[#allocation2 + $0x220] sm:$0xff]
      %v514 = vld [vmem:[#allocation2 + $0x228] sm:$0xff]
      %v515 = vld [vmem:[#allocation2 + $0x230] sm:$0xff]
      %v516 = vld [vmem:[#allocation2 + $0x238] sm:$0xff]
      %vm565 = vcmask 1040384
      %v566 = vrot.slane %v445, 7
      %v567 = vrot.slane %v446, 7
      %v568 = vsel %vm565, %v566, %v567
      %v569 = vrot.slane %v447, 7
      %v570 = vsel %vm565, %v567, %v569
      %v571 = vrot.slane %v449, 7
      %v572 = vrot.slane %v450, 7
      %v573 = vsel %vm565, %v571, %v572
      %v574 = vrot.slane %v451, 7
      %v575 = vsel %vm565, %v572, %v574
      %v576 = vrot.slane %v453, 7
      %v577 = vrot.slane %v454, 7
      %v578 = vsel %vm565, %v576, %v577
      %v579 = vrot.slane %v455, 7
      %v580 = vsel %vm565, %v577, %v579
      %v581 = vrot.slane %v457, 7
      %v582 = vrot.slane %v458, 7
      %v583 = vsel %vm565, %v581, %v582
      %v584 = vrot.slane %v459, 7
      %v585 = vsel %vm565, %v582, %v584
      %v586 = vrot.slane %v461, 7
      %v587 = vrot.slane %v462, 7
      %v588 = vsel %vm565, %v586, %v587
      %v589 = vrot.slane %v463, 7
      %v590 = vsel %vm565, %v587, %v589
      %v591 = vrot.slane %v465, 7
      %v592 = vrot.slane %v466, 7
      %v593 = vsel %vm565, %v591, %v592
      %v594 = vrot.slane %v467, 7
      %v595 = vsel %vm565, %v592, %v594
      %v596 = vrot.slane %v469, 7
      %v597 = vrot.slane %v470, 7
      %v598 = vsel %vm565, %v596, %v597
      %v599 = vrot.slane %v471, 7
      %v600 = vsel %vm565, %v597, %v599
      %v601 = vrot.slane %v473, 7
      %v602 = vrot.slane %v474, 7
      %v603 = vsel %vm565, %v601, %v602
      %v604 = vrot.slane %v475, 7
      %v605 = vsel %vm565, %v602, %v604
      %v606 = vrot.slane %v477, 7
      %v607 = vrot.slane %v478, 7
      %v608 = vsel %vm565, %v606, %v607
      %v609 = vrot.slane %v479, 7
      %v610 = vsel %vm565, %v607, %v609
      %v611 = vrot.slane %v481, 7
      %v612 = vrot.slane %v482, 7
      %v613 = vsel %vm565, %v611, %v612
      %v614 = vrot.slane %v483, 7
      %v615 = vsel %vm565, %v612, %v614
      %v616 = vrot.slane %v485, 7
      %v617 = vrot.slane %v486, 7
      %v618 = vsel %vm565, %v616, %v617
      %v619 = vrot.slane %v487, 7
      %v620 = vsel %vm565, %v617, %v619
      %v621 = vrot.slane %v489, 7
      %v622 = vrot.slane %v490, 7
      %v623 = vsel %vm565, %v621, %v622
      %v624 = vrot.slane %v491, 7
      %v625 = vsel %vm565, %v622, %v624
      %v626 = vrot.slane %v493, 7
      %v627 = vrot.slane %v494, 7
      %v628 = vsel %vm565, %v626, %v627
      %v629 = vrot.slane %v495, 7
      %v630 = vsel %vm565, %v627, %v629
      %v631 = vrot.slane %v497, 7
      %v632 = vrot.slane %v498, 7
      %v633 = vsel %vm565, %v631, %v632
      %v634 = vrot.slane %v499, 7
      %v635 = vsel %vm565, %v632, %v634
      %v636 = vrot.slane %v501, 7
      %v637 = vrot.slane %v502, 7
      %v638 = vsel %vm565, %v636, %v637
      %v639 = vrot.slane %v503, 7
      %v640 = vsel %vm565, %v637, %v639
      %v641 = vrot.slane %v505, 7
      %v642 = vrot.slane %v506, 7
      %v643 = vsel %vm565, %v641, %v642
      %v644 = vrot.slane %v507, 7
      %v645 = vsel %vm565, %v642, %v644
      %vm694 = vcmask 1046528
      %v695 = vrot.slane %v446, 1
      %v696 = vrot.slane %v447, 1
      %v697 = vsel %vm694, %v695, %v696
      %v698 = vrot.slane %v448, 1
      %v699 = vsel %vm694, %v696, %v698
      %v700 = vrot.slane %v450, 1
      %v701 = vrot.slane %v451, 1
      %v702 = vsel %vm694, %v700, %v701
      %v703 = vrot.slane %v452, 1
      %v704 = vsel %vm694, %v701, %v703
      %v705 = vrot.slane %v454, 1
      %v706 = vrot.slane %v455, 1
      %v707 = vsel %vm694, %v705, %v706
      %v708 = vrot.slane %v456, 1
      %v709 = vsel %vm694, %v706, %v708
      %v710 = vrot.slane %v458, 1
      %v711 = vrot.slane %v459, 1
      %v712 = vsel %vm694, %v710, %v711
      %v713 = vrot.slane %v460, 1
      %v714 = vsel %vm694, %v711, %v713
      %v715 = vrot.slane %v462, 1
      %v716 = vrot.slane %v463, 1
      %v717 = vsel %vm694, %v715, %v716
      %v718 = vrot.slane %v464, 1
      %v719 = vsel %vm694, %v716, %v718
      %v720 = vrot.slane %v466, 1
      %v721 = vrot.slane %v467, 1
      %v722 = vsel %vm694, %v720, %v721
      %v723 = vrot.slane %v468, 1
      %v724 = vsel %vm694, %v721, %v723
      %v725 = vrot.slane %v470, 1
      %v726 = vrot.slane %v471, 1
      %v727 = vsel %vm694, %v725, %v726
      %v728 = vrot.slane %v472, 1
      %v729 = vsel %vm694, %v726, %v728
      %v730 = vrot.slane %v474, 1
      %v731 = vrot.slane %v475, 1
      %v732 = vsel %vm694, %v730, %v731
      %v733 = vrot.slane %v476, 1
      %v734 = vsel %vm694, %v731, %v733
      %v735 = vrot.slane %v478, 1
      %v736 = vrot.slane %v479, 1
      %v737 = vsel %vm694, %v735, %v736
      %v738 = vrot.slane %v480, 1
      %v739 = vsel %vm694, %v736, %v738
      %v740 = vrot.slane %v482, 1
      %v741 = vrot.slane %v483, 1
      %v742 = vsel %vm694, %v740, %v741
      %v743 = vrot.slane %v484, 1
      %v744 = vsel %vm694, %v741, %v743
      %v745 = vrot.slane %v486, 1
      %v746 = vrot.slane %v487, 1
      %v747 = vsel %vm694, %v745, %v746
      %v748 = vrot.slane %v488, 1
      %v749 = vsel %vm694, %v746, %v748
      %v750 = vrot.slane %v490, 1
      %v751 = vrot.slane %v491, 1
      %v752 = vsel %vm694, %v750, %v751
      %v753 = vrot.slane %v492, 1
      %v754 = vsel %vm694, %v751, %v753
      %v755 = vrot.slane %v494, 1
      %v756 = vrot.slane %v495, 1
      %v757 = vsel %vm694, %v755, %v756
      %v758 = vrot.slane %v496, 1
      %v759 = vsel %vm694, %v756, %v758
      %v760 = vrot.slane %v498, 1
      %v761 = vrot.slane %v499, 1
      %v762 = vsel %vm694, %v760, %v761
      %v763 = vrot.slane %v500, 1
      %v764 = vsel %vm694, %v761, %v763
      %v765 = vrot.slane %v502, 1
      %v766 = vrot.slane %v503, 1
      %v767 = vsel %vm694, %v765, %v766
      %v768 = vrot.slane %v504, 1
      %v769 = vsel %vm694, %v766, %v768
      %v770 = vrot.slane %v506, 1
      %v771 = vrot.slane %v507, 1
      %v772 = vsel %vm694, %v770, %v771
      %v773 = vrot.slane %v508, 1
      %v774 = vsel %vm694, %v771, %v773
      %v778 = vrot.slane %v509, 7
      %v779 = vrot.slane %v510, 7
      %v780 = vsel %vm565, %v778, %v779
      %v781 = vrot.slane %v511, 7
      %v782 = vsel %vm565, %v779, %v781
      %v784 = vrot.slane %v510, 1
      %v785 = vrot.slane %v511, 1
      %v786 = vsel %vm694, %v784, %v785
      %v787 = vrot.slane %v512, 1
      %v788 = vsel %vm694, %v785, %v787
      %v792 = vrot.slane %v513, 7
      %v793 = vrot.slane %v514, 7
      %v794 = vsel %vm565, %v792, %v793
      %v795 = vrot.slane %v515, 7
      %v796 = vsel %vm565, %v793, %v795
      %v798 = vrot.slane %v514, 1
      %v799 = vrot.slane %v515, 1
      %v800 = vsel %vm694, %v798, %v799
      %v801 = vrot.slane %v516, 1
      %v802 = vsel %vm694, %v799, %v801
      %803 = vrot.lane.b32.xlu0 %v446, 8
      %v804 = vpop.permute.xlu0 %803
      %805 = vrot.lane.b32.xlu0 %v447, 8
      %v806 = vpop.permute.xlu0 %805
      %807 = vrot.lane.b32.xlu0 %v450, 8
      %v808 = vpop.permute.xlu0 %807
      %809 = vrot.lane.b32.xlu0 %v451, 8
      %v810 = vpop.permute.xlu0 %809
      %811 = vrot.lane.b32.xlu0 %v454, 8
      %v812 = vpop.permute.xlu0 %811
      %813 = vrot.lane.b32.xlu0 %v455, 8
      %v814 = vpop.permute.xlu0 %813
      %815 = vrot.lane.b32.xlu0 %v458, 8
      %v816 = vpop.permute.xlu0 %815
      %817 = vrot.lane.b32.xlu0 %v459, 8
      %v818 = vpop.permute.xlu0 %817
      %819 = vrot.lane.b32.xlu0 %v462, 8
      %v820 = vpop.permute.xlu0 %819
      %821 = vrot.lane.b32.xlu0 %v463, 8
      %v822 = vpop.permute.xlu0 %821
      %823 = vrot.lane.b32.xlu0 %v466, 8
      %v824 = vpop.permute.xlu0 %823
      %825 = vrot.lane.b32.xlu0 %v467, 8
      %v826 = vpop.permute.xlu0 %825
      %827 = vrot.lane.b32.xlu0 %v470, 8
      %v828 = vpop.permute.xlu0 %827
      %829 = vrot.lane.b32.xlu0 %v471, 8
      %v830 = vpop.permute.xlu0 %829
      %831 = vrot.lane.b32.xlu0 %v474, 8
      %v832 = vpop.permute.xlu0 %831
      %833 = vrot.lane.b32.xlu0 %v475, 8
      %v834 = vpop.permute.xlu0 %833
      %835 = vrot.lane.b32.xlu0 %v478, 8
      %v836 = vpop.permute.xlu0 %835
      %837 = vrot.lane.b32.xlu0 %v479, 8
      %v838 = vpop.permute.xlu0 %837
      %839 = vrot.lane.b32.xlu0 %v482, 8
      %v840 = vpop.permute.xlu0 %839
      %841 = vrot.lane.b32.xlu0 %v483, 8
      %v842 = vpop.permute.xlu0 %841
      %843 = vrot.lane.b32.xlu0 %v486, 8
      %v844 = vpop.permute.xlu0 %843
      %845 = vrot.lane.b32.xlu0 %v487, 8
      %v846 = vpop.permute.xlu0 %845
      %847 = vrot.lane.b32.xlu0 %v490, 8
      %v848 = vpop.permute.xlu0 %847
      %849 = vrot.lane.b32.xlu0 %v491, 8
      %v850 = vpop.permute.xlu0 %849
      %851 = vrot.lane.b32.xlu0 %v494, 8
      %v852 = vpop.permute.xlu0 %851
      %853 = vrot.lane.b32.xlu0 %v495, 8
      %v854 = vpop.permute.xlu0 %853
      %855 = vrot.lane.b32.xlu0 %v498, 8
      %v856 = vpop.permute.xlu0 %855
      %857 = vrot.lane.b32.xlu0 %v499, 8
      %v858 = vpop.permute.xlu0 %857
      %859 = vrot.lane.b32.xlu0 %v502, 8
      %v860 = vpop.permute.xlu0 %859
      %861 = vrot.lane.b32.xlu0 %v503, 8
      %v862 = vpop.permute.xlu0 %861
      %863 = vrot.lane.b32.xlu0 %v506, 8
      %v864 = vpop.permute.xlu0 %863
      %865 = vrot.lane.b32.xlu0 %v507, 8
      %v866 = vpop.permute.xlu0 %865
      %899 = vrot.lane.b32.xlu0 %v697, 16
      %v900 = vpop.permute.xlu0 %899
      %901 = vrot.lane.b32.xlu0 %v699, 16
      %v902 = vpop.permute.xlu0 %901
      %903 = vrot.lane.b32.xlu0 %v702, 16
      %v904 = vpop.permute.xlu0 %903
      %905 = vrot.lane.b32.xlu0 %v704, 16
      %v906 = vpop.permute.xlu0 %905
      %907 = vrot.lane.b32.xlu0 %v707, 16
      %v908 = vpop.permute.xlu0 %907
      %909 = vrot.lane.b32.xlu0 %v709, 16
      %v910 = vpop.permute.xlu0 %909
      %911 = vrot.lane.b32.xlu0 %v712, 16
      %v912 = vpop.permute.xlu0 %911
      %913 = vrot.lane.b32.xlu0 %v714, 16
      %v914 = vpop.permute.xlu0 %913
      %915 = vrot.lane.b32.xlu0 %v717, 16
      %v916 = vpop.permute.xlu0 %915
      %917 = vrot.lane.b32.xlu0 %v719, 16
      %v918 = vpop.permute.xlu0 %917
      %919 = vrot.lane.b32.xlu0 %v722, 16
      %v920 = vpop.permute.xlu0 %919
      %921 = vrot.lane.b32.xlu0 %v724, 16
      %v922 = vpop.permute.xlu0 %921
      %923 = vrot.lane.b32.xlu0 %v727, 16
      %v924 = vpop.permute.xlu0 %923
      %925 = vrot.lane.b32.xlu0 %v729, 16
      %v926 = vpop.permute.xlu0 %925
      %927 = vrot.lane.b32.xlu0 %v732, 16
      %v928 = vpop.permute.xlu0 %927
      %929 = vrot.lane.b32.xlu0 %v734, 16
      %v930 = vpop.permute.xlu0 %929
      %931 = vrot.lane.b32.xlu0 %v737, 16
      %v932 = vpop.permute.xlu0 %931
      %933 = vrot.lane.b32.xlu0 %v739, 16
      %v934 = vpop.permute.xlu0 %933
      %935 = vrot.lane.b32.xlu0 %v742, 16
      %v936 = vpop.permute.xlu0 %935
      %937 = vrot.lane.b32.xlu0 %v744, 16
      %v938 = vpop.permute.xlu0 %937
      %939 = vrot.lane.b32.xlu0 %v747, 16
      %v940 = vpop.permute.xlu0 %939
      %941 = vrot.lane.b32.xlu0 %v749, 16
      %v942 = vpop.permute.xlu0 %941
      %943 = vrot.lane.b32.xlu0 %v752, 16
      %v944 = vpop.permute.xlu0 %943
      %945 = vrot.lane.b32.xlu0 %v754, 16
      %v946 = vpop.permute.xlu0 %945
      %947 = vrot.lane.b32.xlu0 %v757, 16
      %v948 = vpop.permute.xlu0 %947
      %949 = vrot.lane.b32.xlu0 %v759, 16
      %v950 = vpop.permute.xlu0 %949
      %951 = vrot.lane.b32.xlu0 %v762, 16
      %v952 = vpop.permute.xlu0 %951
      %953 = vrot.lane.b32.xlu0 %v764, 16
      %v954 = vpop.permute.xlu0 %953
      %955 = vrot.lane.b32.xlu0 %v767, 16
      %v956 = vpop.permute.xlu0 %955
      %957 = vrot.lane.b32.xlu0 %v769, 16
      %v958 = vpop.permute.xlu0 %957
      %959 = vrot.lane.b32.xlu0 %v772, 16
      %v960 = vpop.permute.xlu0 %959
      %961 = vrot.lane.b32.xlu0 %v774, 16
      %v962 = vpop.permute.xlu0 %961
      %995 = vrot.lane.b32.xlu0 %v573, 24
      %v996 = vpop.permute.xlu0 %995
      %997 = vrot.lane.b32.xlu0 %v575, 24
      %v998 = vpop.permute.xlu0 %997
      %999 = vrot.lane.b32.xlu0 %v578, 24
      %v1000 = vpop.permute.xlu0 %999
      %1001 = vrot.lane.b32.xlu0 %v580, 24
      %v1002 = vpop.permute.xlu0 %1001
      %1003 = vrot.lane.b32.xlu0 %v583, 24
      %v1004 = vpop.permute.xlu0 %1003
      %1005 = vrot.lane.b32.xlu0 %v585, 24
      %v1006 = vpop.permute.xlu0 %1005
      %1007 = vrot.lane.b32.xlu0 %v588, 24
      %v1008 = vpop.permute.xlu0 %1007
      %1009 = vrot.lane.b32.xlu0 %v590, 24
      %v1010 = vpop.permute.xlu0 %1009
      %1011 = vrot.lane.b32.xlu0 %v593, 24
      %v1012 = vpop.permute.xlu0 %1011
      %1013 = vrot.lane.b32.xlu0 %v595, 24
      %v1014 = vpop.permute.xlu0 %1013
      %1015 = vrot.lane.b32.xlu0 %v598, 24
      %v1016 = vpop.permute.xlu0 %1015
      %1017 = vrot.lane.b32.xlu0 %v600, 24
      %v1018 = vpop.permute.xlu0 %1017
      %1019 = vrot.lane.b32.xlu0 %v603, 24
      %v1020 = vpop.permute.xlu0 %1019
      %1021 = vrot.lane.b32.xlu0 %v605, 24
      %v1022 = vpop.permute.xlu0 %1021
      %1023 = vrot.lane.b32.xlu0 %v608, 24
      %v1024 = vpop.permute.xlu0 %1023
      %1025 = vrot.lane.b32.xlu0 %v610, 24
      %v1026 = vpop.permute.xlu0 %1025
      %1027 = vrot.lane.b32.xlu0 %v613, 24
      %v1028 = vpop.permute.xlu0 %1027
      %1029 = vrot.lane.b32.xlu0 %v615, 24
      %v1030 = vpop.permute.xlu0 %1029
      %1031 = vrot.lane.b32.xlu0 %v618, 24
      %v1032 = vpop.permute.xlu0 %1031
      %1033 = vrot.lane.b32.xlu0 %v620, 24
      %v1034 = vpop.permute.xlu0 %1033
      %1035 = vrot.lane.b32.xlu0 %v623, 24
      %v1036 = vpop.permute.xlu0 %1035
      %1037 = vrot.lane.b32.xlu0 %v625, 24
      %v1038 = vpop.permute.xlu0 %1037
      %1039 = vrot.lane.b32.xlu0 %v628, 24
      %v1040 = vpop.permute.xlu0 %1039
      %1041 = vrot.lane.b32.xlu0 %v630, 24
      %v1042 = vpop.permute.xlu0 %1041
      %1043 = vrot.lane.b32.xlu0 %v633, 24
      %v1044 = vpop.permute.xlu0 %1043
      %1045 = vrot.lane.b32.xlu0 %v635, 24
      %v1046 = vpop.permute.xlu0 %1045
      %1047 = vrot.lane.b32.xlu0 %v638, 24
      %v1048 = vpop.permute.xlu0 %1047
      %1049 = vrot.lane.b32.xlu0 %v640, 24
      %v1050 = vpop.permute.xlu0 %1049
      %1051 = vrot.lane.b32.xlu0 %v643, 24
      %v1052 = vpop.permute.xlu0 %1051
      %1053 = vrot.lane.b32.xlu0 %v645, 24
      %v1054 = vpop.permute.xlu0 %1053
      %1055 = vrot.lane.b32.xlu0 %v780, 24
      %v1056 = vpop.permute.xlu0 %1055
      %1057 = vrot.lane.b32.xlu0 %v782, 24
      %v1058 = vpop.permute.xlu0 %1057
      %1091 = vrot.lane.b32.xlu0 %v450, 32
      %v1092 = vpop.permute.xlu0 %1091
      %1093 = vrot.lane.b32.xlu0 %v451, 32
      %v1094 = vpop.permute.xlu0 %1093
      %1095 = vrot.lane.b32.xlu0 %v454, 32
      %v1096 = vpop.permute.xlu0 %1095
      %1097 = vrot.lane.b32.xlu0 %v455, 32
      %v1098 = vpop.permute.xlu0 %1097
      %1099 = vrot.lane.b32.xlu0 %v458, 32
      %v1100 = vpop.permute.xlu0 %1099
      %1101 = vrot.lane.b32.xlu0 %v459, 32
      %v1102 = vpop.permute.xlu0 %1101
      %1103 = vrot.lane.b32.xlu0 %v462, 32
      %v1104 = vpop.permute.xlu0 %1103
      %1105 = vrot.lane.b32.xlu0 %v463, 32
      %v1106 = vpop.permute.xlu0 %1105
      %1107 = vrot.lane.b32.xlu0 %v466, 32
      %v1108 = vpop.permute.xlu0 %1107
      %1109 = vrot.lane.b32.xlu0 %v467, 32
      %v1110 = vpop.permute.xlu0 %1109
      %1111 = vrot.lane.b32.xlu0 %v470, 32
      %v1112 = vpop.permute.xlu0 %1111
      %1113 = vrot.lane.b32.xlu0 %v471, 32
      %v1114 = vpop.permute.xlu0 %1113
      %1115 = vrot.lane.b32.xlu0 %v474, 32
      %v1116 = vpop.permute.xlu0 %1115
      %1117 = vrot.lane.b32.xlu0 %v475, 32
      %v1118 = vpop.permute.xlu0 %1117
      %1119 = vrot.lane.b32.xlu0 %v478, 32
      %v1120 = vpop.permute.xlu0 %1119
      %1121 = vrot.lane.b32.xlu0 %v479, 32
      %v1122 = vpop.permute.xlu0 %1121
      %1123 = vrot.lane.b32.xlu0 %v482, 32
      %v1124 = vpop.permute.xlu0 %1123
      %1125 = vrot.lane.b32.xlu0 %v483, 32
      %v1126 = vpop.permute.xlu0 %1125
      %1127 = vrot.lane.b32.xlu0 %v486, 32
      %v1128 = vpop.permute.xlu0 %1127
      %1129 = vrot.lane.b32.xlu0 %v487, 32
      %v1130 = vpop.permute.xlu0 %1129
      %1131 = vrot.lane.b32.xlu0 %v490, 32
      %v1132 = vpop.permute.xlu0 %1131
      %1133 = vrot.lane.b32.xlu0 %v491, 32
      %v1134 = vpop.permute.xlu0 %1133
      %1135 = vrot.lane.b32.xlu0 %v494, 32
      %v1136 = vpop.permute.xlu0 %1135
      %1137 = vrot.lane.b32.xlu0 %v495, 32
      %v1138 = vpop.permute.xlu0 %1137
      %1139 = vrot.lane.b32.xlu0 %v498, 32
      %v1140 = vpop.permute.xlu0 %1139
      %1141 = vrot.lane.b32.xlu0 %v499, 32
      %v1142 = vpop.permute.xlu0 %1141
      %1143 = vrot.lane.b32.xlu0 %v502, 32
      %v1144 = vpop.permute.xlu0 %1143
      %1145 = vrot.lane.b32.xlu0 %v503, 32
      %v1146 = vpop.permute.xlu0 %1145
      %1147 = vrot.lane.b32.xlu0 %v506, 32
      %v1148 = vpop.permute.xlu0 %1147
      %1149 = vrot.lane.b32.xlu0 %v507, 32
      %v1150 = vpop.permute.xlu0 %1149
      %1151 = vrot.lane.b32.xlu0 %v510, 32
      %v1152 = vpop.permute.xlu0 %1151
      %1153 = vrot.lane.b32.xlu0 %v511, 32
      %v1154 = vpop.permute.xlu0 %1153
      %1187 = vrot.lane.b32.xlu0 %v702, 40
      %v1188 = vpop.permute.xlu0 %1187
      %1189 = vrot.lane.b32.xlu0 %v704, 40
      %v1190 = vpop.permute.xlu0 %1189
      %1191 = vrot.lane.b32.xlu0 %v707, 40
      %v1192 = vpop.permute.xlu0 %1191
      %1193 = vrot.lane.b32.xlu0 %v709, 40
      %v1194 = vpop.permute.xlu0 %1193
      %1195 = vrot.lane.b32.xlu0 %v712, 40
      %v1196 = vpop.permute.xlu0 %1195
      %1197 = vrot.lane.b32.xlu0 %v714, 40
      %v1198 = vpop.permute.xlu0 %1197
      %1199 = vrot.lane.b32.xlu0 %v717, 40
      %v1200 = vpop.permute.xlu0 %1199
      %1201 = vrot.lane.b32.xlu0 %v719, 40
      %v1202 = vpop.permute.xlu0 %1201
      %1203 = vrot.lane.b32.xlu0 %v722, 40
      %v1204 = vpop.permute.xlu0 %1203
      %1205 = vrot.lane.b32.xlu0 %v724, 40
      %v1206 = vpop.permute.xlu0 %1205
      %1207 = vrot.lane.b32.xlu0 %v727, 40
      %v1208 = vpop.permute.xlu0 %1207
      %1209 = vrot.lane.b32.xlu0 %v729, 40
      %v1210 = vpop.permute.xlu0 %1209
      %1211 = vrot.lane.b32.xlu0 %v732, 40
      %v1212 = vpop.permute.xlu0 %1211
      %1213 = vrot.lane.b32.xlu0 %v734, 40
      %v1214 = vpop.permute.xlu0 %1213
      %1215 = vrot.lane.b32.xlu0 %v737, 40
      %v1216 = vpop.permute.xlu0 %1215
      %1217 = vrot.lane.b32.xlu0 %v739, 40
      %v1218 = vpop.permute.xlu0 %1217
      %1219 = vrot.lane.b32.xlu0 %v742, 40
      %v1220 = vpop.permute.xlu0 %1219
      %1221 = vrot.lane.b32.xlu0 %v744, 40
      %v1222 = vpop.permute.xlu0 %1221
      %1223 = vrot.lane.b32.xlu0 %v747, 40
      %v1224 = vpop.permute.xlu0 %1223
      %1225 = vrot.lane.b32.xlu0 %v749, 40
      %v1226 = vpop.permute.xlu0 %1225
      %1227 = vrot.lane.b32.xlu0 %v752, 40
      %v1228 = vpop.permute.xlu0 %1227
      %1229 = vrot.lane.b32.xlu0 %v754, 40
      %v1230 = vpop.permute.xlu0 %1229
      %1231 = vrot.lane.b32.xlu0 %v757, 40
      %v1232 = vpop.permute.xlu0 %1231
      %1233 = vrot.lane.b32.xlu0 %v759, 40
      %v1234 = vpop.permute.xlu0 %1233
      %1235 = vrot.lane.b32.xlu0 %v762, 40
      %v1236 = vpop.permute.xlu0 %1235
      %1237 = vrot.lane.b32.xlu0 %v764, 40
      %v1238 = vpop.permute.xlu0 %1237
      %1239 = vrot.lane.b32.xlu0 %v767, 40
      %v1240 = vpop.permute.xlu0 %1239
      %1241 = vrot.lane.b32.xlu0 %v769, 40
      %v1242 = vpop.permute.xlu0 %1241
      %1243 = vrot.lane.b32.xlu0 %v772, 40
      %v1244 = vpop.permute.xlu0 %1243
      %1245 = vrot.lane.b32.xlu0 %v774, 40
      %v1246 = vpop.permute.xlu0 %1245
      %1247 = vrot.lane.b32.xlu0 %v786, 40
      %v1248 = vpop.permute.xlu0 %1247
      %1249 = vrot.lane.b32.xlu0 %v788, 40
      %v1250 = vpop.permute.xlu0 %1249
      %1283 = vrot.lane.b32.xlu0 %v578, 48
      %v1284 = vpop.permute.xlu0 %1283
      %1285 = vrot.lane.b32.xlu0 %v580, 48
      %v1286 = vpop.permute.xlu0 %1285
      %1287 = vrot.lane.b32.xlu0 %v583, 48
      %v1288 = vpop.permute.xlu0 %1287
      %1289 = vrot.lane.b32.xlu0 %v585, 48
      %v1290 = vpop.permute.xlu0 %1289
      %1291 = vrot.lane.b32.xlu0 %v588, 48
      %v1292 = vpop.permute.xlu0 %1291
      %1293 = vrot.lane.b32.xlu0 %v590, 48
      %v1294 = vpop.permute.xlu0 %1293
      %1295 = vrot.lane.b32.xlu0 %v593, 48
      %v1296 = vpop.permute.xlu0 %1295
      %1297 = vrot.lane.b32.xlu0 %v595, 48
      %v1298 = vpop.permute.xlu0 %1297
      %1299 = vrot.lane.b32.xlu0 %v598, 48
      %v1300 = vpop.permute.xlu0 %1299
      %1301 = vrot.lane.b32.xlu0 %v600, 48
      %v1302 = vpop.permute.xlu0 %1301
      %1303 = vrot.lane.b32.xlu0 %v603, 48
      %v1304 = vpop.permute.xlu0 %1303
      %1305 = vrot.lane.b32.xlu0 %v605, 48
      %v1306 = vpop.permute.xlu0 %1305
      %1307 = vrot.lane.b32.xlu0 %v608, 48
      %v1308 = vpop.permute.xlu0 %1307
      %1309 = vrot.lane.b32.xlu0 %v610, 48
      %v1310 = vpop.permute.xlu0 %1309
      %1311 = vrot.lane.b32.xlu0 %v613, 48
      %v1312 = vpop.permute.xlu0 %1311
      %1313 = vrot.lane.b32.xlu0 %v615, 48
      %v1314 = vpop.permute.xlu0 %1313
      %1315 = vrot.lane.b32.xlu0 %v618, 48
      %v1316 = vpop.permute.xlu0 %1315
      %1317 = vrot.lane.b32.xlu0 %v620, 48
      %v1318 = vpop.permute.xlu0 %1317
      %1319 = vrot.lane.b32.xlu0 %v623, 48
      %v1320 = vpop.permute.xlu0 %1319
      %1321 = vrot.lane.b32.xlu0 %v625, 48
      %v1322 = vpop.permute.xlu0 %1321
      %1323 = vrot.lane.b32.xlu0 %v628, 48
      %v1324 = vpop.permute.xlu0 %1323
      %1325 = vrot.lane.b32.xlu0 %v630, 48
      %v1326 = vpop.permute.xlu0 %1325
      %1327 = vrot.lane.b32.xlu0 %v633, 48
      %v1328 = vpop.permute.xlu0 %1327
      %1329 = vrot.lane.b32.xlu0 %v635, 48
      %v1330 = vpop.permute.xlu0 %1329
      %1331 = vrot.lane.b32.xlu0 %v638, 48
      %v1332 = vpop.permute.xlu0 %1331
      %1333 = vrot.lane.b32.xlu0 %v640, 48
      %v1334 = vpop.permute.xlu0 %1333
      %1335 = vrot.lane.b32.xlu0 %v643, 48
      %v1336 = vpop.permute.xlu0 %1335
      %1337 = vrot.lane.b32.xlu0 %v645, 48
      %v1338 = vpop.permute.xlu0 %1337
      %1339 = vrot.lane.b32.xlu0 %v780, 48
      %v1340 = vpop.permute.xlu0 %1339
      %1341 = vrot.lane.b32.xlu0 %v782, 48
      %v1342 = vpop.permute.xlu0 %1341
      %1343 = vrot.lane.b32.xlu0 %v794, 48
      %v1344 = vpop.permute.xlu0 %1343
      %1345 = vrot.lane.b32.xlu0 %v796, 48
      %v1346 = vpop.permute.xlu0 %1345
      %1379 = vrot.lane.b32.xlu0 %v454, 56
      %v1380 = vpop.permute.xlu0 %1379
      %1381 = vrot.lane.b32.xlu0 %v455, 56
      %v1382 = vpop.permute.xlu0 %1381
      %1383 = vrot.lane.b32.xlu0 %v458, 56
      %v1384 = vpop.permute.xlu0 %1383
      %1385 = vrot.lane.b32.xlu0 %v459, 56
      %v1386 = vpop.permute.xlu0 %1385
      %1387 = vrot.lane.b32.xlu0 %v462, 56
      %v1388 = vpop.permute.xlu0 %1387
      %1389 = vrot.lane.b32.xlu0 %v463, 56
      %v1390 = vpop.permute.xlu0 %1389
      %1391 = vrot.lane.b32.xlu0 %v466, 56
      %v1392 = vpop.permute.xlu0 %1391
      %1393 = vrot.lane.b32.xlu0 %v467, 56
      %v1394 = vpop.permute.xlu0 %1393
      %1395 = vrot.lane.b32.xlu0 %v470, 56
      %v1396 = vpop.permute.xlu0 %1395
      %1397 = vrot.lane.b32.xlu0 %v471, 56
      %v1398 = vpop.permute.xlu0 %1397
      %1399 = vrot.lane.b32.xlu0 %v474, 56
      %v1400 = vpop.permute.xlu0 %1399
      %1401 = vrot.lane.b32.xlu0 %v475, 56
      %v1402 = vpop.permute.xlu0 %1401
      %1403 = vrot.lane.b32.xlu0 %v478, 56
      %v1404 = vpop.permute.xlu0 %1403
      %1405 = vrot.lane.b32.xlu0 %v479, 56
      %v1406 = vpop.permute.xlu0 %1405
      %1407 = vrot.lane.b32.xlu0 %v482, 56
      %v1408 = vpop.permute.xlu0 %1407
      %1409 = vrot.lane.b32.xlu0 %v483, 56
      %v1410 = vpop.permute.xlu0 %1409
      %1411 = vrot.lane.b32.xlu0 %v486, 56
      %v1412 = vpop.permute.xlu0 %1411
      %1413 = vrot.lane.b32.xlu0 %v487, 56
      %v1414 = vpop.permute.xlu0 %1413
      %1415 = vrot.lane.b32.xlu0 %v490, 56
      %v1416 = vpop.permute.xlu0 %1415
      %1417 = vrot.lane.b32.xlu0 %v491, 56
      %v1418 = vpop.permute.xlu0 %1417
      %1419 = vrot.lane.b32.xlu0 %v494, 56
      %v1420 = vpop.permute.xlu0 %1419
      %1421 = vrot.lane.b32.xlu0 %v495, 56
      %v1422 = vpop.permute.xlu0 %1421
      %1423 = vrot.lane.b32.xlu0 %v498, 56
      %v1424 = vpop.permute.xlu0 %1423
      %1425 = vrot.lane.b32.xlu0 %v499, 56
      %v1426 = vpop.permute.xlu0 %1425
      %1427 = vrot.lane.b32.xlu0 %v502, 56
      %v1428 = vpop.permute.xlu0 %1427
      %1429 = vrot.lane.b32.xlu0 %v503, 56
      %v1430 = vpop.permute.xlu0 %1429
      %1431 = vrot.lane.b32.xlu0 %v506, 56
      %v1432 = vpop.permute.xlu0 %1431
      %1433 = vrot.lane.b32.xlu0 %v507, 56
      %v1434 = vpop.permute.xlu0 %1433
      %1435 = vrot.lane.b32.xlu0 %v510, 56
      %v1436 = vpop.permute.xlu0 %1435
      %1437 = vrot.lane.b32.xlu0 %v511, 56
      %v1438 = vpop.permute.xlu0 %1437
      %1439 = vrot.lane.b32.xlu0 %v514, 56
      %v1440 = vpop.permute.xlu0 %1439
      %1441 = vrot.lane.b32.xlu0 %v515, 56
      %v1442 = vpop.permute.xlu0 %1441
      %1475 = vrot.lane.b32.xlu0 %v707, 64
      %v1476 = vpop.permute.xlu0 %1475
      %1477 = vrot.lane.b32.xlu0 %v709, 64
      %v1478 = vpop.permute.xlu0 %1477
      %1479 = vrot.lane.b32.xlu0 %v712, 64
      %v1480 = vpop.permute.xlu0 %1479
      %1481 = vrot.lane.b32.xlu0 %v714, 64
      %v1482 = vpop.permute.xlu0 %1481
      %1483 = vrot.lane.b32.xlu0 %v717, 64
      %v1484 = vpop.permute.xlu0 %1483
      %1485 = vrot.lane.b32.xlu0 %v719, 64
      %v1486 = vpop.permute.xlu0 %1485
      %1487 = vrot.lane.b32.xlu0 %v722, 64
      %v1488 = vpop.permute.xlu0 %1487
      %1489 = vrot.lane.b32.xlu0 %v724, 64
      %v1490 = vpop.permute.xlu0 %1489
      %1491 = vrot.lane.b32.xlu0 %v727, 64
      %v1492 = vpop.permute.xlu0 %1491
      %1493 = vrot.lane.b32.xlu0 %v729, 64
      %v1494 = vpop.permute.xlu0 %1493
      %1495 = vrot.lane.b32.xlu0 %v732, 64
      %v1496 = vpop.permute.xlu0 %1495
      %1497 = vrot.lane.b32.xlu0 %v734, 64
      %v1498 = vpop.permute.xlu0 %1497
      %1499 = vrot.lane.b32.xlu0 %v737, 64
      %v1500 = vpop.permute.xlu0 %1499
      %1501 = vrot.lane.b32.xlu0 %v739, 64
      %v1502 = vpop.permute.xlu0 %1501
      %1503 = vrot.lane.b32.xlu0 %v742, 64
      %v1504 = vpop.permute.xlu0 %1503
      %1505 = vrot.lane.b32.xlu0 %v744, 64
      %v1506 = vpop.permute.xlu0 %1505
      %1507 = vrot.lane.b32.xlu0 %v747, 64
      %v1508 = vpop.permute.xlu0 %1507
      %1509 = vrot.lane.b32.xlu0 %v749, 64
      %v1510 = vpop.permute.xlu0 %1509
      %1511 = vrot.lane.b32.xlu0 %v752, 64
      %v1512 = vpop.permute.xlu0 %1511
      %1513 = vrot.lane.b32.xlu0 %v754, 64
      %v1514 = vpop.permute.xlu0 %1513
      %1515 = vrot.lane.b32.xlu0 %v757, 64
      %v1516 = vpop.permute.xlu0 %1515
      %1517 = vrot.lane.b32.xlu0 %v759, 64
      %v1518 = vpop.permute.xlu0 %1517
      %1519 = vrot.lane.b32.xlu0 %v762, 64
      %v1520 = vpop.permute.xlu0 %1519
      %1521 = vrot.lane.b32.xlu0 %v764, 64
      %v1522 = vpop.permute.xlu0 %1521
      %1523 = vrot.lane.b32.xlu0 %v767, 64
      %v1524 = vpop.permute.xlu0 %1523
      %1525 = vrot.lane.b32.xlu0 %v769, 64
      %v1526 = vpop.permute.xlu0 %1525
      %1527 = vrot.lane.b32.xlu0 %v772, 64
      %v1528 = vpop.permute.xlu0 %1527
      %1529 = vrot.lane.b32.xlu0 %v774, 64
      %v1530 = vpop.permute.xlu0 %1529
      %1531 = vrot.lane.b32.xlu0 %v786, 64
      %v1532 = vpop.permute.xlu0 %1531
      %1533 = vrot.lane.b32.xlu0 %v788, 64
      %v1534 = vpop.permute.xlu0 %1533
      %1535 = vrot.lane.b32.xlu0 %v800, 64
      %v1536 = vpop.permute.xlu0 %1535
      %1537 = vrot.lane.b32.xlu0 %v802, 64
      %v1538 = vpop.permute.xlu0 %1537
      %v1571 = vsel %vm307, %v568, %v804
      %v1572 = vsel %vm307, %v570, %v806
      %v1573 = vsel %vm307, %v573, %v808
      %v1574 = vsel %vm307, %v575, %v810
      %v1575 = vsel %vm307, %v578, %v812
      %v1576 = vsel %vm307, %v580, %v814
      %v1577 = vsel %vm307, %v583, %v816
      %v1578 = vsel %vm307, %v585, %v818
      %v1579 = vsel %vm307, %v588, %v820
      %v1580 = vsel %vm307, %v590, %v822
      %v1581 = vsel %vm307, %v593, %v824
      %v1582 = vsel %vm307, %v595, %v826
      %v1583 = vsel %vm307, %v598, %v828
      %v1584 = vsel %vm307, %v600, %v830
      %v1585 = vsel %vm307, %v603, %v832
      %v1586 = vsel %vm307, %v605, %v834
      %v1587 = vsel %vm307, %v608, %v836
      %v1588 = vsel %vm307, %v610, %v838
      %v1589 = vsel %vm307, %v613, %v840
      %v1590 = vsel %vm307, %v615, %v842
      %v1591 = vsel %vm307, %v618, %v844
      %v1592 = vsel %vm307, %v620, %v846
      %v1593 = vsel %vm307, %v623, %v848
      %v1594 = vsel %vm307, %v625, %v850
      %v1595 = vsel %vm307, %v628, %v852
      %v1596 = vsel %vm307, %v630, %v854
      %v1597 = vsel %vm307, %v633, %v856
      %v1598 = vsel %vm307, %v635, %v858
      %v1599 = vsel %vm307, %v638, %v860
      %v1600 = vsel %vm307, %v640, %v862
      %v1601 = vsel %vm307, %v643, %v864
      %v1602 = vsel %vm307, %v645, %v866
      %vm1603 = vcmask 130048
      %v1604 = vsel %vm1603, %v1571, %v900
      %v1605 = vsel %vm1603, %v1572, %v902
      %v1606 = vsel %vm1603, %v1573, %v904
      %v1607 = vsel %vm1603, %v1574, %v906
      %v1608 = vsel %vm1603, %v1575, %v908
      %v1609 = vsel %vm1603, %v1576, %v910
      %v1610 = vsel %vm1603, %v1577, %v912
      %v1611 = vsel %vm1603, %v1578, %v914
      %v1612 = vsel %vm1603, %v1579, %v916
      %v1613 = vsel %vm1603, %v1580, %v918
      %v1614 = vsel %vm1603, %v1581, %v920
      %v1615 = vsel %vm1603, %v1582, %v922
      %v1616 = vsel %vm1603, %v1583, %v924
      %v1617 = vsel %vm1603, %v1584, %v926
      %v1618 = vsel %vm1603, %v1585, %v928
      %v1619 = vsel %vm1603, %v1586, %v930
      %v1620 = vsel %vm1603, %v1587, %v932
      %v1621 = vsel %vm1603, %v1588, %v934
      %v1622 = vsel %vm1603, %v1589, %v936
      %v1623 = vsel %vm1603, %v1590, %v938
      %v1624 = vsel %vm1603, %v1591, %v940
      %v1625 = vsel %vm1603, %v1592, %v942
      %v1626 = vsel %vm1603, %v1593, %v944
      %v1627 = vsel %vm1603, %v1594, %v946
      %v1628 = vsel %vm1603, %v1595, %v948
      %v1629 = vsel %vm1603, %v1596, %v950
      %v1630 = vsel %vm1603, %v1597, %v952
      %v1631 = vsel %vm1603, %v1598, %v954
      %v1632 = vsel %vm1603, %v1599, %v956
      %v1633 = vsel %vm1603, %v1600, %v958
      %v1634 = vsel %vm1603, %v1601, %v960
      %v1635 = vsel %vm1603, %v1602, %v962
      %vm1636 = vcmask 195584
      %v1637 = vsel %vm1636, %v1604, %v996
      %v1638 = vsel %vm1636, %v1605, %v998
      %v1639 = vsel %vm1636, %v1606, %v1000
      %v1640 = vsel %vm1636, %v1607, %v1002
      %v1641 = vsel %vm1636, %v1608, %v1004
      %v1642 = vsel %vm1636, %v1609, %v1006
      %v1643 = vsel %vm1636, %v1610, %v1008
      %v1644 = vsel %vm1636, %v1611, %v1010
      %v1645 = vsel %vm1636, %v1612, %v1012
      %v1646 = vsel %vm1636, %v1613, %v1014
      %v1647 = vsel %vm1636, %v1614, %v1016
      %v1648 = vsel %vm1636, %v1615, %v1018
      %v1649 = vsel %vm1636, %v1616, %v1020
      %v1650 = vsel %vm1636, %v1617, %v1022
      %v1651 = vsel %vm1636, %v1618, %v1024
      %v1652 = vsel %vm1636, %v1619, %v1026
      %v1653 = vsel %vm1636, %v1620, %v1028
      %v1654 = vsel %vm1636, %v1621, %v1030
      %v1655 = vsel %vm1636, %v1622, %v1032
      %v1656 = vsel %vm1636, %v1623, %v1034
      %v1657 = vsel %vm1636, %v1624, %v1036
      %v1658 = vsel %vm1636, %v1625, %v1038
      %v1659 = vsel %vm1636, %v1626, %v1040
      %v1660 = vsel %vm1636, %v1627, %v1042
      %v1661 = vsel %vm1636, %v1628, %v1044
      %v1662 = vsel %vm1636, %v1629, %v1046
      %v1663 = vsel %vm1636, %v1630, %v1048
      %v1664 = vsel %vm1636, %v1631, %v1050
      %v1665 = vsel %vm1636, %v1632, %v1052
      %v1666 = vsel %vm1636, %v1633, %v1054
      %v1667 = vsel %vm1636, %v1634, %v1056
      %v1668 = vsel %vm1636, %v1635, %v1058
      %vm1669 = vcmask 261120
      %v1670 = vsel %vm1669, %v1637, %v1092
      %v1671 = vsel %vm1669, %v1638, %v1094
      %v1672 = vsel %vm1669, %v1639, %v1096
      %v1673 = vsel %vm1669, %v1640, %v1098
      %v1674 = vsel %vm1669, %v1641, %v1100
      %v1675 = vsel %vm1669, %v1642, %v1102
      %v1676 = vsel %vm1669, %v1643, %v1104
      %v1677 = vsel %vm1669, %v1644, %v1106
      %v1678 = vsel %vm1669, %v1645, %v1108
      %v1679 = vsel %vm1669, %v1646, %v1110
      %v1680 = vsel %vm1669, %v1647, %v1112
      %v1681 = vsel %vm1669, %v1648, %v1114
      %v1682 = vsel %vm1669, %v1649, %v1116
      %v1683 = vsel %vm1669, %v1650, %v1118
      %v1684 = vsel %vm1669, %v1651, %v1120
      %v1685 = vsel %vm1669, %v1652, %v1122
      %v1686 = vsel %vm1669, %v1653, %v1124
      %v1687 = vsel %vm1669, %v1654, %v1126
      %v1688 = vsel %vm1669, %v1655, %v1128
      %v1689 = vsel %vm1669, %v1656, %v1130
      %v1690 = vsel %vm1669, %v1657, %v1132
      %v1691 = vsel %vm1669, %v1658, %v1134
      %v1692 = vsel %vm1669, %v1659, %v1136
      %v1693 = vsel %vm1669, %v1660, %v1138
      %v1694 = vsel %vm1669, %v1661, %v1140
      %v1695 = vsel %vm1669, %v1662, %v1142
      %v1696 = vsel %vm1669, %v1663, %v1144
      %v1697 = vsel %vm1669, %v1664, %v1146
      %v1698 = vsel %vm1669, %v1665, %v1148
      %v1699 = vsel %vm1669, %v1666, %v1150
      %v1700 = vsel %vm1669, %v1667, %v1152
      %v1701 = vsel %vm1669, %v1668, %v1154
      %vm1702 = vcmask 326656
      %v1703 = vsel %vm1702, %v1670, %v1188
      %v1704 = vsel %vm1702, %v1671, %v1190
      %v1705 = vsel %vm1702, %v1672, %v1192
      %v1706 = vsel %vm1702, %v1673, %v1194
      %v1707 = vsel %vm1702, %v1674, %v1196
      %v1708 = vsel %vm1702, %v1675, %v1198
      %v1709 = vsel %vm1702, %v1676, %v1200
      %v1710 = vsel %vm1702, %v1677, %v1202
      %v1711 = vsel %vm1702, %v1678, %v1204
      %v1712 = vsel %vm1702, %v1679, %v1206
      %v1713 = vsel %vm1702, %v1680, %v1208
      %v1714 = vsel %vm1702, %v1681, %v1210
      %v1715 = vsel %vm1702, %v1682, %v1212
      %v1716 = vsel %vm1702, %v1683, %v1214
      %v1717 = vsel %vm1702, %v1684, %v1216
      %v1718 = vsel %vm1702, %v1685, %v1218
      %v1719 = vsel %vm1702, %v1686, %v1220
      %v1720 = vsel %vm1702, %v1687, %v1222
      %v1721 = vsel %vm1702, %v1688, %v1224
      %v1722 = vsel %vm1702, %v1689, %v1226
      %v1723 = vsel %vm1702, %v1690, %v1228
      %v1724 = vsel %vm1702, %v1691, %v1230
      %v1725 = vsel %vm1702, %v1692, %v1232
      %v1726 = vsel %vm1702, %v1693, %v1234
      %v1727 = vsel %vm1702, %v1694, %v1236
      %v1728 = vsel %vm1702, %v1695, %v1238
      %v1729 = vsel %vm1702, %v1696, %v1240
      %v1730 = vsel %vm1702, %v1697, %v1242
      %v1731 = vsel %vm1702, %v1698, %v1244
      %v1732 = vsel %vm1702, %v1699, %v1246
      %v1733 = vsel %vm1702, %v1700, %v1248
      %v1734 = vsel %vm1702, %v1701, %v1250
      %vm1735 = vcmask 392192
      %v1736 = vsel %vm1735, %v1703, %v1284
      %v1737 = vsel %vm1735, %v1704, %v1286
      %v1738 = vsel %vm1735, %v1705, %v1288
      %v1739 = vsel %vm1735, %v1706, %v1290
      %v1740 = vsel %vm1735, %v1707, %v1292
      %v1741 = vsel %vm1735, %v1708, %v1294
      %v1742 = vsel %vm1735, %v1709, %v1296
      %v1743 = vsel %vm1735, %v1710, %v1298
      %v1744 = vsel %vm1735, %v1711, %v1300
      %v1745 = vsel %vm1735, %v1712, %v1302
      %v1746 = vsel %vm1735, %v1713, %v1304
      %v1747 = vsel %vm1735, %v1714, %v1306
      %v1748 = vsel %vm1735, %v1715, %v1308
      %v1749 = vsel %vm1735, %v1716, %v1310
      %v1750 = vsel %vm1735, %v1717, %v1312
      %v1751 = vsel %vm1735, %v1718, %v1314
      %v1752 = vsel %vm1735, %v1719, %v1316
      %v1753 = vsel %vm1735, %v1720, %v1318
      %v1754 = vsel %vm1735, %v1721, %v1320
      %v1755 = vsel %vm1735, %v1722, %v1322
      %v1756 = vsel %vm1735, %v1723, %v1324
      %v1757 = vsel %vm1735, %v1724, %v1326
      %v1758 = vsel %vm1735, %v1725, %v1328
      %v1759 = vsel %vm1735, %v1726, %v1330
      %v1760 = vsel %vm1735, %v1727, %v1332
      %v1761 = vsel %vm1735, %v1728, %v1334
      %v1762 = vsel %vm1735, %v1729, %v1336
      %v1763 = vsel %vm1735, %v1730, %v1338
      %v1764 = vsel %vm1735, %v1731, %v1340
      %v1765 = vsel %vm1735, %v1732, %v1342
      %v1766 = vsel %vm1735, %v1733, %v1344
      %v1767 = vsel %vm1735, %v1734, %v1346
      %vm1768 = vcmask 457728
      %v1769 = vsel %vm1768, %v1736, %v1380
      %v1770 = vsel %vm1768, %v1737, %v1382
      %v1771 = vsel %vm1768, %v1738, %v1384
      %v1772 = vsel %vm1768, %v1739, %v1386
      %v1773 = vsel %vm1768, %v1740, %v1388
      %v1774 = vsel %vm1768, %v1741, %v1390
      %v1775 = vsel %vm1768, %v1742, %v1392
      %v1776 = vsel %vm1768, %v1743, %v1394
      %v1777 = vsel %vm1768, %v1744, %v1396
      %v1778 = vsel %vm1768, %v1745, %v1398
      %v1779 = vsel %vm1768, %v1746, %v1400
      %v1780 = vsel %vm1768, %v1747, %v1402
      %v1781 = vsel %vm1768, %v1748, %v1404
      %v1782 = vsel %vm1768, %v1749, %v1406
      %v1783 = vsel %vm1768, %v1750, %v1408
      %v1784 = vsel %vm1768, %v1751, %v1410
      %v1785 = vsel %vm1768, %v1752, %v1412
      %v1786 = vsel %vm1768, %v1753, %v1414
      %v1787 = vsel %vm1768, %v1754, %v1416
      %v1788 = vsel %vm1768, %v1755, %v1418
      %v1789 = vsel %vm1768, %v1756, %v1420
      %v1790 = vsel %vm1768, %v1757, %v1422
      %v1791 = vsel %vm1768, %v1758, %v1424
      %v1792 = vsel %vm1768, %v1759, %v1426
      %v1793 = vsel %vm1768, %v1760, %v1428
      %v1794 = vsel %vm1768, %v1761, %v1430
      %v1795 = vsel %vm1768, %v1762, %v1432
      %v1796 = vsel %vm1768, %v1763, %v1434
      %v1797 = vsel %vm1768, %v1764, %v1436
      %v1798 = vsel %vm1768, %v1765, %v1438
      %v1799 = vsel %vm1768, %v1766, %v1440
      %v1800 = vsel %vm1768, %v1767, %v1442
      %vm1801 = vcmask 523264
      %v1802 = vsel %vm1801, %v1769, %v1476
      %v1803 = vsel %vm1801, %v1770, %v1478
      %v1804 = vsel %vm1801, %v1771, %v1480
      %v1805 = vsel %vm1801, %v1772, %v1482
      %v1806 = vsel %vm1801, %v1773, %v1484
      %v1807 = vsel %vm1801, %v1774, %v1486
      %v1808 = vsel %vm1801, %v1775, %v1488
      %v1809 = vsel %vm1801, %v1776, %v1490
      %v1810 = vsel %vm1801, %v1777, %v1492
      %v1811 = vsel %vm1801, %v1778, %v1494
      %v1812 = vsel %vm1801, %v1779, %v1496
      %v1813 = vsel %vm1801, %v1780, %v1498
      %v1814 = vsel %vm1801, %v1781, %v1500
      %v1815 = vsel %vm1801, %v1782, %v1502
      %v1816 = vsel %vm1801, %v1783, %v1504
      %v1817 = vsel %vm1801, %v1784, %v1506
      %v1818 = vsel %vm1801, %v1785, %v1508
      %v1819 = vsel %vm1801, %v1786, %v1510
      %v1820 = vsel %vm1801, %v1787, %v1512
      %v1821 = vsel %vm1801, %v1788, %v1514
      %v1822 = vsel %vm1801, %v1789, %v1516
      %v1823 = vsel %vm1801, %v1790, %v1518
      %v1824 = vsel %vm1801, %v1791, %v1520
      %v1825 = vsel %vm1801, %v1792, %v1522
      %v1826 = vsel %vm1801, %v1793, %v1524
      %v1827 = vsel %vm1801, %v1794, %v1526
      %v1828 = vsel %vm1801, %v1795, %v1528
      %v1829 = vsel %vm1801, %v1796, %v1530
      %v1830 = vsel %vm1801, %v1797, %v1532
      %v1831 = vsel %vm1801, %v1798, %v1534
      %v1832 = vsel %vm1801, %v1799, %v1536
      %v1833 = vsel %vm1801, %v1800, %v1538
      %v1834 = vpack.c.bf16 %v1803, %v1802
      %v1835 = vpack.c.bf16 %v1805, %v1804
      %v1836 = vpack.c.bf16 %v1807, %v1806
      %v1837 = vpack.c.bf16 %v1809, %v1808
      %v1838 = vpack.c.bf16 %v1811, %v1810
      %v1839 = vpack.c.bf16 %v1813, %v1812
      %v1840 = vpack.c.bf16 %v1815, %v1814
      %v1841 = vpack.c.bf16 %v1817, %v1816
      %v1842 = vpack.c.bf16 %v1819, %v1818
      %v1843 = vpack.c.bf16 %v1821, %v1820
      %v1844 = vpack.c.bf16 %v1823, %v1822
      %v1845 = vpack.c.bf16 %v1825, %v1824
      %v1846 = vpack.c.bf16 %v1827, %v1826
      %v1847 = vpack.c.bf16 %v1829, %v1828
      %v1848 = vpack.c.bf16 %v1831, %v1830
      %v1849 = vpack.c.bf16 %v1833, %v1832
      %v1850 = vld [vmem:[%s1] sm:$0xf]
      %v1851 = vld [vmem:[%s1 + $0x4] sm:$0xf]
      %v1852 = vld [vmem:[%s1 + $0x8] sm:$0xf]
      %v1853 = vld [vmem:[%s1 + $0xc] sm:$0xf]
      %v1854 = vld [vmem:[%s1 + $0x10] sm:$0xf]
      %v1855 = vld [vmem:[%s1 + $0x14] sm:$0xf]
      %v1856 = vld [vmem:[%s1 + $0x18] sm:$0xf]
      %v1857 = vld [vmem:[%s1 + $0x1c] sm:$0xf]
      %v1858 = vld [vmem:[%s1 + $0x20] sm:$0xf]
      %v1859 = vld [vmem:[%s2] sm:$0x1]
      %v1861 = vlaneseq
      %v1862 = vshrl.u32 %v1861, 7
      %v1863 = vsub.s32 0, %v1862
      %v1864 = vrot.slane %v1859, %v1863
      %v1875 = vunpack.c.l.b16 %v1850
      %v1876 = vunpack.c.l.b16 %v1851
      %v1877 = vunpack.c.l.b16 %v1852
      %v1878 = vunpack.c.l.b16 %v1853
      %v1879 = vunpack.c.l.b16 %v1854
      %v1880 = vunpack.c.l.b16 %v1855
      %v1881 = vunpack.c.l.b16 %v1856
      %v1882 = vunpack.c.l.b16 %v1857
      %v1883 = vunpack.c.l.b16 %v1858
      %v1884 = vpack.c.b16 %v1876, %v1875
      %v1885 = vpack.c.b16 %v1878, %v1877
      %v1886 = vpack.c.b16 %v1880, %v1879
      %v1887 = vpack.c.b16 %v1882, %v1881
      %v1888 = vpack.c.b16 %v1883, %v1883
      %vm1893 = vcmask 588800
      %v1895 = vsel %vm1893, %v1834, 0
      %v1898 = vsel %vm1893, %v1835, 0
      %v1901 = vsel %vm1893, %v1836, 0
      %v1904 = vsel %vm1893, %v1837, 0
      %v1907 = vsel %vm1893, %v1838, 0
      %v1910 = vsel %vm1893, %v1839, 0
      %v1913 = vsel %vm1893, %v1840, 0
      %v1916 = vsel %vm1893, %v1841, 0
      %v1919 = vsel %vm1893, %v1842, 0
      %v1922 = vsel %vm1893, %v1843, 0
      %v1925 = vsel %vm1893, %v1844, 0
      %v1928 = vsel %vm1893, %v1845, 0
      %v1931 = vsel %vm1893, %v1846, 0
      %v1934 = vsel %vm1893, %v1847, 0
      %v1937 = vsel %vm1893, %v1848, 0
      %v1940 = vsel %vm1893, %v1849, 0
      %vm1942 = vcmask 1043456
      %v1944 = vsel %vm1942, %v1888, 0
      %1946 = vmatprep.subr.bf16.mxu0 0
      %1947 = vmatpush1.bf16.msra.mxu0 %v1884
      %1948 = vmatprep.subr.bf16.mxu0 0
      %1949 = vmatpush1.bf16.msra.mxu0 %v1885
      %1950 = vmatprep.subr.bf16.mxu0 0
      %1951 = vmatpush1.bf16.msra.mxu0 %v1886
      %1952 = vmatprep.subr.bf16.mxu0 0
      %1953 = vmatpush1.bf16.msra.mxu0 %v1887
      %1954 = vmatprep.subr.bf16.mxu0 0
      %1955 = vmatpush1.bf16.msra.mxu0 %v1944
      %1956 = vmatprep.subr.bf16.mxu0 0
      %1957 = vmatpush1.bf16.msra.mxu0 0
      %1958 = vmatprep.subr.bf16.mxu0 0
      %1959 = vmatpush1.bf16.msra.mxu0 0
      %1960 = vmatprep.subr.bf16.mxu0 0
      %1961 = vmatpush1.bf16.msra.mxu0 0
      %1962 = vmatprep.subr.bf16.mxu0 0
      %1963 = vmatpush1.bf16.msra.mxu0 0
      %1964 = vmatprep.subr.bf16.mxu0 0
      %1965 = vmatpush1.bf16.msra.mxu0 0
      %1966 = vmatprep.subr.bf16.mxu0 0
      %1967 = vmatpush1.bf16.msra.mxu0 0
      %1968 = vmatprep.subr.bf16.mxu0 0
      %1969 = vmatpush1.bf16.msra.mxu0 0
      %1970 = vmatprep.subr.bf16.mxu0 0
      %1971 = vmatpush1.bf16.msra.mxu0 0
      %1972 = vmatprep.subr.bf16.mxu0 0
      %1973 = vmatpush1.bf16.msra.mxu0 0
      %1974 = vmatprep.subr.bf16.mxu0 0
      %1975 = vmatpush1.bf16.msra.mxu0 0
      %1976 = vmatprep.subr.bf16.mxu0 0
      %1977 = vmatpush1.bf16.msra.mxu0 0
      %1978 = vmatprep.mubr.bf16.mxu0 0
      %1979 = vmatmul.mubr.bf16.gmra.mrb[0].mxu0 %v1895
      %v1980 = vpop.f32.mrb[0].mxu0
      %v1981 = vadd.f32 %v1864, %v1980
      %v1982 = vpop.f32.mrb[0].mxu0
      %v1983 = vpop.f32.mrb[0].mxu0
      %v1984 = vadd.f32 %v1864, %v1983
      %v1985 = vpop.f32.mrb[0].mxu0
      %1986 = vmatprep.mubr.bf16.mxu0 0
      %1987 = vmatmul.mubr.bf16.gmra.mrb[0].mxu0 %v1898
      %v1988 = vpop.f32.mrb[0].mxu0
      %v1989 = vadd.f32 %v1864, %v1988
      %v1990 = vpop.f32.mrb[0].mxu0
      %v1991 = vpop.f32.mrb[0].mxu0
      %v1992 = vadd.f32 %v1864, %v1991
      %v1993 = vpop.f32.mrb[0].mxu0
      %1994 = vmatprep.mubr.bf16.mxu0 0
      %1995 = vmatmul.mubr.bf16.gmra.mrb[0].mxu0 %v1901
      %v1996 = vpop.f32.mrb[0].mxu0
      %v1997 = vadd.f32 %v1864, %v1996
      %v1998 = vpop.f32.mrb[0].mxu0
      %v1999 = vpop.f32.mrb[0].mxu0
      %v2000 = vadd.f32 %v1864, %v1999
      %v2001 = vpop.f32.mrb[0].mxu0
      %2002 = vmatprep.mubr.bf16.mxu0 0
      %2003 = vmatmul.mubr.bf16.gmra.mrb[0].mxu0 %v1904
      %v2004 = vpop.f32.mrb[0].mxu0
      %v2005 = vadd.f32 %v1864, %v2004
      %v2006 = vpop.f32.mrb[0].mxu0
      %v2007 = vpop.f32.mrb[0].mxu0
      %v2008 = vadd.f32 %v1864, %v2007
      %v2009 = vpop.f32.mrb[0].mxu0
      %2010 = vmatprep.mubr.bf16.mxu0 0
      %2011 = vmatmul.mubr.bf16.gmra.mrb[0].mxu0 %v1907
      %v2012 = vpop.f32.mrb[0].mxu0
      %v2013 = vadd.f32 %v1864, %v2012
      %v2014 = vpop.f32.mrb[0].mxu0
      %v2015 = vpop.f32.mrb[0].mxu0
      %v2016 = vadd.f32 %v1864, %v2015
      %v2017 = vpop.f32.mrb[0].mxu0
      %2018 = vmatprep.mubr.bf16.mxu0 0
      %2019 = vmatmul.mubr.bf16.gmra.mrb[0].mxu0 %v1910
      %v2020 = vpop.f32.mrb[0].mxu0
      %v2021 = vadd.f32 %v1864, %v2020
      %v2022 = vpop.f32.mrb[0].mxu0
      %v2023 = vpop.f32.mrb[0].mxu0
      %v2024 = vadd.f32 %v1864, %v2023
      %v2025 = vpop.f32.mrb[0].mxu0
      %2026 = vmatprep.mubr.bf16.mxu0 0
      %2027 = vmatmul.mubr.bf16.gmra.mrb[0].mxu0 %v1913
      %v2028 = vpop.f32.mrb[0].mxu0
      %v2029 = vadd.f32 %v1864, %v2028
      %v2030 = vpop.f32.mrb[0].mxu0
      %v2031 = vpop.f32.mrb[0].mxu0
      %v2032 = vadd.f32 %v1864, %v2031
      %v2033 = vpop.f32.mrb[0].mxu0
      %2034 = vmatprep.mubr.bf16.mxu0 0
      %2035 = vmatmul.mubr.bf16.gmra.mrb[0].mxu0 %v1916
      %v2036 = vpop.f32.mrb[0].mxu0
      %v2037 = vadd.f32 %v1864, %v2036
      %v2038 = vpop.f32.mrb[0].mxu0
      %v2039 = vpop.f32.mrb[0].mxu0
      %v2040 = vadd.f32 %v1864, %v2039
      %v2041 = vpop.f32.mrb[0].mxu0
      %2042 = vmatprep.mubr.bf16.mxu0 0
      %2043 = vmatmul.mubr.bf16.gmra.mrb[0].mxu0 %v1919
      %v2044 = vpop.f32.mrb[0].mxu0
      %v2045 = vadd.f32 %v1864, %v2044
      %v2046 = vpop.f32.mrb[0].mxu0
      %v2047 = vpop.f32.mrb[0].mxu0
      %v2048 = vadd.f32 %v1864, %v2047
      %v2049 = vpop.f32.mrb[0].mxu0
      %2050 = vmatprep.mubr.bf16.mxu0 0
      %2051 = vmatmul.mubr.bf16.gmra.mrb[0].mxu0 %v1922
      %v2052 = vpop.f32.mrb[0].mxu0
      %v2053 = vadd.f32 %v1864, %v2052
      %v2054 = vpop.f32.mrb[0].mxu0
      %v2055 = vpop.f32.mrb[0].mxu0
      %v2056 = vadd.f32 %v1864, %v2055
      %v2057 = vpop.f32.mrb[0].mxu0
      %2058 = vmatprep.mubr.bf16.mxu0 0
      %2059 = vmatmul.mubr.bf16.gmra.mrb[0].mxu0 %v1925
      %v2060 = vpop.f32.mrb[0].mxu0
      %v2061 = vadd.f32 %v1864, %v2060
      %v2062 = vpop.f32.mrb[0].mxu0
      %v2063 = vpop.f32.mrb[0].mxu0
      %v2064 = vadd.f32 %v1864, %v2063
      %v2065 = vpop.f32.mrb[0].mxu0
      %2066 = vmatprep.mubr.bf16.mxu0 0
      %2067 = vmatmul.mubr.bf16.gmra.mrb[0].mxu0 %v1928
      %v2068 = vpop.f32.mrb[0].mxu0
      %v2069 = vadd.f32 %v1864, %v2068
      %v2070 = vpop.f32.mrb[0].mxu0
      %v2071 = vpop.f32.mrb[0].mxu0
      %v2072 = vadd.f32 %v1864, %v2071
      %v2073 = vpop.f32.mrb[0].mxu0
      %2074 = vmatprep.mubr.bf16.mxu0 0
      %2075 = vmatmul.mubr.bf16.gmra.mrb[0].mxu0 %v1931
      %v2076 = vpop.f32.mrb[0].mxu0
      %v2077 = vadd.f32 %v1864, %v2076
      %v2078 = vpop.f32.mrb[0].mxu0
      %v2079 = vpop.f32.mrb[0].mxu0
      %v2080 = vadd.f32 %v1864, %v2079
      %v2081 = vpop.f32.mrb[0].mxu0
      %2082 = vmatprep.mubr.bf16.mxu0 0
      %2083 = vmatmul.mubr.bf16.gmra.mrb[0].mxu0 %v1934
      %v2084 = vpop.f32.mrb[0].mxu0
      %v2085 = vadd.f32 %v1864, %v2084
      %v2086 = vpop.f32.mrb[0].mxu0
      %v2087 = vpop.f32.mrb[0].mxu0
      %v2088 = vadd.f32 %v1864, %v2087
      %v2089 = vpop.f32.mrb[0].mxu0
      %2090 = vmatprep.mubr.bf16.mxu0 0
      %2091 = vmatmul.mubr.bf16.gmra.mrb[0].mxu0 %v1937
      %v2092 = vpop.f32.mrb[0].mxu0
      %v2093 = vadd.f32 %v1864, %v2092
      %v2094 = vpop.f32.mrb[0].mxu0
      %v2095 = vpop.f32.mrb[0].mxu0
      %v2096 = vadd.f32 %v1864, %v2095
      %v2097 = vpop.f32.mrb[0].mxu0
      %2098 = vmatprep.mubr.bf16.mxu0 0
      %2099 = vmatmul.mubr.bf16.gmra.mrb[0].mxu0 %v1940
      %v2100 = vpop.f32.mrb[0].mxu0
      %v2101 = vadd.f32 %v1864, %v2100
      %v2102 = vpop.f32.mrb[0].mxu0
      %v2103 = vpop.f32.mrb[0].mxu0
      %v2104 = vadd.f32 %v1864, %v2103
      %v2105 = vpop.f32.mrb[0].mxu0
      %2106 = vdwg.mxu0
      %vm2107 = vcmp.ge.f32.partialorder %v1981, 0.0
      %vm2108 = vcmp.ge.f32.partialorder %v1984, 0.0
      %vm2109 = vcmp.ge.f32.partialorder %v1989, 0.0
      %vm2110 = vcmp.ge.f32.partialorder %v1992, 0.0
      %vm2111 = vcmp.ge.f32.partialorder %v1997, 0.0
      %vm2112 = vcmp.ge.f32.partialorder %v2000, 0.0
      %vm2113 = vcmp.ge.f32.partialorder %v2005, 0.0
      %vm2114 = vcmp.ge.f32.partialorder %v2008, 0.0
      %vm2115 = vcmp.ge.f32.partialorder %v2013, 0.0
      %vm2116 = vcmp.ge.f32.partialorder %v2016, 0.0
      %vm2117 = vcmp.ge.f32.partialorder %v2021, 0.0
      %vm2118 = vcmp.ge.f32.partialorder %v2024, 0.0
      %vm2119 = vcmp.ge.f32.partialorder %v2029, 0.0
      %vm2120 = vcmp.ge.f32.partialorder %v2032, 0.0
      %vm2121 = vcmp.ge.f32.partialorder %v2037, 0.0
      %vm2122 = vcmp.ge.f32.partialorder %v2040, 0.0
      %vm2123 = vcmp.ge.f32.partialorder %v2045, 0.0
      %vm2124 = vcmp.ge.f32.partialorder %v2048, 0.0
      %vm2125 = vcmp.ge.f32.partialorder %v2053, 0.0
      %vm2126 = vcmp.ge.f32.partialorder %v2056, 0.0
      %vm2127 = vcmp.ge.f32.partialorder %v2061, 0.0
      %vm2128 = vcmp.ge.f32.partialorder %v2064, 0.0
      %vm2129 = vcmp.ge.f32.partialorder %v2069, 0.0
      %vm2130 = vcmp.ge.f32.partialorder %v2072, 0.0
      %vm2131 = vcmp.ge.f32.partialorder %v2077, 0.0
      %vm2132 = vcmp.ge.f32.partialorder %v2080, 0.0
      %vm2133 = vcmp.ge.f32.partialorder %v2085, 0.0
      %vm2134 = vcmp.ge.f32.partialorder %v2088, 0.0
      %vm2135 = vcmp.ge.f32.partialorder %v2093, 0.0
      %vm2136 = vcmp.ge.f32.partialorder %v2096, 0.0
      %vm2137 = vcmp.ge.f32.partialorder %v2101, 0.0
      %vm2138 = vcmp.ge.f32.partialorder %v2104, 0.0
      %v2139 = vmul.f32 %v1981, 0.2
      %v2140 = vmul.f32 %v1984, 0.2
      %v2141 = vmul.f32 %v1989, 0.2
      %v2142 = vmul.f32 %v1992, 0.2
      %v2143 = vmul.f32 %v1997, 0.2
      %v2144 = vmul.f32 %v2000, 0.2
      %v2145 = vmul.f32 %v2005, 0.2
      %v2146 = vmul.f32 %v2008, 0.2
      %v2147 = vmul.f32 %v2013, 0.2
      %v2148 = vmul.f32 %v2016, 0.2
      %v2149 = vmul.f32 %v2021, 0.2
      %v2150 = vmul.f32 %v2024, 0.2
      %v2151 = vmul.f32 %v2029, 0.2
      %v2152 = vmul.f32 %v2032, 0.2
      %v2153 = vmul.f32 %v2037, 0.2
      %v2154 = vmul.f32 %v2040, 0.2
      %v2155 = vmul.f32 %v2045, 0.2
      %v2156 = vmul.f32 %v2048, 0.2
      %v2157 = vmul.f32 %v2053, 0.2
      %v2158 = vmul.f32 %v2056, 0.2
      %v2159 = vmul.f32 %v2061, 0.2
      %v2160 = vmul.f32 %v2064, 0.2
      %v2161 = vmul.f32 %v2069, 0.2
      %v2162 = vmul.f32 %v2072, 0.2
      %v2163 = vmul.f32 %v2077, 0.2
      %v2164 = vmul.f32 %v2080, 0.2
      %v2165 = vmul.f32 %v2085, 0.2
      %v2166 = vmul.f32 %v2088, 0.2
      %v2167 = vmul.f32 %v2093, 0.2
      %v2168 = vmul.f32 %v2096, 0.2
      %v2169 = vmul.f32 %v2101, 0.2
      %v2170 = vmul.f32 %v2104, 0.2
      %v2171 = vsel %vm2107, %v1981, %v2139
      %v2172 = vsel %vm2108, %v1984, %v2140
      %v2173 = vsel %vm2109, %v1989, %v2141
      %v2174 = vsel %vm2110, %v1992, %v2142
      %v2175 = vsel %vm2111, %v1997, %v2143
      %v2176 = vsel %vm2112, %v2000, %v2144
      %v2177 = vsel %vm2113, %v2005, %v2145
      %v2178 = vsel %vm2114, %v2008, %v2146
      %v2179 = vsel %vm2115, %v2013, %v2147
      %v2180 = vsel %vm2116, %v2016, %v2148
      %v2181 = vsel %vm2117, %v2021, %v2149
      %v2182 = vsel %vm2118, %v2024, %v2150
      %v2183 = vsel %vm2119, %v2029, %v2151
      %v2184 = vsel %vm2120, %v2032, %v2152
      %v2185 = vsel %vm2121, %v2037, %v2153
      %v2186 = vsel %vm2122, %v2040, %v2154
      %v2187 = vsel %vm2123, %v2045, %v2155
      %v2188 = vsel %vm2124, %v2048, %v2156
      %v2189 = vsel %vm2125, %v2053, %v2157
      %v2190 = vsel %vm2126, %v2056, %v2158
      %v2191 = vsel %vm2127, %v2061, %v2159
      %v2192 = vsel %vm2128, %v2064, %v2160
      %v2193 = vsel %vm2129, %v2069, %v2161
      %v2194 = vsel %vm2130, %v2072, %v2162
      %v2195 = vsel %vm2131, %v2077, %v2163
      %v2196 = vsel %vm2132, %v2080, %v2164
      %v2197 = vsel %vm2133, %v2085, %v2165
      %v2198 = vsel %vm2134, %v2088, %v2166
      %v2199 = vsel %vm2135, %v2093, %v2167
      %v2200 = vsel %vm2136, %v2096, %v2168
      %v2201 = vsel %vm2137, %v2101, %v2169
      %v2202 = vsel %vm2138, %v2104, %v2170
      %v2203 = vld [vmem:[%s3] sm:$0xff]
      %v2204 = vld [vmem:[%s3 + $0x8] sm:$0xff]
      %v2205 = vld [vmem:[%s3 + $0x10] sm:$0xff]
      %v2206 = vld [vmem:[%s3 + $0x18] sm:$0xff]
      %v2207 = vld [vmem:[%s3 + $0x20] sm:$0xff]
      %v2208 = vld [vmem:[%s3 + $0x28] sm:$0xff]
      %v2209 = vld [vmem:[%s3 + $0x30] sm:$0xff]
      %v2210 = vld [vmem:[%s3 + $0x38] sm:$0xff]
      %v2211 = vld [vmem:[%s3 + $0x40] sm:$0xff]
      %v2213 = vsel %vm1893, %v1802, 0
      %v2216 = vsel %vm1893, %v1803, 0
      %v2219 = vsel %vm1893, %v1804, 0
      %v2222 = vsel %vm1893, %v1805, 0
      %v2225 = vsel %vm1893, %v1806, 0
      %v2228 = vsel %vm1893, %v1807, 0
      %v2231 = vsel %vm1893, %v1808, 0
      %v2234 = vsel %vm1893, %v1809, 0
      %v2237 = vsel %vm1893, %v1810, 0
      %v2240 = vsel %vm1893, %v1811, 0
      %v2243 = vsel %vm1893, %v1812, 0
      %v2246 = vsel %vm1893, %v1813, 0
      %v2249 = vsel %vm1893, %v1814, 0
      %v2252 = vsel %vm1893, %v1815, 0
      %v2255 = vsel %vm1893, %v1816, 0
      %v2258 = vsel %vm1893, %v1817, 0
      %v2261 = vsel %vm1893, %v1818, 0
      %v2264 = vsel %vm1893, %v1819, 0
      %v2267 = vsel %vm1893, %v1820, 0
      %v2270 = vsel %vm1893, %v1821, 0
      %v2273 = vsel %vm1893, %v1822, 0
      %v2276 = vsel %vm1893, %v1823, 0
      %v2279 = vsel %vm1893, %v1824, 0
      %v2282 = vsel %vm1893, %v1825, 0
      %v2285 = vsel %vm1893, %v1826, 0
      %v2288 = vsel %vm1893, %v1827, 0
      %v2291 = vsel %vm1893, %v1828, 0
      %v2294 = vsel %vm1893, %v1829, 0
      %v2297 = vsel %vm1893, %v1830, 0
      %v2300 = vsel %vm1893, %v1831, 0
      %v2303 = vsel %vm1893, %v1832, 0
      %v2306 = vsel %vm1893, %v1833, 0
      %2308 = vmatprep.subr.mxu0 0.0
      %2309 = vmatpush1.msra.mxu0 %v2203
      %2310 = vmatprep.subr.mxu0 0.0
      %2311 = vmatpush1.msra.mxu0 %v2204
      %2312 = vmatprep.subr.mxu0 0.0
      %2313 = vmatpush1.msra.mxu0 %v2205
      %2314 = vmatprep.subr.mxu0 0.0
      %2315 = vmatpush1.msra.mxu0 %v2206
      %2316 = vmatprep.subr.mxu0 0.0
      %2317 = vmatpush1.msra.mxu0 %v2207
      %2318 = vmatprep.subr.mxu0 0.0
      %2319 = vmatpush1.msra.mxu0 %v2208
      %2320 = vmatprep.subr.mxu0 0.0
      %2321 = vmatpush1.msra.mxu0 %v2209
      %2322 = vmatprep.subr.mxu0 0.0
      %2323 = vmatpush1.msra.mxu0 %v2210
      %2324 = vmatprep.subr.mxu0 0.0
      %2325 = vmatpush1.msra.mxu0 %v2211
      %2326 = vmatprep.subr.mxu0 0.0
      %2327 = vmatpush1.msra.mxu0 0.0
      %2328 = vmatprep.subr.mxu0 0.0
      %2329 = vmatpush1.msra.mxu0 0.0
      %2330 = vmatprep.subr.mxu0 0.0
      %2331 = vmatpush1.msra.mxu0 0.0
      %2332 = vmatprep.subr.mxu0 0.0
      %2333 = vmatpush1.msra.mxu0 0.0
      %2334 = vmatprep.subr.mxu0 0.0
      %2335 = vmatpush1.msra.mxu0 0.0
      %2336 = vmatprep.subr.mxu0 0.0
      %2337 = vmatpush1.msra.mxu0 0.0
      %2338 = vmatprep.subr.mxu0 0.0
      %2339 = vmatpush1.msra.mxu0 0.0
      %2340 = vmatprep.subr.mxu0 0.0
      %2341 = vmatpush1.msra.mxu0 0.0
      %2342 = vmatprep.subr.mxu0 0.0
      %2343 = vmatpush1.msra.mxu0 0.0
      %2344 = vmatprep.subr.mxu0 0.0
      %2345 = vmatpush1.msra.mxu0 0.0
      %2346 = vmatprep.subr.mxu0 0.0
      %2347 = vmatpush1.msra.mxu0 0.0
      %2348 = vmatprep.subr.mxu0 0.0
      %2349 = vmatpush1.msra.mxu0 0.0
      %2350 = vmatprep.subr.mxu0 0.0
      %2351 = vmatpush1.msra.mxu0 0.0
      %2352 = vmatprep.subr.mxu0 0.0
      %2353 = vmatpush1.msra.mxu0 0.0
      %2354 = vmatprep.subr.mxu0 0.0
      %2355 = vmatpush1.msra.mxu0 0.0
      %2356 = vmatprep.subr.mxu0 0.0
      %2357 = vmatpush1.msra.mxu0 0.0
      %2358 = vmatprep.subr.mxu0 0.0
      %2359 = vmatpush1.msra.mxu0 0.0
      %2360 = vmatprep.subr.mxu0 0.0
      %2361 = vmatpush1.msra.mxu0 0.0
      %2362 = vmatprep.subr.mxu0 0.0
      %2363 = vmatpush1.msra.mxu0 0.0
      %2364 = vmatprep.subr.mxu0 0.0
      %2365 = vmatpush1.msra.mxu0 0.0
      %2366 = vmatprep.subr.mxu0 0.0
      %2367 = vmatpush1.msra.mxu0 0.0
      %2368 = vmatprep.subr.mxu0 0.0
      %2369 = vmatpush1.msra.mxu0 0.0
      %2370 = vmatprep.subr.mxu0 0.0
      %2371 = vmatpush1.msra.mxu0 0.0
      %2372 = vmatprep.mubr.f32.mxu0 0.0
      %2373 = vmatmul.mubr.f32.gmra.mrb[0].mxu0 %v2213
      %v2374 = vpop.f32.mrb[0].mxu0
      %v2375 = vadd.f32 0.0, %v2374
      %v2376 = vpop.f32.mrb[0].mxu0
      %2377 = vmatprep.mubr.f32.mxu0 0.0
      %2378 = vmatmul.mubr.f32.gmra.mrb[0].mxu0 %v2216
      %v2379 = vpop.f32.mrb[0].mxu0
      %v2380 = vadd.f32 0.0, %v2379
      %v2381 = vpop.f32.mrb[0].mxu0
      %2382 = vmatprep.mubr.f32.mxu0 0.0
      %2383 = vmatmul.mubr.f32.gmra.mrb[0].mxu0 %v2219
      %v2384 = vpop.f32.mrb[0].mxu0
      %v2385 = vadd.f32 0.0, %v2384
      %v2386 = vpop.f32.mrb[0].mxu0
      %2387 = vmatprep.mubr.f32.mxu0 0.0
      %2388 = vmatmul.mubr.f32.gmra.mrb[0].mxu0 %v2222
      %v2389 = vpop.f32.mrb[0].mxu0
      %v2390 = vadd.f32 0.0, %v2389
      %v2391 = vpop.f32.mrb[0].mxu0
      %2392 = vmatprep.mubr.f32.mxu0 0.0
      %2393 = vmatmul.mubr.f32.gmra.mrb[0].mxu0 %v2225
      %v2394 = vpop.f32.mrb[0].mxu0
      %v2395 = vadd.f32 0.0, %v2394
      %v2396 = vpop.f32.mrb[0].mxu0
      %2397 = vmatprep.mubr.f32.mxu0 0.0
      %2398 = vmatmul.mubr.f32.gmra.mrb[0].mxu0 %v2228
      %v2399 = vpop.f32.mrb[0].mxu0
      %v2400 = vadd.f32 0.0, %v2399
      %v2401 = vpop.f32.mrb[0].mxu0
      %2402 = vmatprep.mubr.f32.mxu0 0.0
      %2403 = vmatmul.mubr.f32.gmra.mrb[0].mxu0 %v2231
      %v2404 = vpop.f32.mrb[0].mxu0
      %v2405 = vadd.f32 0.0, %v2404
      %v2406 = vpop.f32.mrb[0].mxu0
      %2407 = vmatprep.mubr.f32.mxu0 0.0
      %2408 = vmatmul.mubr.f32.gmra.mrb[0].mxu0 %v2234
      %v2409 = vpop.f32.mrb[0].mxu0
      %v2410 = vadd.f32 0.0, %v2409
      %v2411 = vpop.f32.mrb[0].mxu0
      %2412 = vmatprep.mubr.f32.mxu0 0.0
      %2413 = vmatmul.mubr.f32.gmra.mrb[0].mxu0 %v2237
      %v2414 = vpop.f32.mrb[0].mxu0
      %v2415 = vadd.f32 0.0, %v2414
      %v2416 = vpop.f32.mrb[0].mxu0
      %2417 = vmatprep.mubr.f32.mxu0 0.0
      %2418 = vmatmul.mubr.f32.gmra.mrb[0].mxu0 %v2240
      %v2419 = vpop.f32.mrb[0].mxu0
      %v2420 = vadd.f32 0.0, %v2419
      %v2421 = vpop.f32.mrb[0].mxu0
      %2422 = vmatprep.mubr.f32.mxu0 0.0
      %2423 = vmatmul.mubr.f32.gmra.mrb[0].mxu0 %v2243
      %v2424 = vpop.f32.mrb[0].mxu0
      %v2425 = vadd.f32 0.0, %v2424
      %v2426 = vpop.f32.mrb[0].mxu0
      %2427 = vmatprep.mubr.f32.mxu0 0.0
      %2428 = vmatmul.mubr.f32.gmra.mrb[0].mxu0 %v2246
      %v2429 = vpop.f32.mrb[0].mxu0
      %v2430 = vadd.f32 0.0, %v2429
      %v2431 = vpop.f32.mrb[0].mxu0
      %2432 = vmatprep.mubr.f32.mxu0 0.0
      %2433 = vmatmul.mubr.f32.gmra.mrb[0].mxu0 %v2249
      %v2434 = vpop.f32.mrb[0].mxu0
      %v2435 = vadd.f32 0.0, %v2434
      %v2436 = vpop.f32.mrb[0].mxu0
      %2437 = vmatprep.mubr.f32.mxu0 0.0
      %2438 = vmatmul.mubr.f32.gmra.mrb[0].mxu0 %v2252
      %v2439 = vpop.f32.mrb[0].mxu0
      %v2440 = vadd.f32 0.0, %v2439
      %v2441 = vpop.f32.mrb[0].mxu0
      %2442 = vmatprep.mubr.f32.mxu0 0.0
      %2443 = vmatmul.mubr.f32.gmra.mrb[0].mxu0 %v2255
      %v2444 = vpop.f32.mrb[0].mxu0
      %v2445 = vadd.f32 0.0, %v2444
      %v2446 = vpop.f32.mrb[0].mxu0
      %2447 = vmatprep.mubr.f32.mxu0 0.0
      %2448 = vmatmul.mubr.f32.gmra.mrb[0].mxu0 %v2258
      %v2449 = vpop.f32.mrb[0].mxu0
      %v2450 = vadd.f32 0.0, %v2449
      %v2451 = vpop.f32.mrb[0].mxu0
      %2452 = vmatprep.mubr.f32.mxu0 0.0
      %2453 = vmatmul.mubr.f32.gmra.mrb[0].mxu0 %v2261
      %v2454 = vpop.f32.mrb[0].mxu0
      %v2455 = vadd.f32 0.0, %v2454
      %v2456 = vpop.f32.mrb[0].mxu0
      %2457 = vmatprep.mubr.f32.mxu0 0.0
      %2458 = vmatmul.mubr.f32.gmra.mrb[0].mxu0 %v2264
      %v2459 = vpop.f32.mrb[0].mxu0
      %v2460 = vadd.f32 0.0, %v2459
      %v2461 = vpop.f32.mrb[0].mxu0
      %2462 = vmatprep.mubr.f32.mxu0 0.0
      %2463 = vmatmul.mubr.f32.gmra.mrb[0].mxu0 %v2267
      %v2464 = vpop.f32.mrb[0].mxu0
      %v2465 = vadd.f32 0.0, %v2464
      %v2466 = vpop.f32.mrb[0].mxu0
      %2467 = vmatprep.mubr.f32.mxu0 0.0
      %2468 = vmatmul.mubr.f32.gmra.mrb[0].mxu0 %v2270
      %v2469 = vpop.f32.mrb[0].mxu0
      %v2470 = vadd.f32 0.0, %v2469
      %v2471 = vpop.f32.mrb[0].mxu0
      %2472 = vmatprep.mubr.f32.mxu0 0.0
      %2473 = vmatmul.mubr.f32.gmra.mrb[0].mxu0 %v2273
      %v2474 = vpop.f32.mrb[0].mxu0
      %v2475 = vadd.f32 0.0, %v2474
      %v2476 = vpop.f32.mrb[0].mxu0
      %2477 = vmatprep.mubr.f32.mxu0 0.0
      %2478 = vmatmul.mubr.f32.gmra.mrb[0].mxu0 %v2276
      %v2479 = vpop.f32.mrb[0].mxu0
      %v2480 = vadd.f32 0.0, %v2479
      %v2481 = vpop.f32.mrb[0].mxu0
      %2482 = vmatprep.mubr.f32.mxu0 0.0
      %2483 = vmatmul.mubr.f32.gmra.mrb[0].mxu0 %v2279
      %v2484 = vpop.f32.mrb[0].mxu0
      %v2485 = vadd.f32 0.0, %v2484
      %v2486 = vpop.f32.mrb[0].mxu0
      %2487 = vmatprep.mubr.f32.mxu0 0.0
      %2488 = vmatmul.mubr.f32.gmra.mrb[0].mxu0 %v2282
      %v2489 = vpop.f32.mrb[0].mxu0
      %v2490 = vadd.f32 0.0, %v2489
      %v2491 = vpop.f32.mrb[0].mxu0
      %2492 = vmatprep.mubr.f32.mxu0 0.0
      %2493 = vmatmul.mubr.f32.gmra.mrb[0].mxu0 %v2285
      %v2494 = vpop.f32.mrb[0].mxu0
      %v2495 = vadd.f32 0.0, %v2494
      %v2496 = vpop.f32.mrb[0].mxu0
      %2497 = vmatprep.mubr.f32.mxu0 0.0
      %2498 = vmatmul.mubr.f32.gmra.mrb[0].mxu0 %v2288
      %v2499 = vpop.f32.mrb[0].mxu0
      %v2500 = vadd.f32 0.0, %v2499
      %v2501 = vpop.f32.mrb[0].mxu0
      %2502 = vmatprep.mubr.f32.mxu0 0.0
      %2503 = vmatmul.mubr.f32.gmra.mrb[0].mxu0 %v2291
      %v2504 = vpop.f32.mrb[0].mxu0
      %v2505 = vadd.f32 0.0, %v2504
      %v2506 = vpop.f32.mrb[0].mxu0
      %2507 = vmatprep.mubr.f32.mxu0 0.0
      %2508 = vmatmul.mubr.f32.gmra.mrb[0].mxu0 %v2294
      %v2509 = vpop.f32.mrb[0].mxu0
      %v2510 = vadd.f32 0.0, %v2509
      %v2511 = vpop.f32.mrb[0].mxu0
      %2512 = vmatprep.mubr.f32.mxu0 0.0
      %2513 = vmatmul.mubr.f32.gmra.mrb[0].mxu0 %v2297
      %v2514 = vpop.f32.mrb[0].mxu0
      %v2515 = vadd.f32 0.0, %v2514
      %v2516 = vpop.f32.mrb[0].mxu0
      %2517 = vmatprep.mubr.f32.mxu0 0.0
      %2518 = vmatmul.mubr.f32.gmra.mrb[0].mxu0 %v2300
      %v2519 = vpop.f32.mrb[0].mxu0
      %v2520 = vadd.f32 0.0, %v2519
      %v2521 = vpop.f32.mrb[0].mxu0
      %2522 = vmatprep.mubr.f32.mxu0 0.0
      %2523 = vmatmul.mubr.f32.gmra.mrb[0].mxu0 %v2303
      %v2524 = vpop.f32.mrb[0].mxu0
      %v2525 = vadd.f32 0.0, %v2524
      %v2526 = vpop.f32.mrb[0].mxu0
      %2527 = vmatprep.mubr.f32.mxu0 0.0
      %2528 = vmatmul.mubr.f32.gmra.mrb[0].mxu0 %v2306
      %v2529 = vpop.f32.mrb[0].mxu0
      %v2530 = vadd.f32 0.0, %v2529
      %v2531 = vpop.f32.mrb[0].mxu0
      %2532 = vdwg.mxu0
      %v2533 = vand.u32 2147483647, %v2375
      %v2534 = vand.u32 2147483647, %v2380
      %v2535 = vand.u32 2147483647, %v2385
      %v2536 = vand.u32 2147483647, %v2390
      %v2537 = vand.u32 2147483647, %v2395
      %v2538 = vand.u32 2147483647, %v2400
      %v2539 = vand.u32 2147483647, %v2405
      %v2540 = vand.u32 2147483647, %v2410
      %v2541 = vand.u32 2147483647, %v2415
      %v2542 = vand.u32 2147483647, %v2420
      %v2543 = vand.u32 2147483647, %v2425
      %v2544 = vand.u32 2147483647, %v2430
      %v2545 = vand.u32 2147483647, %v2435
      %v2546 = vand.u32 2147483647, %v2440
      %v2547 = vand.u32 2147483647, %v2445
      %v2548 = vand.u32 2147483647, %v2450
      %v2549 = vand.u32 2147483647, %v2455
      %v2550 = vand.u32 2147483647, %v2460
      %v2551 = vand.u32 2147483647, %v2465
      %v2552 = vand.u32 2147483647, %v2470
      %v2553 = vand.u32 2147483647, %v2475
      %v2554 = vand.u32 2147483647, %v2480
      %v2555 = vand.u32 2147483647, %v2485
      %v2556 = vand.u32 2147483647, %v2490
      %v2557 = vand.u32 2147483647, %v2495
      %v2558 = vand.u32 2147483647, %v2500
      %v2559 = vand.u32 2147483647, %v2505
      %v2560 = vand.u32 2147483647, %v2510
      %v2561 = vand.u32 2147483647, %v2515
      %v2562 = vand.u32 2147483647, %v2520
      %v2563 = vand.u32 2147483647, %v2525
      %v2564 = vand.u32 2147483647, %v2530
      %2597 = vrot.lane.b32.xlu0 %v2533, 120
      %v2598 = vpop.permute.xlu0 %2597
      %2599 = vrot.lane.b32.xlu0 %v2534, 120
      %v2600 = vpop.permute.xlu0 %2599
      %2601 = vrot.lane.b32.xlu0 %v2535, 120
      %v2602 = vpop.permute.xlu0 %2601
      %2603 = vrot.lane.b32.xlu0 %v2536, 120
      %v2604 = vpop.permute.xlu0 %2603
      %2605 = vrot.lane.b32.xlu0 %v2537, 120
      %v2606 = vpop.permute.xlu0 %2605
      %2607 = vrot.lane.b32.xlu0 %v2538, 120
      %v2608 = vpop.permute.xlu0 %2607
      %2609 = vrot.lane.b32.xlu0 %v2539, 120
      %v2610 = vpop.permute.xlu0 %2609
      %2611 = vrot.lane.b32.xlu0 %v2540, 120
      %v2612 = vpop.permute.xlu0 %2611
      %2613 = vrot.lane.b32.xlu0 %v2541, 120
      %v2614 = vpop.permute.xlu0 %2613
      %2615 = vrot.lane.b32.xlu0 %v2542, 120
      %v2616 = vpop.permute.xlu0 %2615
      %2617 = vrot.lane.b32.xlu0 %v2543, 120
      %v2618 = vpop.permute.xlu0 %2617
      %2619 = vrot.lane.b32.xlu0 %v2544, 120
      %v2620 = vpop.permute.xlu0 %2619
      %2621 = vrot.lane.b32.xlu0 %v2545, 120
      %v2622 = vpop.permute.xlu0 %2621
      %2623 = vrot.lane.b32.xlu0 %v2546, 120
      %v2624 = vpop.permute.xlu0 %2623
      %2625 = vrot.lane.b32.xlu0 %v2547, 120
      %v2626 = vpop.permute.xlu0 %2625
      %2627 = vrot.lane.b32.xlu0 %v2548, 120
      %v2628 = vpop.permute.xlu0 %2627
      %2629 = vrot.lane.b32.xlu0 %v2549, 120
      %v2630 = vpop.permute.xlu0 %2629
      %2631 = vrot.lane.b32.xlu0 %v2550, 120
      %v2632 = vpop.permute.xlu0 %2631
      %2633 = vrot.lane.b32.xlu0 %v2551, 120
      %v2634 = vpop.permute.xlu0 %2633
      %2635 = vrot.lane.b32.xlu0 %v2552, 120
      %v2636 = vpop.permute.xlu0 %2635
      %2637 = vrot.lane.b32.xlu0 %v2553, 120
      %v2638 = vpop.permute.xlu0 %2637
      %2639 = vrot.lane.b32.xlu0 %v2554, 120
      %v2640 = vpop.permute.xlu0 %2639
      %2641 = vrot.lane.b32.xlu0 %v2555, 120
      %v2642 = vpop.permute.xlu0 %2641
      %2643 = vrot.lane.b32.xlu0 %v2556, 120
      %v2644 = vpop.permute.xlu0 %2643
      %2645 = vrot.lane.b32.xlu0 %v2557, 120
      %v2646 = vpop.permute.xlu0 %2645
      %2647 = vrot.lane.b32.xlu0 %v2558, 120
      %v2648 = vpop.permute.xlu0 %2647
      %2649 = vrot.lane.b32.xlu0 %v2559, 120
      %v2650 = vpop.permute.xlu0 %2649
      %2651 = vrot.lane.b32.xlu0 %v2560, 120
      %v2652 = vpop.permute.xlu0 %2651
      %2653 = vrot.lane.b32.xlu0 %v2561, 120
      %v2654 = vpop.permute.xlu0 %2653
      %2655 = vrot.lane.b32.xlu0 %v2562, 120
      %v2656 = vpop.permute.xlu0 %2655
      %2657 = vrot.lane.b32.xlu0 %v2563, 120
      %v2658 = vpop.permute.xlu0 %2657
      %2659 = vrot.lane.b32.xlu0 %v2564, 120
      %v2660 = vpop.permute.xlu0 %2659
      %v2693 = vadd.f32 %v2533, %v2598
      %v2694 = vadd.f32 %v2534, %v2600
      %v2695 = vadd.f32 %v2535, %v2602
      %v2696 = vadd.f32 %v2536, %v2604
      %v2697 = vadd.f32 %v2537, %v2606
      %v2698 = vadd.f32 %v2538, %v2608
      %v2699 = vadd.f32 %v2539, %v2610
      %v2700 = vadd.f32 %v2540, %v2612
      %v2701 = vadd.f32 %v2541, %v2614
      %v2702 = vadd.f32 %v2542, %v2616
      %v2703 = vadd.f32 %v2543, %v2618
      %v2704 = vadd.f32 %v2544, %v2620
      %v2705 = vadd.f32 %v2545, %v2622
      %v2706 = vadd.f32 %v2546, %v2624
      %v2707 = vadd.f32 %v2547, %v2626
      %v2708 = vadd.f32 %v2548, %v2628
      %v2709 = vadd.f32 %v2549, %v2630
      %v2710 = vadd.f32 %v2550, %v2632
      %v2711 = vadd.f32 %v2551, %v2634
      %v2712 = vadd.f32 %v2552, %v2636
      %v2713 = vadd.f32 %v2553, %v2638
      %v2714 = vadd.f32 %v2554, %v2640
      %v2715 = vadd.f32 %v2555, %v2642
      %v2716 = vadd.f32 %v2556, %v2644
      %v2717 = vadd.f32 %v2557, %v2646
      %v2718 = vadd.f32 %v2558, %v2648
      %v2719 = vadd.f32 %v2559, %v2650
      %v2720 = vadd.f32 %v2560, %v2652
      %v2721 = vadd.f32 %v2561, %v2654
      %v2722 = vadd.f32 %v2562, %v2656
      %v2723 = vadd.f32 %v2563, %v2658
      %v2724 = vadd.f32 %v2564, %v2660
      %2725 = vst.msk [vmem:[#allocation3] sm:$0xff] %vm307, 0.0
      %2726 = vst.msk [vmem:[#allocation3 + $0x8] sm:$0xff] %vm307, 0.0
      %2727 = vst.msk [vmem:[#allocation3 + $0x10] sm:$0xff] %vm307, 0.0
      %2728 = vst.msk [vmem:[#allocation3 + $0x18] sm:$0xff] %vm307, 0.0
      %2729 = vst.msk [vmem:[#allocation3 + $0x20] sm:$0xff] %vm307, 0.0
      %2730 = vst.msk [vmem:[#allocation3 + $0x28] sm:$0xff] %vm307, 0.0
      %2731 = vst.msk [vmem:[#allocation3 + $0x30] sm:$0xff] %vm307, 0.0
      %2732 = vst.msk [vmem:[#allocation3 + $0x38] sm:$0xff] %vm307, 0.0
      %2733 = vst.msk [vmem:[#allocation3 + $0x40] sm:$0xff] %vm307, 0.0
      %2734 = vst.msk [vmem:[#allocation3 + $0x48] sm:$0xff] %vm307, 0.0
      %2735 = vst.msk [vmem:[#allocation3 + $0x50] sm:$0xff] %vm307, 0.0
      %2736 = vst.msk [vmem:[#allocation3 + $0x58] sm:$0xff] %vm307, 0.0
      %2737 = vst.msk [vmem:[#allocation3 + $0x60] sm:$0xff] %vm307, 0.0
      %2738 = vst.msk [vmem:[#allocation3 + $0x68] sm:$0xff] %vm307, 0.0
      %2739 = vst.msk [vmem:[#allocation3 + $0x70] sm:$0xff] %vm307, 0.0
      %2740 = vst.msk [vmem:[#allocation3 + $0x78] sm:$0xff] %vm307, 0.0
      %2741 = vst.msk [vmem:[#allocation3 + $0x80] sm:$0xff] %vm307, 0.0
      %2742 = vst.msk [vmem:[#allocation3 + $0x88] sm:$0xff] %vm307, 0.0
      %2743 = vst.msk [vmem:[#allocation3 + $0x90] sm:$0xff] %vm307, 0.0
      %2744 = vst.msk [vmem:[#allocation3 + $0x98] sm:$0xff] %vm307, 0.0
      %2745 = vst.msk [vmem:[#allocation3 + $0xa0] sm:$0xff] %vm307, 0.0
      %2746 = vst.msk [vmem:[#allocation3 + $0xa8] sm:$0xff] %vm307, 0.0
      %2747 = vst.msk [vmem:[#allocation3 + $0xb0] sm:$0xff] %vm307, 0.0
      %2748 = vst.msk [vmem:[#allocation3 + $0xb8] sm:$0xff] %vm307, 0.0
      %2749 = vst.msk [vmem:[#allocation3 + $0xc0] sm:$0xff] %vm307, 0.0
      %2750 = vst.msk [vmem:[#allocation3 + $0xc8] sm:$0xff] %vm307, 0.0
      %2751 = vst.msk [vmem:[#allocation3 + $0xd0] sm:$0xff] %vm307, 0.0
      %2752 = vst.msk [vmem:[#allocation3 + $0xd8] sm:$0xff] %vm307, 0.0
      %2753 = vst.msk [vmem:[#allocation3 + $0xe0] sm:$0xff] %vm307, 0.0
      %2754 = vst.msk [vmem:[#allocation3 + $0xe8] sm:$0xff] %vm307, 0.0
      %2755 = vst.msk [vmem:[#allocation3 + $0xf0] sm:$0xff] %vm307, 0.0
      %2756 = vst.msk [vmem:[#allocation3 + $0xf8] sm:$0xff] %vm307, 0.0
      %2757 = vst.msk [vmem:[#allocation3 + $0x100] sm:$0xff] %vm307, 0.0
      %2758 = vst.msk [vmem:[#allocation3 + $0x108] sm:$0xff] %vm307, 0.0
      %2759 = vst.msk [vmem:[#allocation3 + $0x110] sm:$0xff] %vm307, 0.0
      %2760 = vst.msk [vmem:[#allocation3 + $0x118] sm:$0xff] %vm307, 0.0
      %2761 = vst.msk [vmem:[#allocation3 + $0x120] sm:$0xff] %vm307, 0.0
      %2762 = vst.msk [vmem:[#allocation3 + $0x128] sm:$0xff] %vm307, 0.0
      %2763 = vst.msk [vmem:[#allocation3 + $0x130] sm:$0xff] %vm307, 0.0
      %2764 = vst.msk [vmem:[#allocation3 + $0x138] sm:$0xff] %vm307, 0.0
      %2765 = vst.msk [vmem:[#allocation3 + $0x140] sm:$0xff] %vm307, 0.0
      %2766 = vst.msk [vmem:[#allocation3 + $0x148] sm:$0xff] %vm307, 0.0
      %2767 = vst.msk [vmem:[#allocation3 + $0x150] sm:$0xff] %vm307, 0.0
      %2768 = vst.msk [vmem:[#allocation3 + $0x158] sm:$0xff] %vm307, 0.0
      %2769 = vst.msk [vmem:[#allocation3 + $0x160] sm:$0xff] %vm307, 0.0
      %2770 = vst.msk [vmem:[#allocation3 + $0x168] sm:$0xff] %vm307, 0.0
      %2771 = vst.msk [vmem:[#allocation3 + $0x170] sm:$0xff] %vm307, 0.0
      %2772 = vst.msk [vmem:[#allocation3 + $0x178] sm:$0xff] %vm307, 0.0
      %2773 = vst.msk [vmem:[#allocation3 + $0x180] sm:$0xff] %vm307, 0.0
      %2774 = vst.msk [vmem:[#allocation3 + $0x188] sm:$0xff] %vm307, 0.0
      %2775 = vst.msk [vmem:[#allocation3 + $0x190] sm:$0xff] %vm307, 0.0
      %2776 = vst.msk [vmem:[#allocation3 + $0x198] sm:$0xff] %vm307, 0.0
      %2777 = vst.msk [vmem:[#allocation3 + $0x1a0] sm:$0xff] %vm307, 0.0
      %2778 = vst.msk [vmem:[#allocation3 + $0x1a8] sm:$0xff] %vm307, 0.0
      %2779 = vst.msk [vmem:[#allocation3 + $0x1b0] sm:$0xff] %vm307, 0.0
      %2780 = vst.msk [vmem:[#allocation3 + $0x1b8] sm:$0xff] %vm307, 0.0
      %2781 = vst.msk [vmem:[#allocation3 + $0x1c0] sm:$0xff] %vm307, 0.0
      %2782 = vst.msk [vmem:[#allocation3 + $0x1c8] sm:$0xff] %vm307, 0.0
      %2783 = vst.msk [vmem:[#allocation3 + $0x1d0] sm:$0xff] %vm307, 0.0
      %2784 = vst.msk [vmem:[#allocation3 + $0x1d8] sm:$0xff] %vm307, 0.0
      %2785 = vst.msk [vmem:[#allocation3 + $0x1e0] sm:$0xff] %vm307, 0.0
      %2786 = vst.msk [vmem:[#allocation3 + $0x1e8] sm:$0xff] %vm307, 0.0
      %2787 = vst.msk [vmem:[#allocation3 + $0x1f0] sm:$0xff] %vm307, 0.0
      %2788 = vst.msk [vmem:[#allocation3 + $0x1f8] sm:$0xff] %vm307, 0.0
      %2789 = vst.msk [vmem:[#allocation3 + $0x200] sm:$0xff] %vm307, 0.0
      %2790 = vst.msk [vmem:[#allocation3 + $0x208] sm:$0xff] %vm307, 0.0
      %2791 = vst.msk [vmem:[#allocation3 + $0x210] sm:$0xff] %vm307, 0.0
      %2792 = vst.msk [vmem:[#allocation3 + $0x218] sm:$0xff] %vm307, 0.0
      %2793 = vst.msk [vmem:[#allocation3 + $0x220] sm:$0xff] %vm307, 0.0
      %2794 = vst.msk [vmem:[#allocation3 + $0x228] sm:$0xff] %vm307, 0.0
      %2795 = vst.msk [vmem:[#allocation3 + $0x230] sm:$0xff] %vm307, 0.0
      %2796 = vst.msk [vmem:[#allocation3 + $0x238] sm:$0xff] %vm307, 0.0
      %s2797 = scalar_lea.vmem [#allocation3], 32
      %2798 = vst.msk [vmem:[%s2797 + $0x8] sm:$0xff] %vm307, %v2171
      %2799 = vst.msk [vmem:[%s2797 + $0x10] sm:$0xff] %vm307, %v2172
      %2800 = vst.msk [vmem:[%s2797 + $0x28] sm:$0xff] %vm307, %v2173
      %2801 = vst.msk [vmem:[%s2797 + $0x30] sm:$0xff] %vm307, %v2174
      %2802 = vst.msk [vmem:[%s2797 + $0x48] sm:$0xff] %vm307, %v2175
      %2803 = vst.msk [vmem:[%s2797 + $0x50] sm:$0xff] %vm307, %v2176
      %2804 = vst.msk [vmem:[%s2797 + $0x68] sm:$0xff] %vm307, %v2177
      %2805 = vst.msk [vmem:[%s2797 + $0x70] sm:$0xff] %vm307, %v2178
      %2806 = vst.msk [vmem:[%s2797 + $0x88] sm:$0xff] %vm307, %v2179
      %2807 = vst.msk [vmem:[%s2797 + $0x90] sm:$0xff] %vm307, %v2180
      %2808 = vst.msk [vmem:[%s2797 + $0xa8] sm:$0xff] %vm307, %v2181
      %2809 = vst.msk [vmem:[%s2797 + $0xb0] sm:$0xff] %vm307, %v2182
      %2810 = vst.msk [vmem:[%s2797 + $0xc8] sm:$0xff] %vm307, %v2183
      %2811 = vst.msk [vmem:[%s2797 + $0xd0] sm:$0xff] %vm307, %v2184
      %2812 = vst.msk [vmem:[%s2797 + $0xe8] sm:$0xff] %vm307, %v2185
      %2813 = vst.msk [vmem:[%s2797 + $0xf0] sm:$0xff] %vm307, %v2186
      %2814 = vst.msk [vmem:[%s2797 + $0x108] sm:$0xff] %vm307, %v2187
      %2815 = vst.msk [vmem:[%s2797 + $0x110] sm:$0xff] %vm307, %v2188
      %2816 = vst.msk [vmem:[%s2797 + $0x128] sm:$0xff] %vm307, %v2189
      %2817 = vst.msk [vmem:[%s2797 + $0x130] sm:$0xff] %vm307, %v2190
      %2818 = vst.msk [vmem:[%s2797 + $0x148] sm:$0xff] %vm307, %v2191
      %2819 = vst.msk [vmem:[%s2797 + $0x150] sm:$0xff] %vm307, %v2192
      %2820 = vst.msk [vmem:[%s2797 + $0x168] sm:$0xff] %vm307, %v2193
      %2821 = vst.msk [vmem:[%s2797 + $0x170] sm:$0xff] %vm307, %v2194
      %2822 = vst.msk [vmem:[%s2797 + $0x188] sm:$0xff] %vm307, %v2195
      %2823 = vst.msk [vmem:[%s2797 + $0x190] sm:$0xff] %vm307, %v2196
      %2824 = vst.msk [vmem:[%s2797 + $0x1a8] sm:$0xff] %vm307, %v2197
      %2825 = vst.msk [vmem:[%s2797 + $0x1b0] sm:$0xff] %vm307, %v2198
      %2826 = vst.msk [vmem:[%s2797 + $0x1c8] sm:$0xff] %vm307, %v2199
      %2827 = vst.msk [vmem:[%s2797 + $0x1d0] sm:$0xff] %vm307, %v2200
      %2828 = vst.msk [vmem:[%s2797 + $0x1e8] sm:$0xff] %vm307, %v2201
      %2829 = vst.msk [vmem:[%s2797 + $0x1f0] sm:$0xff] %vm307, %v2202
      %v2830 = vld [vmem:[#allocation3] sm:$0xff]
      %v2831 = vld [vmem:[#allocation3 + $0x8] sm:$0xff]
      %v2832 = vld [vmem:[#allocation3 + $0x10] sm:$0xff]
      %v2833 = vld [vmem:[#allocation3 + $0x18] sm:$0xff]
      %v2834 = vld [vmem:[#allocation3 + $0x20] sm:$0xff]
      %v2835 = vld [vmem:[#allocation3 + $0x28] sm:$0xff]
      %v2836 = vld [vmem:[#allocation3 + $0x30] sm:$0xff]
      %v2837 = vld [vmem:[#allocation3 + $0x38] sm:$0xff]
      %v2838 = vld [vmem:[#allocation3 + $0x40] sm:$0xff]
      %v2839 = vld [vmem:[#allocation3 + $0x48] sm:$0xff]
      %v2840 = vld [vmem:[#allocation3 + $0x50] sm:$0xff]
      %v2841 = vld [vmem:[#allocation3 + $0x58] sm:$0xff]
      %v2842 = vld [vmem:[#allocation3 + $0x60] sm:$0xff]
      %v2843 = vld [vmem:[#allocation3 + $0x68] sm:$0xff]
      %v2844 = vld [vmem:[#allocation3 + $0x70] sm:$0xff]
      %v2845 = vld [vmem:[#allocation3 + $0x78] sm:$0xff]
      %v2846 = vld [vmem:[#allocation3 + $0x80] sm:$0xff]
      %v2847 = vld [vmem:[#allocation3 + $0x88] sm:$0xff]
      %v2848 = vld [vmem:[#allocation3 + $0x90] sm:$0xff]
      %v2849 = vld [vmem:[#allocation3 + $0x98] sm:$0xff]
      %v2850 = vld [vmem:[#allocation3 + $0xa0] sm:$0xff]
      %v2851 = vld [vmem:[#allocation3 + $0xa8] sm:$0xff]
      %v2852 = vld [vmem:[#allocation3 + $0xb0] sm:$0xff]
      %v2853 = vld [vmem:[#allocation3 + $0xb8] sm:$0xff]
      %v2854 = vld [vmem:[#allocation3 + $0xc0] sm:$0xff]
      %v2855 = vld [vmem:[#allocation3 + $0xc8] sm:$0xff]
      %v2856 = vld [vmem:[#allocation3 + $0xd0] sm:$0xff]
      %v2857 = vld [vmem:[#allocation3 + $0xd8] sm:$0xff]
      %v2858 = vld [vmem:[#allocation3 + $0xe0] sm:$0xff]
      %v2859 = vld [vmem:[#allocation3 + $0xe8] sm:$0xff]
      %v2860 = vld [vmem:[#allocation3 + $0xf0] sm:$0xff]
      %v2861 = vld [vmem:[#allocation3 + $0xf8] sm:$0xff]
      %v2862 = vld [vmem:[#allocation3 + $0x100] sm:$0xff]
      %v2863 = vld [vmem:[#allocation3 + $0x108] sm:$0xff]
      %v2864 = vld [vmem:[#allocation3 + $0x110] sm:$0xff]
      %v2865 = vld [vmem:[#allocation3 + $0x118] sm:$0xff]
      %v2866 = vld [vmem:[#allocation3 + $0x120] sm:$0xff]
      %v2867 = vld [vmem:[#allocation3 + $0x128] sm:$0xff]
      %v2868 = vld [vmem:[#allocation3 + $0x130] sm:$0xff]
      %v2869 = vld [vmem:[#allocation3 + $0x138] sm:$0xff]
      %v2870 = vld [vmem:[#allocation3 + $0x140] sm:$0xff]
      %v2871 = vld [vmem:[#allocation3 + $0x148] sm:$0xff]
      %v2872 = vld [vmem:[#allocation3 + $0x150] sm:$0xff]
      %v2873 = vld [vmem:[#allocation3 + $0x158] sm:$0xff]
      %v2874 = vld [vmem:[#allocation3 + $0x160] sm:$0xff]
      %v2875 = vld [vmem:[#allocation3 + $0x168] sm:$0xff]
      %v2876 = vld [vmem:[#allocation3 + $0x170] sm:$0xff]
      %v2877 = vld [vmem:[#allocation3 + $0x178] sm:$0xff]
      %v2878 = vld [vmem:[#allocation3 + $0x180] sm:$0xff]
      %v2879 = vld [vmem:[#allocation3 + $0x188] sm:$0xff]
      %v2880 = vld [vmem:[#allocation3 + $0x190] sm:$0xff]
      %v2881 = vld [vmem:[#allocation3 + $0x198] sm:$0xff]
      %v2882 = vld [vmem:[#allocation3 + $0x1a0] sm:$0xff]
      %v2883 = vld [vmem:[#allocation3 + $0x1a8] sm:$0xff]
      %v2884 = vld [vmem:[#allocation3 + $0x1b0] sm:$0xff]
      %v2885 = vld [vmem:[#allocation3 + $0x1b8] sm:$0xff]
      %v2886 = vld [vmem:[#allocation3 + $0x1c0] sm:$0xff]
      %v2887 = vld [vmem:[#allocation3 + $0x1c8] sm:$0xff]
      %v2888 = vld [vmem:[#allocation3 + $0x1d0] sm:$0xff]
      %v2889 = vld [vmem:[#allocation3 + $0x1d8] sm:$0xff]
      %v2890 = vld [vmem:[#allocation3 + $0x1e0] sm:$0xff]
      %v2891 = vld [vmem:[#allocation3 + $0x1e8] sm:$0xff]
      %v2892 = vld [vmem:[#allocation3 + $0x1f0] sm:$0xff]
      %v2893 = vld [vmem:[#allocation3 + $0x1f8] sm:$0xff]
      %v2894 = vld [vmem:[#allocation3 + $0x200] sm:$0xff]
      %v2895 = vld [vmem:[#allocation3 + $0x208] sm:$0xff]
      %v2896 = vld [vmem:[#allocation3 + $0x210] sm:$0xff]
      %v2897 = vld [vmem:[#allocation3 + $0x218] sm:$0xff]
      %v2898 = vld [vmem:[#allocation3 + $0x220] sm:$0xff]
      %v2899 = vld [vmem:[#allocation3 + $0x228] sm:$0xff]
      %v2900 = vld [vmem:[#allocation3 + $0x230] sm:$0xff]
      %v2901 = vld [vmem:[#allocation3 + $0x238] sm:$0xff]
      %v2950 = vrot.slane %v2830, 7
      %v2951 = vrot.slane %v2831, 7
      %v2952 = vsel %vm565, %v2950, %v2951
      %v2953 = vrot.slane %v2832, 7
      %v2954 = vsel %vm565, %v2951, %v2953
      %v2955 = vrot.slane %v2834, 7
      %v2956 = vrot.slane %v2835, 7
      %v2957 = vsel %vm565, %v2955, %v2956
      %v2958 = vrot.slane %v2836, 7
      %v2959 = vsel %vm565, %v2956, %v2958
      %v2960 = vrot.slane %v2838, 7
      %v2961 = vrot.slane %v2839, 7
      %v2962 = vsel %vm565, %v2960, %v2961
      %v2963 = vrot.slane %v2840, 7
      %v2964 = vsel %vm565, %v2961, %v2963
      %v2965 = vrot.slane %v2842, 7
      %v2966 = vrot.slane %v2843, 7
      %v2967 = vsel %vm565, %v2965, %v2966
      %v2968 = vrot.slane %v2844, 7
      %v2969 = vsel %vm565, %v2966, %v2968
      %v2970 = vrot.slane %v2846, 7
      %v2971 = vrot.slane %v2847, 7
      %v2972 = vsel %vm565, %v2970, %v2971
      %v2973 = vrot.slane %v2848, 7
      %v2974 = vsel %vm565, %v2971, %v2973
      %v2975 = vrot.slane %v2850, 7
      %v2976 = vrot.slane %v2851, 7
      %v2977 = vsel %vm565, %v2975, %v2976
      %v2978 = vrot.slane %v2852, 7
      %v2979 = vsel %vm565, %v2976, %v2978
      %v2980 = vrot.slane %v2854, 7
      %v2981 = vrot.slane %v2855, 7
      %v2982 = vsel %vm565, %v2980, %v2981
      %v2983 = vrot.slane %v2856, 7
      %v2984 = vsel %vm565, %v2981, %v2983
      %v2985 = vrot.slane %v2858, 7
      %v2986 = vrot.slane %v2859, 7
      %v2987 = vsel %vm565, %v2985, %v2986
      %v2988 = vrot.slane %v2860, 7
      %v2989 = vsel %vm565, %v2986, %v2988
      %v2990 = vrot.slane %v2862, 7
      %v2991 = vrot.slane %v2863, 7
      %v2992 = vsel %vm565, %v2990, %v2991
      %v2993 = vrot.slane %v2864, 7
      %v2994 = vsel %vm565, %v2991, %v2993
      %v2995 = vrot.slane %v2866, 7
      %v2996 = vrot.slane %v2867, 7
      %v2997 = vsel %vm565, %v2995, %v2996
      %v2998 = vrot.slane %v2868, 7
      %v2999 = vsel %vm565, %v2996, %v2998
      %v3000 = vrot.slane %v2870, 7
      %v3001 = vrot.slane %v2871, 7
      %v3002 = vsel %vm565, %v3000, %v3001
      %v3003 = vrot.slane %v2872, 7
      %v3004 = vsel %vm565, %v3001, %v3003
      %v3005 = vrot.slane %v2874, 7
      %v3006 = vrot.slane %v2875, 7
      %v3007 = vsel %vm565, %v3005, %v3006
      %v3008 = vrot.slane %v2876, 7
      %v3009 = vsel %vm565, %v3006, %v3008
      %v3010 = vrot.slane %v2878, 7
      %v3011 = vrot.slane %v2879, 7
      %v3012 = vsel %vm565, %v3010, %v3011
      %v3013 = vrot.slane %v2880, 7
      %v3014 = vsel %vm565, %v3011, %v3013
      %v3015 = vrot.slane %v2882, 7
      %v3016 = vrot.slane %v2883, 7
      %v3017 = vsel %vm565, %v3015, %v3016
      %v3018 = vrot.slane %v2884, 7
      %v3019 = vsel %vm565, %v3016, %v3018
      %v3020 = vrot.slane %v2886, 7
      %v3021 = vrot.slane %v2887, 7
      %v3022 = vsel %vm565, %v3020, %v3021
      %v3023 = vrot.slane %v2888, 7
      %v3024 = vsel %vm565, %v3021, %v3023
      %v3025 = vrot.slane %v2890, 7
      %v3026 = vrot.slane %v2891, 7
      %v3027 = vsel %vm565, %v3025, %v3026
      %v3028 = vrot.slane %v2892, 7
      %v3029 = vsel %vm565, %v3026, %v3028
      %v3046 = vrot.slane %v2831, 1
      %v3047 = vrot.slane %v2832, 1
      %v3048 = vsel %vm694, %v3046, %v3047
      %v3049 = vrot.slane %v2833, 1
      %v3050 = vsel %vm694, %v3047, %v3049
      %v3051 = vrot.slane %v2835, 1
      %v3052 = vrot.slane %v2836, 1
      %v3053 = vsel %vm694, %v3051, %v3052
      %v3054 = vrot.slane %v2837, 1
      %v3055 = vsel %vm694, %v3052, %v3054
      %v3056 = vrot.slane %v2839, 1
      %v3057 = vrot.slane %v2840, 1
      %v3058 = vsel %vm694, %v3056, %v3057
      %v3059 = vrot.slane %v2841, 1
      %v3060 = vsel %vm694, %v3057, %v3059
      %v3061 = vrot.slane %v2843, 1
      %v3062 = vrot.slane %v2844, 1
      %v3063 = vsel %vm694, %v3061, %v3062
      %v3064 = vrot.slane %v2845, 1
      %v3065 = vsel %vm694, %v3062, %v3064
      %v3066 = vrot.slane %v2847, 1
      %v3067 = vrot.slane %v2848, 1
      %v3068 = vsel %vm694, %v3066, %v3067
      %v3069 = vrot.slane %v2849, 1
      %v3070 = vsel %vm694, %v3067, %v3069
      %v3071 = vrot.slane %v2851, 1
      %v3072 = vrot.slane %v2852, 1
      %v3073 = vsel %vm694, %v3071, %v3072
      %v3074 = vrot.slane %v2853, 1
      %v3075 = vsel %vm694, %v3072, %v3074
      %v3076 = vrot.slane %v2855, 1
      %v3077 = vrot.slane %v2856, 1
      %v3078 = vsel %vm694, %v3076, %v3077
      %v3079 = vrot.slane %v2857, 1
      %v3080 = vsel %vm694, %v3077, %v3079
      %v3081 = vrot.slane %v2859, 1
      %v3082 = vrot.slane %v2860, 1
      %v3083 = vsel %vm694, %v3081, %v3082
      %v3084 = vrot.slane %v2861, 1
      %v3085 = vsel %vm694, %v3082, %v3084
      %v3086 = vrot.slane %v2863, 1
      %v3087 = vrot.slane %v2864, 1
      %v3088 = vsel %vm694, %v3086, %v3087
      %v3089 = vrot.slane %v2865, 1
      %v3090 = vsel %vm694, %v3087, %v3089
      %v3091 = vrot.slane %v2867, 1
      %v3092 = vrot.slane %v2868, 1
      %v3093 = vsel %vm694, %v3091, %v3092
      %v3094 = vrot.slane %v2869, 1
      %v3095 = vsel %vm694, %v3092, %v3094
      %v3096 = vrot.slane %v2871, 1
      %v3097 = vrot.slane %v2872, 1
      %v3098 = vsel %vm694, %v3096, %v3097
      %v3099 = vrot.slane %v2873, 1
      %v3100 = vsel %vm694, %v3097, %v3099
      %v3101 = vrot.slane %v2875, 1
      %v3102 = vrot.slane %v2876, 1
      %v3103 = vsel %vm694, %v3101, %v3102
      %v3104 = vrot.slane %v2877, 1
      %v3105 = vsel %vm694, %v3102, %v3104
      %v3106 = vrot.slane %v2879, 1
      %v3107 = vrot.slane %v2880, 1
      %v3108 = vsel %vm694, %v3106, %v3107
      %v3109 = vrot.slane %v2881, 1
      %v3110 = vsel %vm694, %v3107, %v3109
      %v3111 = vrot.slane %v2883, 1
      %v3112 = vrot.slane %v2884, 1
      %v3113 = vsel %vm694, %v3111, %v3112
      %v3114 = vrot.slane %v2885, 1
      %v3115 = vsel %vm694, %v3112, %v3114
      %v3116 = vrot.slane %v2887, 1
      %v3117 = vrot.slane %v2888, 1
      %v3118 = vsel %vm694, %v3116, %v3117
      %v3119 = vrot.slane %v2889, 1
      %v3120 = vsel %vm694, %v3117, %v3119
      %v3121 = vrot.slane %v2891, 1
      %v3122 = vrot.slane %v2892, 1
      %v3123 = vsel %vm694, %v3121, %v3122
      %v3124 = vrot.slane %v2893, 1
      %v3125 = vsel %vm694, %v3122, %v3124
      %v3129 = vrot.slane %v2894, 7
      %v3130 = vrot.slane %v2895, 7
      %v3131 = vsel %vm565, %v3129, %v3130
      %v3132 = vrot.slane %v2896, 7
      %v3133 = vsel %vm565, %v3130, %v3132
      %v3135 = vrot.slane %v2895, 1
      %v3136 = vrot.slane %v2896, 1
      %v3137 = vsel %vm694, %v3135, %v3136
      %v3138 = vrot.slane %v2897, 1
      %v3139 = vsel %vm694, %v3136, %v3138
      %v3143 = vrot.slane %v2898, 7
      %v3144 = vrot.slane %v2899, 7
      %v3145 = vsel %vm565, %v3143, %v3144
      %v3146 = vrot.slane %v2900, 7
      %v3147 = vsel %vm565, %v3144, %v3146
      %v3149 = vrot.slane %v2899, 1
      %v3150 = vrot.slane %v2900, 1
      %v3151 = vsel %vm694, %v3149, %v3150
      %v3152 = vrot.slane %v2901, 1
      %v3153 = vsel %vm694, %v3150, %v3152
      %3154 = vrot.lane.b32.xlu0 %v2952, 72
      %v3155 = vpop.permute.xlu0 %3154
      %3156 = vrot.lane.b32.xlu0 %v2954, 72
      %v3157 = vpop.permute.xlu0 %3156
      %3158 = vrot.lane.b32.xlu0 %v2957, 72
      %v3159 = vpop.permute.xlu0 %3158
      %3160 = vrot.lane.b32.xlu0 %v2959, 72
      %v3161 = vpop.permute.xlu0 %3160
      %3162 = vrot.lane.b32.xlu0 %v2962, 72
      %v3163 = vpop.permute.xlu0 %3162
      %3164 = vrot.lane.b32.xlu0 %v2964, 72
      %v3165 = vpop.permute.xlu0 %3164
      %3166 = vrot.lane.b32.xlu0 %v2967, 72
      %v3167 = vpop.permute.xlu0 %3166
      %3168 = vrot.lane.b32.xlu0 %v2969, 72
      %v3169 = vpop.permute.xlu0 %3168
      %3170 = vrot.lane.b32.xlu0 %v2972, 72
      %v3171 = vpop.permute.xlu0 %3170
      %3172 = vrot.lane.b32.xlu0 %v2974, 72
      %v3173 = vpop.permute.xlu0 %3172
      %3174 = vrot.lane.b32.xlu0 %v2977, 72
      %v3175 = vpop.permute.xlu0 %3174
      %3176 = vrot.lane.b32.xlu0 %v2979, 72
      %v3177 = vpop.permute.xlu0 %3176
      %3178 = vrot.lane.b32.xlu0 %v2982, 72
      %v3179 = vpop.permute.xlu0 %3178
      %3180 = vrot.lane.b32.xlu0 %v2984, 72
      %v3181 = vpop.permute.xlu0 %3180
      %3182 = vrot.lane.b32.xlu0 %v2987, 72
      %v3183 = vpop.permute.xlu0 %3182
      %3184 = vrot.lane.b32.xlu0 %v2989, 72
      %v3185 = vpop.permute.xlu0 %3184
      %3186 = vrot.lane.b32.xlu0 %v2992, 72
      %v3187 = vpop.permute.xlu0 %3186
      %3188 = vrot.lane.b32.xlu0 %v2994, 72
      %v3189 = vpop.permute.xlu0 %3188
      %3190 = vrot.lane.b32.xlu0 %v2997, 72
      %v3191 = vpop.permute.xlu0 %3190
      %3192 = vrot.lane.b32.xlu0 %v2999, 72
      %v3193 = vpop.permute.xlu0 %3192
      %3194 = vrot.lane.b32.xlu0 %v3002, 72
      %v3195 = vpop.permute.xlu0 %3194
      %3196 = vrot.lane.b32.xlu0 %v3004, 72
      %v3197 = vpop.permute.xlu0 %3196
      %3198 = vrot.lane.b32.xlu0 %v3007, 72
      %v3199 = vpop.permute.xlu0 %3198
      %3200 = vrot.lane.b32.xlu0 %v3009, 72
      %v3201 = vpop.permute.xlu0 %3200
      %3202 = vrot.lane.b32.xlu0 %v3012, 72
      %v3203 = vpop.permute.xlu0 %3202
      %3204 = vrot.lane.b32.xlu0 %v3014, 72
      %v3205 = vpop.permute.xlu0 %3204
      %3206 = vrot.lane.b32.xlu0 %v3017, 72
      %v3207 = vpop.permute.xlu0 %3206
      %3208 = vrot.lane.b32.xlu0 %v3019, 72
      %v3209 = vpop.permute.xlu0 %3208
      %3210 = vrot.lane.b32.xlu0 %v3022, 72
      %v3211 = vpop.permute.xlu0 %3210
      %3212 = vrot.lane.b32.xlu0 %v3024, 72
      %v3213 = vpop.permute.xlu0 %3212
      %3214 = vrot.lane.b32.xlu0 %v3027, 72
      %v3215 = vpop.permute.xlu0 %3214
      %3216 = vrot.lane.b32.xlu0 %v3029, 72
      %v3217 = vpop.permute.xlu0 %3216
      %3250 = vrot.lane.b32.xlu0 %v2831, 80
      %v3251 = vpop.permute.xlu0 %3250
      %3252 = vrot.lane.b32.xlu0 %v2832, 80
      %v3253 = vpop.permute.xlu0 %3252
      %3254 = vrot.lane.b32.xlu0 %v2835, 80
      %v3255 = vpop.permute.xlu0 %3254
      %3256 = vrot.lane.b32.xlu0 %v2836, 80
      %v3257 = vpop.permute.xlu0 %3256
      %3258 = vrot.lane.b32.xlu0 %v2839, 80
      %v3259 = vpop.permute.xlu0 %3258
      %3260 = vrot.lane.b32.xlu0 %v2840, 80
      %v3261 = vpop.permute.xlu0 %3260
      %3262 = vrot.lane.b32.xlu0 %v2843, 80
      %v3263 = vpop.permute.xlu0 %3262
      %3264 = vrot.lane.b32.xlu0 %v2844, 80
      %v3265 = vpop.permute.xlu0 %3264
      %3266 = vrot.lane.b32.xlu0 %v2847, 80
      %v3267 = vpop.permute.xlu0 %3266
      %3268 = vrot.lane.b32.xlu0 %v2848, 80
      %v3269 = vpop.permute.xlu0 %3268
      %3270 = vrot.lane.b32.xlu0 %v2851, 80
      %v3271 = vpop.permute.xlu0 %3270
      %3272 = vrot.lane.b32.xlu0 %v2852, 80
      %v3273 = vpop.permute.xlu0 %3272
      %3274 = vrot.lane.b32.xlu0 %v2855, 80
      %v3275 = vpop.permute.xlu0 %3274
      %3276 = vrot.lane.b32.xlu0 %v2856, 80
      %v3277 = vpop.permute.xlu0 %3276
      %3278 = vrot.lane.b32.xlu0 %v2859, 80
      %v3279 = vpop.permute.xlu0 %3278
      %3280 = vrot.lane.b32.xlu0 %v2860, 80
      %v3281 = vpop.permute.xlu0 %3280
      %3282 = vrot.lane.b32.xlu0 %v2863, 80
      %v3283 = vpop.permute.xlu0 %3282
      %3284 = vrot.lane.b32.xlu0 %v2864, 80
      %v3285 = vpop.permute.xlu0 %3284
      %3286 = vrot.lane.b32.xlu0 %v2867, 80
      %v3287 = vpop.permute.xlu0 %3286
      %3288 = vrot.lane.b32.xlu0 %v2868, 80
      %v3289 = vpop.permute.xlu0 %3288
      %3290 = vrot.lane.b32.xlu0 %v2871, 80
      %v3291 = vpop.permute.xlu0 %3290
      %3292 = vrot.lane.b32.xlu0 %v2872, 80
      %v3293 = vpop.permute.xlu0 %3292
      %3294 = vrot.lane.b32.xlu0 %v2875, 80
      %v3295 = vpop.permute.xlu0 %3294
      %3296 = vrot.lane.b32.xlu0 %v2876, 80
      %v3297 = vpop.permute.xlu0 %3296
      %3298 = vrot.lane.b32.xlu0 %v2879, 80
      %v3299 = vpop.permute.xlu0 %3298
      %3300 = vrot.lane.b32.xlu0 %v2880, 80
      %v3301 = vpop.permute.xlu0 %3300
      %3302 = vrot.lane.b32.xlu0 %v2883, 80
      %v3303 = vpop.permute.xlu0 %3302
      %3304 = vrot.lane.b32.xlu0 %v2884, 80
      %v3305 = vpop.permute.xlu0 %3304
      %3306 = vrot.lane.b32.xlu0 %v2887, 80
      %v3307 = vpop.permute.xlu0 %3306
      %3308 = vrot.lane.b32.xlu0 %v2888, 80
      %v3309 = vpop.permute.xlu0 %3308
      %3310 = vrot.lane.b32.xlu0 %v2891, 80
      %v3311 = vpop.permute.xlu0 %3310
      %3312 = vrot.lane.b32.xlu0 %v2892, 80
      %v3313 = vpop.permute.xlu0 %3312
      %3346 = vrot.lane.b32.xlu0 %v3048, 88
      %v3347 = vpop.permute.xlu0 %3346
      %3348 = vrot.lane.b32.xlu0 %v3050, 88
      %v3349 = vpop.permute.xlu0 %3348
      %3350 = vrot.lane.b32.xlu0 %v3053, 88
      %v3351 = vpop.permute.xlu0 %3350
      %3352 = vrot.lane.b32.xlu0 %v3055, 88
      %v3353 = vpop.permute.xlu0 %3352
      %3354 = vrot.lane.b32.xlu0 %v3058, 88
      %v3355 = vpop.permute.xlu0 %3354
      %3356 = vrot.lane.b32.xlu0 %v3060, 88
      %v3357 = vpop.permute.xlu0 %3356
      %3358 = vrot.lane.b32.xlu0 %v3063, 88
      %v3359 = vpop.permute.xlu0 %3358
      %3360 = vrot.lane.b32.xlu0 %v3065, 88
      %v3361 = vpop.permute.xlu0 %3360
      %3362 = vrot.lane.b32.xlu0 %v3068, 88
      %v3363 = vpop.permute.xlu0 %3362
      %3364 = vrot.lane.b32.xlu0 %v3070, 88
      %v3365 = vpop.permute.xlu0 %3364
      %3366 = vrot.lane.b32.xlu0 %v3073, 88
      %v3367 = vpop.permute.xlu0 %3366
      %3368 = vrot.lane.b32.xlu0 %v3075, 88
      %v3369 = vpop.permute.xlu0 %3368
      %3370 = vrot.lane.b32.xlu0 %v3078, 88
      %v3371 = vpop.permute.xlu0 %3370
      %3372 = vrot.lane.b32.xlu0 %v3080, 88
      %v3373 = vpop.permute.xlu0 %3372
      %3374 = vrot.lane.b32.xlu0 %v3083, 88
      %v3375 = vpop.permute.xlu0 %3374
      %3376 = vrot.lane.b32.xlu0 %v3085, 88
      %v3377 = vpop.permute.xlu0 %3376
      %3378 = vrot.lane.b32.xlu0 %v3088, 88
      %v3379 = vpop.permute.xlu0 %3378
      %3380 = vrot.lane.b32.xlu0 %v3090, 88
      %v3381 = vpop.permute.xlu0 %3380
      %3382 = vrot.lane.b32.xlu0 %v3093, 88
      %v3383 = vpop.permute.xlu0 %3382
      %3384 = vrot.lane.b32.xlu0 %v3095, 88
      %v3385 = vpop.permute.xlu0 %3384
      %3386 = vrot.lane.b32.xlu0 %v3098, 88
      %v3387 = vpop.permute.xlu0 %3386
      %3388 = vrot.lane.b32.xlu0 %v3100, 88
      %v3389 = vpop.permute.xlu0 %3388
      %3390 = vrot.lane.b32.xlu0 %v3103, 88
      %v3391 = vpop.permute.xlu0 %3390
      %3392 = vrot.lane.b32.xlu0 %v3105, 88
      %v3393 = vpop.permute.xlu0 %3392
      %3394 = vrot.lane.b32.xlu0 %v3108, 88
      %v3395 = vpop.permute.xlu0 %3394
      %3396 = vrot.lane.b32.xlu0 %v3110, 88
      %v3397 = vpop.permute.xlu0 %3396
      %3398 = vrot.lane.b32.xlu0 %v3113, 88
      %v3399 = vpop.permute.xlu0 %3398
      %3400 = vrot.lane.b32.xlu0 %v3115, 88
      %v3401 = vpop.permute.xlu0 %3400
      %3402 = vrot.lane.b32.xlu0 %v3118, 88
      %v3403 = vpop.permute.xlu0 %3402
      %3404 = vrot.lane.b32.xlu0 %v3120, 88
      %v3405 = vpop.permute.xlu0 %3404
      %3406 = vrot.lane.b32.xlu0 %v3123, 88
      %v3407 = vpop.permute.xlu0 %3406
      %3408 = vrot.lane.b32.xlu0 %v3125, 88
      %v3409 = vpop.permute.xlu0 %3408
      %3442 = vrot.lane.b32.xlu0 %v2957, 96
      %v3443 = vpop.permute.xlu0 %3442
      %3444 = vrot.lane.b32.xlu0 %v2959, 96
      %v3445 = vpop.permute.xlu0 %3444
      %3446 = vrot.lane.b32.xlu0 %v2962, 96
      %v3447 = vpop.permute.xlu0 %3446
      %3448 = vrot.lane.b32.xlu0 %v2964, 96
      %v3449 = vpop.permute.xlu0 %3448
      %3450 = vrot.lane.b32.xlu0 %v2967, 96
      %v3451 = vpop.permute.xlu0 %3450
      %3452 = vrot.lane.b32.xlu0 %v2969, 96
      %v3453 = vpop.permute.xlu0 %3452
      %3454 = vrot.lane.b32.xlu0 %v2972, 96
      %v3455 = vpop.permute.xlu0 %3454
      %3456 = vrot.lane.b32.xlu0 %v2974, 96
      %v3457 = vpop.permute.xlu0 %3456
      %3458 = vrot.lane.b32.xlu0 %v2977, 96
      %v3459 = vpop.permute.xlu0 %3458
      %3460 = vrot.lane.b32.xlu0 %v2979, 96
      %v3461 = vpop.permute.xlu0 %3460
      %3462 = vrot.lane.b32.xlu0 %v2982, 96
      %v3463 = vpop.permute.xlu0 %3462
      %3464 = vrot.lane.b32.xlu0 %v2984, 96
      %v3465 = vpop.permute.xlu0 %3464
      %3466 = vrot.lane.b32.xlu0 %v2987, 96
      %v3467 = vpop.permute.xlu0 %3466
      %3468 = vrot.lane.b32.xlu0 %v2989, 96
      %v3469 = vpop.permute.xlu0 %3468
      %3470 = vrot.lane.b32.xlu0 %v2992, 96
      %v3471 = vpop.permute.xlu0 %3470
      %3472 = vrot.lane.b32.xlu0 %v2994, 96
      %v3473 = vpop.permute.xlu0 %3472
      %3474 = vrot.lane.b32.xlu0 %v2997, 96
      %v3475 = vpop.permute.xlu0 %3474
      %3476 = vrot.lane.b32.xlu0 %v2999, 96
      %v3477 = vpop.permute.xlu0 %3476
      %3478 = vrot.lane.b32.xlu0 %v3002, 96
      %v3479 = vpop.permute.xlu0 %3478
      %3480 = vrot.lane.b32.xlu0 %v3004, 96
      %v3481 = vpop.permute.xlu0 %3480
      %3482 = vrot.lane.b32.xlu0 %v3007, 96
      %v3483 = vpop.permute.xlu0 %3482
      %3484 = vrot.lane.b32.xlu0 %v3009, 96
      %v3485 = vpop.permute.xlu0 %3484
      %3486 = vrot.lane.b32.xlu0 %v3012, 96
      %v3487 = vpop.permute.xlu0 %3486
      %3488 = vrot.lane.b32.xlu0 %v3014, 96
      %v3489 = vpop.permute.xlu0 %3488
      %3490 = vrot.lane.b32.xlu0 %v3017, 96
      %v3491 = vpop.permute.xlu0 %3490
      %3492 = vrot.lane.b32.xlu0 %v3019, 96
      %v3493 = vpop.permute.xlu0 %3492
      %3494 = vrot.lane.b32.xlu0 %v3022, 96
      %v3495 = vpop.permute.xlu0 %3494
      %3496 = vrot.lane.b32.xlu0 %v3024, 96
      %v3497 = vpop.permute.xlu0 %3496
      %3498 = vrot.lane.b32.xlu0 %v3027, 96
      %v3499 = vpop.permute.xlu0 %3498
      %3500 = vrot.lane.b32.xlu0 %v3029, 96
      %v3501 = vpop.permute.xlu0 %3500
      %3502 = vrot.lane.b32.xlu0 %v3131, 96
      %v3503 = vpop.permute.xlu0 %3502
      %3504 = vrot.lane.b32.xlu0 %v3133, 96
      %v3505 = vpop.permute.xlu0 %3504
      %3538 = vrot.lane.b32.xlu0 %v2835, 104
      %v3539 = vpop.permute.xlu0 %3538
      %3540 = vrot.lane.b32.xlu0 %v2836, 104
      %v3541 = vpop.permute.xlu0 %3540
      %3542 = vrot.lane.b32.xlu0 %v2839, 104
      %v3543 = vpop.permute.xlu0 %3542
      %3544 = vrot.lane.b32.xlu0 %v2840, 104
      %v3545 = vpop.permute.xlu0 %3544
      %3546 = vrot.lane.b32.xlu0 %v2843, 104
      %v3547 = vpop.permute.xlu0 %3546
      %3548 = vrot.lane.b32.xlu0 %v2844, 104
      %v3549 = vpop.permute.xlu0 %3548
      %3550 = vrot.lane.b32.xlu0 %v2847, 104
      %v3551 = vpop.permute.xlu0 %3550
      %3552 = vrot.lane.b32.xlu0 %v2848, 104
      %v3553 = vpop.permute.xlu0 %3552
      %3554 = vrot.lane.b32.xlu0 %v2851, 104
      %v3555 = vpop.permute.xlu0 %3554
      %3556 = vrot.lane.b32.xlu0 %v2852, 104
      %v3557 = vpop.permute.xlu0 %3556
      %3558 = vrot.lane.b32.xlu0 %v2855, 104
      %v3559 = vpop.permute.xlu0 %3558
      %3560 = vrot.lane.b32.xlu0 %v2856, 104
      %v3561 = vpop.permute.xlu0 %3560
      %3562 = vrot.lane.b32.xlu0 %v2859, 104
      %v3563 = vpop.permute.xlu0 %3562
      %3564 = vrot.lane.b32.xlu0 %v2860, 104
      %v3565 = vpop.permute.xlu0 %3564
      %3566 = vrot.lane.b32.xlu0 %v2863, 104
      %v3567 = vpop.permute.xlu0 %3566
      %3568 = vrot.lane.b32.xlu0 %v2864, 104
      %v3569 = vpop.permute.xlu0 %3568
      %3570 = vrot.lane.b32.xlu0 %v2867, 104
      %v3571 = vpop.permute.xlu0 %3570
      %3572 = vrot.lane.b32.xlu0 %v2868, 104
      %v3573 = vpop.permute.xlu0 %3572
      %3574 = vrot.lane.b32.xlu0 %v2871, 104
      %v3575 = vpop.permute.xlu0 %3574
      %3576 = vrot.lane.b32.xlu0 %v2872, 104
      %v3577 = vpop.permute.xlu0 %3576
      %3578 = vrot.lane.b32.xlu0 %v2875, 104
      %v3579 = vpop.permute.xlu0 %3578
      %3580 = vrot.lane.b32.xlu0 %v2876, 104
      %v3581 = vpop.permute.xlu0 %3580
      %3582 = vrot.lane.b32.xlu0 %v2879, 104
      %v3583 = vpop.permute.xlu0 %3582
      %3584 = vrot.lane.b32.xlu0 %v2880, 104
      %v3585 = vpop.permute.xlu0 %3584
      %3586 = vrot.lane.b32.xlu0 %v2883, 104
      %v3587 = vpop.permute.xlu0 %3586
      %3588 = vrot.lane.b32.xlu0 %v2884, 104
      %v3589 = vpop.permute.xlu0 %3588
      %3590 = vrot.lane.b32.xlu0 %v2887, 104
      %v3591 = vpop.permute.xlu0 %3590
      %3592 = vrot.lane.b32.xlu0 %v2888, 104
      %v3593 = vpop.permute.xlu0 %3592
      %3594 = vrot.lane.b32.xlu0 %v2891, 104
      %v3595 = vpop.permute.xlu0 %3594
      %3596 = vrot.lane.b32.xlu0 %v2892, 104
      %v3597 = vpop.permute.xlu0 %3596
      %3598 = vrot.lane.b32.xlu0 %v2895, 104
      %v3599 = vpop.permute.xlu0 %3598
      %3600 = vrot.lane.b32.xlu0 %v2896, 104
      %v3601 = vpop.permute.xlu0 %3600
      %3634 = vrot.lane.b32.xlu0 %v3053, 112
      %v3635 = vpop.permute.xlu0 %3634
      %3636 = vrot.lane.b32.xlu0 %v3055, 112
      %v3637 = vpop.permute.xlu0 %3636
      %3638 = vrot.lane.b32.xlu0 %v3058, 112
      %v3639 = vpop.permute.xlu0 %3638
      %3640 = vrot.lane.b32.xlu0 %v3060, 112
      %v3641 = vpop.permute.xlu0 %3640
      %3642 = vrot.lane.b32.xlu0 %v3063, 112
      %v3643 = vpop.permute.xlu0 %3642
      %3644 = vrot.lane.b32.xlu0 %v3065, 112
      %v3645 = vpop.permute.xlu0 %3644
      %3646 = vrot.lane.b32.xlu0 %v3068, 112
      %v3647 = vpop.permute.xlu0 %3646
      %3648 = vrot.lane.b32.xlu0 %v3070, 112
      %v3649 = vpop.permute.xlu0 %3648
      %3650 = vrot.lane.b32.xlu0 %v3073, 112
      %v3651 = vpop.permute.xlu0 %3650
      %3652 = vrot.lane.b32.xlu0 %v3075, 112
      %v3653 = vpop.permute.xlu0 %3652
      %3654 = vrot.lane.b32.xlu0 %v3078, 112
      %v3655 = vpop.permute.xlu0 %3654
      %3656 = vrot.lane.b32.xlu0 %v3080, 112
      %v3657 = vpop.permute.xlu0 %3656
      %3658 = vrot.lane.b32.xlu0 %v3083, 112
      %v3659 = vpop.permute.xlu0 %3658
      %3660 = vrot.lane.b32.xlu0 %v3085, 112
      %v3661 = vpop.permute.xlu0 %3660
      %3662 = vrot.lane.b32.xlu0 %v3088, 112
      %v3663 = vpop.permute.xlu0 %3662
      %3664 = vrot.lane.b32.xlu0 %v3090, 112
      %v3665 = vpop.permute.xlu0 %3664
      %3666 = vrot.lane.b32.xlu0 %v3093, 112
      %v3667 = vpop.permute.xlu0 %3666
      %3668 = vrot.lane.b32.xlu0 %v3095, 112
      %v3669 = vpop.permute.xlu0 %3668
      %3670 = vrot.lane.b32.xlu0 %v3098, 112
      %v3671 = vpop.permute.xlu0 %3670
      %3672 = vrot.lane.b32.xlu0 %v3100, 112
      %v3673 = vpop.permute.xlu0 %3672
      %3674 = vrot.lane.b32.xlu0 %v3103, 112
      %v3675 = vpop.permute.xlu0 %3674
      %3676 = vrot.lane.b32.xlu0 %v3105, 112
      %v3677 = vpop.permute.xlu0 %3676
      %3678 = vrot.lane.b32.xlu0 %v3108, 112
      %v3679 = vpop.permute.xlu0 %3678
      %3680 = vrot.lane.b32.xlu0 %v3110, 112
      %v3681 = vpop.permute.xlu0 %3680
      %3682 = vrot.lane.b32.xlu0 %v3113, 112
      %v3683 = vpop.permute.xlu0 %3682
      %3684 = vrot.lane.b32.xlu0 %v3115, 112
      %v3685 = vpop.permute.xlu0 %3684
      %3686 = vrot.lane.b32.xlu0 %v3118, 112
      %v3687 = vpop.permute.xlu0 %3686
      %3688 = vrot.lane.b32.xlu0 %v3120, 112
      %v3689 = vpop.permute.xlu0 %3688
      %3690 = vrot.lane.b32.xlu0 %v3123, 112
      %v3691 = vpop.permute.xlu0 %3690
      %3692 = vrot.lane.b32.xlu0 %v3125, 112
      %v3693 = vpop.permute.xlu0 %3692
      %3694 = vrot.lane.b32.xlu0 %v3137, 112
      %v3695 = vpop.permute.xlu0 %3694
      %3696 = vrot.lane.b32.xlu0 %v3139, 112
      %v3697 = vpop.permute.xlu0 %3696
      %3730 = vrot.lane.b32.xlu0 %v2962, 120
      %v3731 = vpop.permute.xlu0 %3730
      %3732 = vrot.lane.b32.xlu0 %v2964, 120
      %v3733 = vpop.permute.xlu0 %3732
      %3734 = vrot.lane.b32.xlu0 %v2967, 120
      %v3735 = vpop.permute.xlu0 %3734
      %3736 = vrot.lane.b32.xlu0 %v2969, 120
      %v3737 = vpop.permute.xlu0 %3736
      %3738 = vrot.lane.b32.xlu0 %v2972, 120
      %v3739 = vpop.permute.xlu0 %3738
      %3740 = vrot.lane.b32.xlu0 %v2974, 120
      %v3741 = vpop.permute.xlu0 %3740
      %3742 = vrot.lane.b32.xlu0 %v2977, 120
      %v3743 = vpop.permute.xlu0 %3742
      %3744 = vrot.lane.b32.xlu0 %v2979, 120
      %v3745 = vpop.permute.xlu0 %3744
      %3746 = vrot.lane.b32.xlu0 %v2982, 120
      %v3747 = vpop.permute.xlu0 %3746
      %3748 = vrot.lane.b32.xlu0 %v2984, 120
      %v3749 = vpop.permute.xlu0 %3748
      %3750 = vrot.lane.b32.xlu0 %v2987, 120
      %v3751 = vpop.permute.xlu0 %3750
      %3752 = vrot.lane.b32.xlu0 %v2989, 120
      %v3753 = vpop.permute.xlu0 %3752
      %3754 = vrot.lane.b32.xlu0 %v2992, 120
      %v3755 = vpop.permute.xlu0 %3754
      %3756 = vrot.lane.b32.xlu0 %v2994, 120
      %v3757 = vpop.permute.xlu0 %3756
      %3758 = vrot.lane.b32.xlu0 %v2997, 120
      %v3759 = vpop.permute.xlu0 %3758
      %3760 = vrot.lane.b32.xlu0 %v2999, 120
      %v3761 = vpop.permute.xlu0 %3760
      %3762 = vrot.lane.b32.xlu0 %v3002, 120
      %v3763 = vpop.permute.xlu0 %3762
      %3764 = vrot.lane.b32.xlu0 %v3004, 120
      %v3765 = vpop.permute.xlu0 %3764
      %3766 = vrot.lane.b32.xlu0 %v3007, 120
      %v3767 = vpop.permute.xlu0 %3766
      %3768 = vrot.lane.b32.xlu0 %v3009, 120
      %v3769 = vpop.permute.xlu0 %3768
      %3770 = vrot.lane.b32.xlu0 %v3012, 120
      %v3771 = vpop.permute.xlu0 %3770
      %3772 = vrot.lane.b32.xlu0 %v3014, 120
      %v3773 = vpop.permute.xlu0 %3772
      %3774 = vrot.lane.b32.xlu0 %v3017, 120
      %v3775 = vpop.permute.xlu0 %3774
      %3776 = vrot.lane.b32.xlu0 %v3019, 120
      %v3777 = vpop.permute.xlu0 %3776
      %3778 = vrot.lane.b32.xlu0 %v3022, 120
      %v3779 = vpop.permute.xlu0 %3778
      %3780 = vrot.lane.b32.xlu0 %v3024, 120
      %v3781 = vpop.permute.xlu0 %3780
      %3782 = vrot.lane.b32.xlu0 %v3027, 120
      %v3783 = vpop.permute.xlu0 %3782
      %3784 = vrot.lane.b32.xlu0 %v3029, 120
      %v3785 = vpop.permute.xlu0 %3784
      %3786 = vrot.lane.b32.xlu0 %v3131, 120
      %v3787 = vpop.permute.xlu0 %3786
      %3788 = vrot.lane.b32.xlu0 %v3133, 120
      %v3789 = vpop.permute.xlu0 %3788
      %3790 = vrot.lane.b32.xlu0 %v3145, 120
      %v3791 = vpop.permute.xlu0 %3790
      %3792 = vrot.lane.b32.xlu0 %v3147, 120
      %v3793 = vpop.permute.xlu0 %3792
      %3826 = vrot.lane.b32.xlu0 %v3058, 8
      %v3827 = vpop.permute.xlu0 %3826
      %3828 = vrot.lane.b32.xlu0 %v3060, 8
      %v3829 = vpop.permute.xlu0 %3828
      %3830 = vrot.lane.b32.xlu0 %v3063, 8
      %v3831 = vpop.permute.xlu0 %3830
      %3832 = vrot.lane.b32.xlu0 %v3065, 8
      %v3833 = vpop.permute.xlu0 %3832
      %3834 = vrot.lane.b32.xlu0 %v3068, 8
      %v3835 = vpop.permute.xlu0 %3834
      %3836 = vrot.lane.b32.xlu0 %v3070, 8
      %v3837 = vpop.permute.xlu0 %3836
      %3838 = vrot.lane.b32.xlu0 %v3073, 8
      %v3839 = vpop.permute.xlu0 %3838
      %3840 = vrot.lane.b32.xlu0 %v3075, 8
      %v3841 = vpop.permute.xlu0 %3840
      %3842 = vrot.lane.b32.xlu0 %v3078, 8
      %v3843 = vpop.permute.xlu0 %3842
      %3844 = vrot.lane.b32.xlu0 %v3080, 8
      %v3845 = vpop.permute.xlu0 %3844
      %3846 = vrot.lane.b32.xlu0 %v3083, 8
      %v3847 = vpop.permute.xlu0 %3846
      %3848 = vrot.lane.b32.xlu0 %v3085, 8
      %v3849 = vpop.permute.xlu0 %3848
      %3850 = vrot.lane.b32.xlu0 %v3088, 8
      %v3851 = vpop.permute.xlu0 %3850
      %3852 = vrot.lane.b32.xlu0 %v3090, 8
      %v3853 = vpop.permute.xlu0 %3852
      %3854 = vrot.lane.b32.xlu0 %v3093, 8
      %v3855 = vpop.permute.xlu0 %3854
      %3856 = vrot.lane.b32.xlu0 %v3095, 8
      %v3857 = vpop.permute.xlu0 %3856
      %3858 = vrot.lane.b32.xlu0 %v3098, 8
      %v3859 = vpop.permute.xlu0 %3858
      %3860 = vrot.lane.b32.xlu0 %v3100, 8
      %v3861 = vpop.permute.xlu0 %3860
      %3862 = vrot.lane.b32.xlu0 %v3103, 8
      %v3863 = vpop.permute.xlu0 %3862
      %3864 = vrot.lane.b32.xlu0 %v3105, 8
      %v3865 = vpop.permute.xlu0 %3864
      %3866 = vrot.lane.b32.xlu0 %v3108, 8
      %v3867 = vpop.permute.xlu0 %3866
      %3868 = vrot.lane.b32.xlu0 %v3110, 8
      %v3869 = vpop.permute.xlu0 %3868
      %3870 = vrot.lane.b32.xlu0 %v3113, 8
      %v3871 = vpop.permute.xlu0 %3870
      %3872 = vrot.lane.b32.xlu0 %v3115, 8
      %v3873 = vpop.permute.xlu0 %3872
      %3874 = vrot.lane.b32.xlu0 %v3118, 8
      %v3875 = vpop.permute.xlu0 %3874
      %3876 = vrot.lane.b32.xlu0 %v3120, 8
      %v3877 = vpop.permute.xlu0 %3876
      %3878 = vrot.lane.b32.xlu0 %v3123, 8
      %v3879 = vpop.permute.xlu0 %3878
      %3880 = vrot.lane.b32.xlu0 %v3125, 8
      %v3881 = vpop.permute.xlu0 %3880
      %3882 = vrot.lane.b32.xlu0 %v3137, 8
      %v3883 = vpop.permute.xlu0 %3882
      %3884 = vrot.lane.b32.xlu0 %v3139, 8
      %v3885 = vpop.permute.xlu0 %3884
      %3886 = vrot.lane.b32.xlu0 %v3151, 8
      %v3887 = vpop.permute.xlu0 %3886
      %3888 = vrot.lane.b32.xlu0 %v3153, 8
      %v3889 = vpop.permute.xlu0 %3888
      %v3922 = vsel %vm1893, %v1802, %v3155
      %v3923 = vsel %vm1893, %v1803, %v3157
      %v3924 = vsel %vm1893, %v1804, %v3159
      %v3925 = vsel %vm1893, %v1805, %v3161
      %v3926 = vsel %vm1893, %v1806, %v3163
      %v3927 = vsel %vm1893, %v1807, %v3165
      %v3928 = vsel %vm1893, %v1808, %v3167
      %v3929 = vsel %vm1893, %v1809, %v3169
      %v3930 = vsel %vm1893, %v1810, %v3171
      %v3931 = vsel %vm1893, %v1811, %v3173
      %v3932 = vsel %vm1893, %v1812, %v3175
      %v3933 = vsel %vm1893, %v1813, %v3177
      %v3934 = vsel %vm1893, %v1814, %v3179
      %v3935 = vsel %vm1893, %v1815, %v3181
      %v3936 = vsel %vm1893, %v1816, %v3183
      %v3937 = vsel %vm1893, %v1817, %v3185
      %v3938 = vsel %vm1893, %v1818, %v3187
      %v3939 = vsel %vm1893, %v1819, %v3189
      %v3940 = vsel %vm1893, %v1820, %v3191
      %v3941 = vsel %vm1893, %v1821, %v3193
      %v3942 = vsel %vm1893, %v1822, %v3195
      %v3943 = vsel %vm1893, %v1823, %v3197
      %v3944 = vsel %vm1893, %v1824, %v3199
      %v3945 = vsel %vm1893, %v1825, %v3201
      %v3946 = vsel %vm1893, %v1826, %v3203
      %v3947 = vsel %vm1893, %v1827, %v3205
      %v3948 = vsel %vm1893, %v1828, %v3207
      %v3949 = vsel %vm1893, %v1829, %v3209
      %v3950 = vsel %vm1893, %v1830, %v3211
      %v3951 = vsel %vm1893, %v1831, %v3213
      %v3952 = vsel %vm1893, %v1832, %v3215
      %v3953 = vsel %vm1893, %v1833, %v3217
      %vm3954 = vcmask 654336
      %v3955 = vsel %vm3954, %v3922, %v3251
      %v3956 = vsel %vm3954, %v3923, %v3253
      %v3957 = vsel %vm3954, %v3924, %v3255
      %v3958 = vsel %vm3954, %v3925, %v3257
      %v3959 = vsel %vm3954, %v3926, %v3259
      %v3960 = vsel %vm3954, %v3927, %v3261
      %v3961 = vsel %vm3954, %v3928, %v3263
      %v3962 = vsel %vm3954, %v3929, %v3265
      %v3963 = vsel %vm3954, %v3930, %v3267
      %v3964 = vsel %vm3954, %v3931, %v3269
      %v3965 = vsel %vm3954, %v3932, %v3271
      %v3966 = vsel %vm3954, %v3933, %v3273
      %v3967 = vsel %vm3954, %v3934, %v3275
      %v3968 = vsel %vm3954, %v3935, %v3277
      %v3969 = vsel %vm3954, %v3936, %v3279
      %v3970 = vsel %vm3954, %v3937, %v3281
      %v3971 = vsel %vm3954, %v3938, %v3283
      %v3972 = vsel %vm3954, %v3939, %v3285
      %v3973 = vsel %vm3954, %v3940, %v3287
      %v3974 = vsel %vm3954, %v3941, %v3289
      %v3975 = vsel %vm3954, %v3942, %v3291
      %v3976 = vsel %vm3954, %v3943, %v3293
      %v3977 = vsel %vm3954, %v3944, %v3295
      %v3978 = vsel %vm3954, %v3945, %v3297
      %v3979 = vsel %vm3954, %v3946, %v3299
      %v3980 = vsel %vm3954, %v3947, %v3301
      %v3981 = vsel %vm3954, %v3948, %v3303
      %v3982 = vsel %vm3954, %v3949, %v3305
      %v3983 = vsel %vm3954, %v3950, %v3307
      %v3984 = vsel %vm3954, %v3951, %v3309
      %v3985 = vsel %vm3954, %v3952, %v3311
      %v3986 = vsel %vm3954, %v3953, %v3313
      %vm3987 = vcmask 719872
      %v3988 = vsel %vm3987, %v3955, %v3347
      %v3989 = vsel %vm3987, %v3956, %v3349
      %v3990 = vsel %vm3987, %v3957, %v3351
      %v3991 = vsel %vm3987, %v3958, %v3353
      %v3992 = vsel %vm3987, %v3959, %v3355
      %v3993 = vsel %vm3987, %v3960, %v3357
      %v3994 = vsel %vm3987, %v3961, %v3359
      %v3995 = vsel %vm3987, %v3962, %v3361
      %v3996 = vsel %vm3987, %v3963, %v3363
      %v3997 = vsel %vm3987, %v3964, %v3365
      %v3998 = vsel %vm3987, %v3965, %v3367
      %v3999 = vsel %vm3987, %v3966, %v3369
      %v4000 = vsel %vm3987, %v3967, %v3371
      %v4001 = vsel %vm3987, %v3968, %v3373
      %v4002 = vsel %vm3987, %v3969, %v3375
      %v4003 = vsel %vm3987, %v3970, %v3377
      %v4004 = vsel %vm3987, %v3971, %v3379
      %v4005 = vsel %vm3987, %v3972, %v3381
      %v4006 = vsel %vm3987, %v3973, %v3383
      %v4007 = vsel %vm3987, %v3974, %v3385
      %v4008 = vsel %vm3987, %v3975, %v3387
      %v4009 = vsel %vm3987, %v3976, %v3389
      %v4010 = vsel %vm3987, %v3977, %v3391
      %v4011 = vsel %vm3987, %v3978, %v3393
      %v4012 = vsel %vm3987, %v3979, %v3395
      %v4013 = vsel %vm3987, %v3980, %v3397
      %v4014 = vsel %vm3987, %v3981, %v3399
      %v4015 = vsel %vm3987, %v3982, %v3401
      %v4016 = vsel %vm3987, %v3983, %v3403
      %v4017 = vsel %vm3987, %v3984, %v3405
      %v4018 = vsel %vm3987, %v3985, %v3407
      %v4019 = vsel %vm3987, %v3986, %v3409
      %vm4020 = vcmask 785408
      %v4021 = vsel %vm4020, %v3988, %v3443
      %v4022 = vsel %vm4020, %v3989, %v3445
      %v4023 = vsel %vm4020, %v3990, %v3447
      %v4024 = vsel %vm4020, %v3991, %v3449
      %v4025 = vsel %vm4020, %v3992, %v3451
      %v4026 = vsel %vm4020, %v3993, %v3453
      %v4027 = vsel %vm4020, %v3994, %v3455
      %v4028 = vsel %vm4020, %v3995, %v3457
      %v4029 = vsel %vm4020, %v3996, %v3459
      %v4030 = vsel %vm4020, %v3997, %v3461
      %v4031 = vsel %vm4020, %v3998, %v3463
      %v4032 = vsel %vm4020, %v3999, %v3465
      %v4033 = vsel %vm4020, %v4000, %v3467
      %v4034 = vsel %vm4020, %v4001, %v3469
      %v4035 = vsel %vm4020, %v4002, %v3471
      %v4036 = vsel %vm4020, %v4003, %v3473
      %v4037 = vsel %vm4020, %v4004, %v3475
      %v4038 = vsel %vm4020, %v4005, %v3477
      %v4039 = vsel %vm4020, %v4006, %v3479
      %v4040 = vsel %vm4020, %v4007, %v3481
      %v4041 = vsel %vm4020, %v4008, %v3483
      %v4042 = vsel %vm4020, %v4009, %v3485
      %v4043 = vsel %vm4020, %v4010, %v3487
      %v4044 = vsel %vm4020, %v4011, %v3489
      %v4045 = vsel %vm4020, %v4012, %v3491
      %v4046 = vsel %vm4020, %v4013, %v3493
      %v4047 = vsel %vm4020, %v4014, %v3495
      %v4048 = vsel %vm4020, %v4015, %v3497
      %v4049 = vsel %vm4020, %v4016, %v3499
      %v4050 = vsel %vm4020, %v4017, %v3501
      %v4051 = vsel %vm4020, %v4018, %v3503
      %v4052 = vsel %vm4020, %v4019, %v3505
      %vm4053 = vcmask 850944
      %v4054 = vsel %vm4053, %v4021, %v3539
      %v4055 = vsel %vm4053, %v4022, %v3541
      %v4056 = vsel %vm4053, %v4023, %v3543
      %v4057 = vsel %vm4053, %v4024, %v3545
      %v4058 = vsel %vm4053, %v4025, %v3547
      %v4059 = vsel %vm4053, %v4026, %v3549
      %v4060 = vsel %vm4053, %v4027, %v3551
      %v4061 = vsel %vm4053, %v4028, %v3553
      %v4062 = vsel %vm4053, %v4029, %v3555
      %v4063 = vsel %vm4053, %v4030, %v3557
      %v4064 = vsel %vm4053, %v4031, %v3559
      %v4065 = vsel %vm4053, %v4032, %v3561
      %v4066 = vsel %vm4053, %v4033, %v3563
      %v4067 = vsel %vm4053, %v4034, %v3565
      %v4068 = vsel %vm4053, %v4035, %v3567
      %v4069 = vsel %vm4053, %v4036, %v3569
      %v4070 = vsel %vm4053, %v4037, %v3571
      %v4071 = vsel %vm4053, %v4038, %v3573
      %v4072 = vsel %vm4053, %v4039, %v3575
      %v4073 = vsel %vm4053, %v4040, %v3577
      %v4074 = vsel %vm4053, %v4041, %v3579
      %v4075 = vsel %vm4053, %v4042, %v3581
      %v4076 = vsel %vm4053, %v4043, %v3583
      %v4077 = vsel %vm4053, %v4044, %v3585
      %v4078 = vsel %vm4053, %v4045, %v3587
      %v4079 = vsel %vm4053, %v4046, %v3589
      %v4080 = vsel %vm4053, %v4047, %v3591
      %v4081 = vsel %vm4053, %v4048, %v3593
      %v4082 = vsel %vm4053, %v4049, %v3595
      %v4083 = vsel %vm4053, %v4050, %v3597
      %v4084 = vsel %vm4053, %v4051, %v3599
      %v4085 = vsel %vm4053, %v4052, %v3601
      %vm4086 = vcmask 916480
      %v4087 = vsel %vm4086, %v4054, %v3635
      %v4088 = vsel %vm4086, %v4055, %v3637
      %v4089 = vsel %vm4086, %v4056, %v3639
      %v4090 = vsel %vm4086, %v4057, %v3641
      %v4091 = vsel %vm4086, %v4058, %v3643
      %v4092 = vsel %vm4086, %v4059, %v3645
      %v4093 = vsel %vm4086, %v4060, %v3647
      %v4094 = vsel %vm4086, %v4061, %v3649
      %v4095 = vsel %vm4086, %v4062, %v3651
      %v4096 = vsel %vm4086, %v4063, %v3653
      %v4097 = vsel %vm4086, %v4064, %v3655
      %v4098 = vsel %vm4086, %v4065, %v3657
      %v4099 = vsel %vm4086, %v4066, %v3659
      %v4100 = vsel %vm4086, %v4067, %v3661
      %v4101 = vsel %vm4086, %v4068, %v3663
      %v4102 = vsel %vm4086, %v4069, %v3665
      %v4103 = vsel %vm4086, %v4070, %v3667
      %v4104 = vsel %vm4086, %v4071, %v3669
      %v4105 = vsel %vm4086, %v4072, %v3671
      %v4106 = vsel %vm4086, %v4073, %v3673
      %v4107 = vsel %vm4086, %v4074, %v3675
      %v4108 = vsel %vm4086, %v4075, %v3677
      %v4109 = vsel %vm4086, %v4076, %v3679
      %v4110 = vsel %vm4086, %v4077, %v3681
      %v4111 = vsel %vm4086, %v4078, %v3683
      %v4112 = vsel %vm4086, %v4079, %v3685
      %v4113 = vsel %vm4086, %v4080, %v3687
      %v4114 = vsel %vm4086, %v4081, %v3689
      %v4115 = vsel %vm4086, %v4082, %v3691
      %v4116 = vsel %vm4086, %v4083, %v3693
      %v4117 = vsel %vm4086, %v4084, %v3695
      %v4118 = vsel %vm4086, %v4085, %v3697
      %vm4119 = vcmask 982016
      %v4120 = vsel %vm4119, %v4087, %v3731
      %v4121 = vsel %vm4119, %v4088, %v3733
      %v4122 = vsel %vm4119, %v4089, %v3735
      %v4123 = vsel %vm4119, %v4090, %v3737
      %v4124 = vsel %vm4119, %v4091, %v3739
      %v4125 = vsel %vm4119, %v4092, %v3741
      %v4126 = vsel %vm4119, %v4093, %v3743
      %v4127 = vsel %vm4119, %v4094, %v3745
      %v4128 = vsel %vm4119, %v4095, %v3747
      %v4129 = vsel %vm4119, %v4096, %v3749
      %v4130 = vsel %vm4119, %v4097, %v3751
      %v4131 = vsel %vm4119, %v4098, %v3753
      %v4132 = vsel %vm4119, %v4099, %v3755
      %v4133 = vsel %vm4119, %v4100, %v3757
      %v4134 = vsel %vm4119, %v4101, %v3759
      %v4135 = vsel %vm4119, %v4102, %v3761
      %v4136 = vsel %vm4119, %v4103, %v3763
      %v4137 = vsel %vm4119, %v4104, %v3765
      %v4138 = vsel %vm4119, %v4105, %v3767
      %v4139 = vsel %vm4119, %v4106, %v3769
      %v4140 = vsel %vm4119, %v4107, %v3771
      %v4141 = vsel %vm4119, %v4108, %v3773
      %v4142 = vsel %vm4119, %v4109, %v3775
      %v4143 = vsel %vm4119, %v4110, %v3777
      %v4144 = vsel %vm4119, %v4111, %v3779
      %v4145 = vsel %vm4119, %v4112, %v3781
      %v4146 = vsel %vm4119, %v4113, %v3783
      %v4147 = vsel %vm4119, %v4114, %v3785
      %v4148 = vsel %vm4119, %v4115, %v3787
      %v4149 = vsel %vm4119, %v4116, %v3789
      %v4150 = vsel %vm4119, %v4117, %v3791
      %v4151 = vsel %vm4119, %v4118, %v3793
      %v4152 = vsel %vm307, %v2839, %v3827
      %v4153 = vsel %vm307, %v2840, %v3829
      %v4154 = vsel %vm307, %v2843, %v3831
      %v4155 = vsel %vm307, %v2844, %v3833
      %v4156 = vsel %vm307, %v2847, %v3835
      %v4157 = vsel %vm307, %v2848, %v3837
      %v4158 = vsel %vm307, %v2851, %v3839
      %v4159 = vsel %vm307, %v2852, %v3841
      %v4160 = vsel %vm307, %v2855, %v3843
      %v4161 = vsel %vm307, %v2856, %v3845
      %v4162 = vsel %vm307, %v2859, %v3847
      %v4163 = vsel %vm307, %v2860, %v3849
      %v4164 = vsel %vm307, %v2863, %v3851
      %v4165 = vsel %vm307, %v2864, %v3853
      %v4166 = vsel %vm307, %v2867, %v3855
      %v4167 = vsel %vm307, %v2868, %v3857
      %v4168 = vsel %vm307, %v2871, %v3859
      %v4169 = vsel %vm307, %v2872, %v3861
      %v4170 = vsel %vm307, %v2875, %v3863
      %v4171 = vsel %vm307, %v2876, %v3865
      %v4172 = vsel %vm307, %v2879, %v3867
      %v4173 = vsel %vm307, %v2880, %v3869
      %v4174 = vsel %vm307, %v2883, %v3871
      %v4175 = vsel %vm307, %v2884, %v3873
      %v4176 = vsel %vm307, %v2887, %v3875
      %v4177 = vsel %vm307, %v2888, %v3877
      %v4178 = vsel %vm307, %v2891, %v3879
      %v4179 = vsel %vm307, %v2892, %v3881
      %v4180 = vsel %vm307, %v2895, %v3883
      %v4181 = vsel %vm307, %v2896, %v3885
      %v4182 = vsel %vm307, %v2899, %v3887
      %v4183 = vsel %vm307, %v2900, %v3889
      %v4184 = vpack.c.bf16 %v4121, %v4120
      %v4185 = vpack.c.bf16 %v4153, %v4152
      %v4186 = vpack.c.bf16 %v4123, %v4122
      %v4187 = vpack.c.bf16 %v4155, %v4154
      %v4188 = vpack.c.bf16 %v4125, %v4124
      %v4189 = vpack.c.bf16 %v4157, %v4156
      %v4190 = vpack.c.bf16 %v4127, %v4126
      %v4191 = vpack.c.bf16 %v4159, %v4158
      %v4192 = vpack.c.bf16 %v4129, %v4128
      %v4193 = vpack.c.bf16 %v4161, %v4160
      %v4194 = vpack.c.bf16 %v4131, %v4130
      %v4195 = vpack.c.bf16 %v4163, %v4162
      %v4196 = vpack.c.bf16 %v4133, %v4132
      %v4197 = vpack.c.bf16 %v4165, %v4164
      %v4198 = vpack.c.bf16 %v4135, %v4134
      %v4199 = vpack.c.bf16 %v4167, %v4166
      %v4200 = vpack.c.bf16 %v4137, %v4136
      %v4201 = vpack.c.bf16 %v4169, %v4168
      %v4202 = vpack.c.bf16 %v4139, %v4138
      %v4203 = vpack.c.bf16 %v4171, %v4170
      %v4204 = vpack.c.bf16 %v4141, %v4140
      %v4205 = vpack.c.bf16 %v4173, %v4172
      %v4206 = vpack.c.bf16 %v4143, %v4142
      %v4207 = vpack.c.bf16 %v4175, %v4174
      %v4208 = vpack.c.bf16 %v4145, %v4144
      %v4209 = vpack.c.bf16 %v4177, %v4176
      %v4210 = vpack.c.bf16 %v4147, %v4146
      %v4211 = vpack.c.bf16 %v4179, %v4178
      %v4212 = vpack.c.bf16 %v4149, %v4148
      %v4213 = vpack.c.bf16 %v4181, %v4180
      %v4214 = vpack.c.bf16 %v4151, %v4150
      %v4215 = vpack.c.bf16 %v4183, %v4182
      %v4216 = vld [vmem:[%s4] sm:$0xf]
      %v4217 = vld [vmem:[%s4 + $0x4] sm:$0xf]
      %v4218 = vld [vmem:[%s4 + $0x8] sm:$0xf]
      %v4219 = vld [vmem:[%s4 + $0xc] sm:$0xf]
      %v4220 = vld [vmem:[%s4 + $0x10] sm:$0xf]
      %v4221 = vld [vmem:[%s4 + $0x14] sm:$0xf]
      %v4222 = vld [vmem:[%s4 + $0x18] sm:$0xf]
      %v4223 = vld [vmem:[%s4 + $0x1c] sm:$0xf]
      %v4224 = vld [vmem:[%s4 + $0x20] sm:$0xf]
      %v4225 = vld [vmem:[%s4 + $0x24] sm:$0xf]
      %v4226 = vld [vmem:[%s4 + $0x28] sm:$0xf]
      %v4227 = vld [vmem:[%s4 + $0x2c] sm:$0xf]
      %v4228 = vld [vmem:[%s4 + $0x30] sm:$0xf]
      %v4229 = vld [vmem:[%s4 + $0x34] sm:$0xf]
      %v4230 = vld [vmem:[%s4 + $0x38] sm:$0xf]
      %v4231 = vld [vmem:[%s4 + $0x3c] sm:$0xf]
      %v4232 = vld [vmem:[%s4 + $0x40] sm:$0xf]
      %v4233 = vld [vmem:[%s4 + $0x44] sm:$0xf]
      %v4234 = vld [vmem:[%s5] sm:$0x1]
      %v4236 = vlaneseq
      %v4237 = vshrl.u32 %v4236, 7
      %v4238 = vsub.s32 0, %v4237
      %v4239 = vrot.slane %v4234, %v4238
      %v4259 = vunpack.c.l.b16 %v4216
      %v4260 = vunpack.c.l.b16 %v4217
      %v4261 = vunpack.c.l.b16 %v4218
      %v4262 = vunpack.c.l.b16 %v4219
      %v4263 = vunpack.c.l.b16 %v4220
      %v4264 = vunpack.c.l.b16 %v4221
      %v4265 = vunpack.c.l.b16 %v4222
      %v4266 = vunpack.c.l.b16 %v4223
      %v4267 = vunpack.c.l.b16 %v4224
      %v4268 = vunpack.c.l.b16 %v4225
      %v4269 = vunpack.c.l.b16 %v4226
      %v4270 = vunpack.c.l.b16 %v4227
      %v4271 = vunpack.c.l.b16 %v4228
      %v4272 = vunpack.c.l.b16 %v4229
      %v4273 = vunpack.c.l.b16 %v4230
      %v4274 = vunpack.c.l.b16 %v4231
      %v4275 = vunpack.c.l.b16 %v4232
      %v4276 = vunpack.c.l.b16 %v4233
      %v4277 = vpack.c.b16 %v4260, %v4259
      %v4278 = vpack.c.b16 %v4262, %v4261
      %v4279 = vpack.c.b16 %v4264, %v4263
      %v4280 = vpack.c.b16 %v4266, %v4265
      %v4281 = vpack.c.b16 %v4268, %v4267
      %v4282 = vpack.c.b16 %v4270, %v4269
      %v4283 = vpack.c.b16 %v4272, %v4271
      %v4284 = vpack.c.b16 %v4274, %v4273
      %v4285 = vpack.c.b16 %v4276, %v4275
      %v4296 = vsel %vm1603, %v4185, 0
      %v4299 = vsel %vm1603, %v4187, 0
      %v4302 = vsel %vm1603, %v4189, 0
      %v4305 = vsel %vm1603, %v4191, 0
      %v4308 = vsel %vm1603, %v4193, 0
      %v4311 = vsel %vm1603, %v4195, 0
      %v4314 = vsel %vm1603, %v4197, 0
      %v4317 = vsel %vm1603, %v4199, 0
      %v4320 = vsel %vm1603, %v4201, 0
      %v4323 = vsel %vm1603, %v4203, 0
      %v4326 = vsel %vm1603, %v4205, 0
      %v4329 = vsel %vm1603, %v4207, 0
      %v4332 = vsel %vm1603, %v4209, 0
      %v4335 = vsel %vm1603, %v4211, 0
      %v4338 = vsel %vm1603, %v4213, 0
      %v4341 = vsel %vm1603, %v4215, 0
      %4343 = vmatprep.subr.bf16.mxu0 0
      %4344 = vmatpush1.bf16.msra.mxu0 %v4277
      %4345 = vmatprep.subr.bf16.mxu0 0
      %4346 = vmatpush1.bf16.msra.mxu0 %v4278
      %4347 = vmatprep.subr.bf16.mxu0 0
      %4348 = vmatpush1.bf16.msra.mxu0 %v4279
      %4349 = vmatprep.subr.bf16.mxu0 0
      %4350 = vmatpush1.bf16.msra.mxu0 %v4280
      %4351 = vmatprep.subr.bf16.mxu0 0
      %4352 = vmatpush1.bf16.msra.mxu0 %v4281
      %4353 = vmatprep.subr.bf16.mxu0 0
      %4354 = vmatpush1.bf16.msra.mxu0 %v4282
      %4355 = vmatprep.subr.bf16.mxu0 0
      %4356 = vmatpush1.bf16.msra.mxu0 %v4283
      %4357 = vmatprep.subr.bf16.mxu0 0
      %4358 = vmatpush1.bf16.msra.mxu0 %v4284
      %4359 = vmatprep.subr.bf16.mxu0 0
      %4360 = vmatpush1.bf16.msra.mxu0 %v4285
      %4361 = vmatprep.subr.bf16.mxu0 0
      %4362 = vmatpush1.bf16.msra.mxu0 0
      %4363 = vmatprep.subr.bf16.mxu0 0
      %4364 = vmatpush1.bf16.msra.mxu0 0
      %4365 = vmatprep.subr.bf16.mxu0 0
      %4366 = vmatpush1.bf16.msra.mxu0 0
      %4367 = vmatprep.subr.bf16.mxu0 0
      %4368 = vmatpush1.bf16.msra.mxu0 0
      %4369 = vmatprep.subr.bf16.mxu0 0
      %4370 = vmatpush1.bf16.msra.mxu0 0
      %4371 = vmatprep.subr.bf16.mxu0 0
      %4372 = vmatpush1.bf16.msra.mxu0 0
      %4373 = vmatprep.subr.bf16.mxu0 0
      %4374 = vmatpush1.bf16.msra.mxu0 0
      %4375 = vmatprep.mubr.bf16.mxu0 %v4296
      %4376 = vmatmul.mubr.bf16.gmra.mrb[0].mxu0 %v4184
      %v4377 = vpop.f32.mrb[0].mxu0
      %v4378 = vadd.f32 %v4239, %v4377
      %v4379 = vpop.f32.mrb[0].mxu0
      %v4380 = vpop.f32.mrb[0].mxu0
      %v4381 = vadd.f32 %v4239, %v4380
      %v4382 = vpop.f32.mrb[0].mxu0
      %4383 = vmatprep.mubr.bf16.mxu0 %v4299
      %4384 = vmatmul.mubr.bf16.gmra.mrb[0].mxu0 %v4186
      %v4385 = vpop.f32.mrb[0].mxu0
      %v4386 = vadd.f32 %v4239, %v4385
      %v4387 = vpop.f32.mrb[0].mxu0
      %v4388 = vpop.f32.mrb[0].mxu0
      %v4389 = vadd.f32 %v4239, %v4388
      %v4390 = vpop.f32.mrb[0].mxu0
      %4391 = vmatprep.mubr.bf16.mxu0 %v4302
      %4392 = vmatmul.mubr.bf16.gmra.mrb[0].mxu0 %v4188
      %v4393 = vpop.f32.mrb[0].mxu0
      %v4394 = vadd.f32 %v4239, %v4393
      %v4395 = vpop.f32.mrb[0].mxu0
      %v4396 = vpop.f32.mrb[0].mxu0
      %v4397 = vadd.f32 %v4239, %v4396
      %v4398 = vpop.f32.mrb[0].mxu0
      %4399 = vmatprep.mubr.bf16.mxu0 %v4305
      %4400 = vmatmul.mubr.bf16.gmra.mrb[0].mxu0 %v4190
      %v4401 = vpop.f32.mrb[0].mxu0
      %v4402 = vadd.f32 %v4239, %v4401
      %v4403 = vpop.f32.mrb[0].mxu0
      %v4404 = vpop.f32.mrb[0].mxu0
      %v4405 = vadd.f32 %v4239, %v4404
      %v4406 = vpop.f32.mrb[0].mxu0
      %4407 = vmatprep.mubr.bf16.mxu0 %v4308
      %4408 = vmatmul.mubr.bf16.gmra.mrb[0].mxu0 %v4192
      %v4409 = vpop.f32.mrb[0].mxu0
      %v4410 = vadd.f32 %v4239, %v4409
      %v4411 = vpop.f32.mrb[0].mxu0
      %v4412 = vpop.f32.mrb[0].mxu0
      %v4413 = vadd.f32 %v4239, %v4412
      %v4414 = vpop.f32.mrb[0].mxu0
      %4415 = vmatprep.mubr.bf16.mxu0 %v4311
      %4416 = vmatmul.mubr.bf16.gmra.mrb[0].mxu0 %v4194
      %v4417 = vpop.f32.mrb[0].mxu0
      %v4418 = vadd.f32 %v4239, %v4417
      %v4419 = vpop.f32.mrb[0].mxu0
      %v4420 = vpop.f32.mrb[0].mxu0
      %v4421 = vadd.f32 %v4239, %v4420
      %v4422 = vpop.f32.mrb[0].mxu0
      %4423 = vmatprep.mubr.bf16.mxu0 %v4314
      %4424 = vmatmul.mubr.bf16.gmra.mrb[0].mxu0 %v4196
      %v4425 = vpop.f32.mrb[0].mxu0
      %v4426 = vadd.f32 %v4239, %v4425
      %v4427 = vpop.f32.mrb[0].mxu0
      %v4428 = vpop.f32.mrb[0].mxu0
      %v4429 = vadd.f32 %v4239, %v4428
      %v4430 = vpop.f32.mrb[0].mxu0
      %4431 = vmatprep.mubr.bf16.mxu0 %v4317
      %4432 = vmatmul.mubr.bf16.gmra.mrb[0].mxu0 %v4198
      %v4433 = vpop.f32.mrb[0].mxu0
      %v4434 = vadd.f32 %v4239, %v4433
      %v4435 = vpop.f32.mrb[0].mxu0
      %v4436 = vpop.f32.mrb[0].mxu0
      %v4437 = vadd.f32 %v4239, %v4436
      %v4438 = vpop.f32.mrb[0].mxu0
      %4439 = vmatprep.mubr.bf16.mxu0 %v4320
      %4440 = vmatmul.mubr.bf16.gmra.mrb[0].mxu0 %v4200
      %v4441 = vpop.f32.mrb[0].mxu0
      %v4442 = vadd.f32 %v4239, %v4441
      %v4443 = vpop.f32.mrb[0].mxu0
      %v4444 = vpop.f32.mrb[0].mxu0
      %v4445 = vadd.f32 %v4239, %v4444
      %v4446 = vpop.f32.mrb[0].mxu0
      %4447 = vmatprep.mubr.bf16.mxu0 %v4323
      %4448 = vmatmul.mubr.bf16.gmra.mrb[0].mxu0 %v4202
      %v4449 = vpop.f32.mrb[0].mxu0
      %v4450 = vadd.f32 %v4239, %v4449
      %v4451 = vpop.f32.mrb[0].mxu0
      %v4452 = vpop.f32.mrb[0].mxu0
      %v4453 = vadd.f32 %v4239, %v4452
      %v4454 = vpop.f32.mrb[0].mxu0
      %4455 = vmatprep.mubr.bf16.mxu0 %v4326
      %4456 = vmatmul.mubr.bf16.gmra.mrb[0].mxu0 %v4204
      %v4457 = vpop.f32.mrb[0].mxu0
      %v4458 = vadd.f32 %v4239, %v4457
      %v4459 = vpop.f32.mrb[0].mxu0
      %v4460 = vpop.f32.mrb[0].mxu0
      %v4461 = vadd.f32 %v4239, %v4460
      %v4462 = vpop.f32.mrb[0].mxu0
      %4463 = vmatprep.mubr.bf16.mxu0 %v4329
      %4464 = vmatmul.mubr.bf16.gmra.mrb[0].mxu0 %v4206
      %v4465 = vpop.f32.mrb[0].mxu0
      %v4466 = vadd.f32 %v4239, %v4465
      %v4467 = vpop.f32.mrb[0].mxu0
      %v4468 = vpop.f32.mrb[0].mxu0
      %v4469 = vadd.f32 %v4239, %v4468
      %v4470 = vpop.f32.mrb[0].mxu0
      %4471 = vmatprep.mubr.bf16.mxu0 %v4332
      %4472 = vmatmul.mubr.bf16.gmra.mrb[0].mxu0 %v4208
      %v4473 = vpop.f32.mrb[0].mxu0
      %v4474 = vadd.f32 %v4239, %v4473
      %v4475 = vpop.f32.mrb[0].mxu0
      %v4476 = vpop.f32.mrb[0].mxu0
      %v4477 = vadd.f32 %v4239, %v4476
      %v4478 = vpop.f32.mrb[0].mxu0
      %4479 = vmatprep.mubr.bf16.mxu0 %v4335
      %4480 = vmatmul.mubr.bf16.gmra.mrb[0].mxu0 %v4210
      %v4481 = vpop.f32.mrb[0].mxu0
      %v4482 = vadd.f32 %v4239, %v4481
      %v4483 = vpop.f32.mrb[0].mxu0
      %v4484 = vpop.f32.mrb[0].mxu0
      %v4485 = vadd.f32 %v4239, %v4484
      %v4486 = vpop.f32.mrb[0].mxu0
      %4487 = vmatprep.mubr.bf16.mxu0 %v4338
      %4488 = vmatmul.mubr.bf16.gmra.mrb[0].mxu0 %v4212
      %v4489 = vpop.f32.mrb[0].mxu0
      %v4490 = vadd.f32 %v4239, %v4489
      %v4491 = vpop.f32.mrb[0].mxu0
      %v4492 = vpop.f32.mrb[0].mxu0
      %v4493 = vadd.f32 %v4239, %v4492
      %v4494 = vpop.f32.mrb[0].mxu0
      %4495 = vmatprep.mubr.bf16.mxu0 %v4341
      %4496 = vmatmul.mubr.bf16.gmra.mrb[0].mxu0 %v4214
      %v4497 = vpop.f32.mrb[0].mxu0
      %v4498 = vadd.f32 %v4239, %v4497
      %v4499 = vpop.f32.mrb[0].mxu0
      %v4500 = vpop.f32.mrb[0].mxu0
      %v4501 = vadd.f32 %v4239, %v4500
      %v4502 = vpop.f32.mrb[0].mxu0
      %4503 = vdwg.mxu0
      %vm4504 = vcmp.ge.f32.partialorder %v4378, 0.0
      %vm4505 = vcmp.ge.f32.partialorder %v4381, 0.0
      %vm4506 = vcmp.ge.f32.partialorder %v4386, 0.0
      %vm4507 = vcmp.ge.f32.partialorder %v4389, 0.0
      %vm4508 = vcmp.ge.f32.partialorder %v4394, 0.0
      %vm4509 = vcmp.ge.f32.partialorder %v4397, 0.0
      %vm4510 = vcmp.ge.f32.partialorder %v4402, 0.0
      %vm4511 = vcmp.ge.f32.partialorder %v4405, 0.0
      %vm4512 = vcmp.ge.f32.partialorder %v4410, 0.0
      %vm4513 = vcmp.ge.f32.partialorder %v4413, 0.0
      %vm4514 = vcmp.ge.f32.partialorder %v4418, 0.0
      %vm4515 = vcmp.ge.f32.partialorder %v4421, 0.0
      %vm4516 = vcmp.ge.f32.partialorder %v4426, 0.0
      %vm4517 = vcmp.ge.f32.partialorder %v4429, 0.0
      %vm4518 = vcmp.ge.f32.partialorder %v4434, 0.0
      %vm4519 = vcmp.ge.f32.partialorder %v4437, 0.0
      %vm4520 = vcmp.ge.f32.partialorder %v4442, 0.0
      %vm4521 = vcmp.ge.f32.partialorder %v4445, 0.0
      %vm4522 = vcmp.ge.f32.partialorder %v4450, 0.0
      %vm4523 = vcmp.ge.f32.partialorder %v4453, 0.0
      %vm4524 = vcmp.ge.f32.partialorder %v4458, 0.0
      %vm4525 = vcmp.ge.f32.partialorder %v4461, 0.0
      %vm4526 = vcmp.ge.f32.partialorder %v4466, 0.0
      %vm4527 = vcmp.ge.f32.partialorder %v4469, 0.0
      %vm4528 = vcmp.ge.f32.partialorder %v4474, 0.0
      %vm4529 = vcmp.ge.f32.partialorder %v4477, 0.0
      %vm4530 = vcmp.ge.f32.partialorder %v4482, 0.0
      %vm4531 = vcmp.ge.f32.partialorder %v4485, 0.0
      %vm4532 = vcmp.ge.f32.partialorder %v4490, 0.0
      %vm4533 = vcmp.ge.f32.partialorder %v4493, 0.0
      %vm4534 = vcmp.ge.f32.partialorder %v4498, 0.0
      %vm4535 = vcmp.ge.f32.partialorder %v4501, 0.0
      %v4536 = vmul.f32 %v4378, 0.2
      %v4537 = vmul.f32 %v4381, 0.2
      %v4538 = vmul.f32 %v4386, 0.2
      %v4539 = vmul.f32 %v4389, 0.2
      %v4540 = vmul.f32 %v4394, 0.2
      %v4541 = vmul.f32 %v4397, 0.2
      %v4542 = vmul.f32 %v4402, 0.2
      %v4543 = vmul.f32 %v4405, 0.2
      %v4544 = vmul.f32 %v4410, 0.2
      %v4545 = vmul.f32 %v4413, 0.2
      %v4546 = vmul.f32 %v4418, 0.2
      %v4547 = vmul.f32 %v4421, 0.2
      %v4548 = vmul.f32 %v4426, 0.2
      %v4549 = vmul.f32 %v4429, 0.2
      %v4550 = vmul.f32 %v4434, 0.2
      %v4551 = vmul.f32 %v4437, 0.2
      %v4552 = vmul.f32 %v4442, 0.2
      %v4553 = vmul.f32 %v4445, 0.2
      %v4554 = vmul.f32 %v4450, 0.2
      %v4555 = vmul.f32 %v4453, 0.2
      %v4556 = vmul.f32 %v4458, 0.2
      %v4557 = vmul.f32 %v4461, 0.2
      %v4558 = vmul.f32 %v4466, 0.2
      %v4559 = vmul.f32 %v4469, 0.2
      %v4560 = vmul.f32 %v4474, 0.2
      %v4561 = vmul.f32 %v4477, 0.2
      %v4562 = vmul.f32 %v4482, 0.2
      %v4563 = vmul.f32 %v4485, 0.2
      %v4564 = vmul.f32 %v4490, 0.2
      %v4565 = vmul.f32 %v4493, 0.2
      %v4566 = vmul.f32 %v4498, 0.2
      %v4567 = vmul.f32 %v4501, 0.2
      %v4568 = vsel %vm4504, %v4378, %v4536
      %v4569 = vsel %vm4505, %v4381, %v4537
      %v4570 = vsel %vm4506, %v4386, %v4538
      %v4571 = vsel %vm4507, %v4389, %v4539
      %v4572 = vsel %vm4508, %v4394, %v4540
      %v4573 = vsel %vm4509, %v4397, %v4541
      %v4574 = vsel %vm4510, %v4402, %v4542
      %v4575 = vsel %vm4511, %v4405, %v4543
      %v4576 = vsel %vm4512, %v4410, %v4544
      %v4577 = vsel %vm4513, %v4413, %v4545
      %v4578 = vsel %vm4514, %v4418, %v4546
      %v4579 = vsel %vm4515, %v4421, %v4547
      %v4580 = vsel %vm4516, %v4426, %v4548
      %v4581 = vsel %vm4517, %v4429, %v4549
      %v4582 = vsel %vm4518, %v4434, %v4550
      %v4583 = vsel %vm4519, %v4437, %v4551
      %v4584 = vsel %vm4520, %v4442, %v4552
      %v4585 = vsel %vm4521, %v4445, %v4553
      %v4586 = vsel %vm4522, %v4450, %v4554
      %v4587 = vsel %vm4523, %v4453, %v4555
      %v4588 = vsel %vm4524, %v4458, %v4556
      %v4589 = vsel %vm4525, %v4461, %v4557
      %v4590 = vsel %vm4526, %v4466, %v4558
      %v4591 = vsel %vm4527, %v4469, %v4559
      %v4592 = vsel %vm4528, %v4474, %v4560
      %v4593 = vsel %vm4529, %v4477, %v4561
      %v4594 = vsel %vm4530, %v4482, %v4562
      %v4595 = vsel %vm4531, %v4485, %v4563
      %v4596 = vsel %vm4532, %v4490, %v4564
      %v4597 = vsel %vm4533, %v4493, %v4565
      %v4598 = vsel %vm4534, %v4498, %v4566
      %v4599 = vsel %vm4535, %v4501, %v4567
      %4632 = vrot.lane.b32.xlu0 %v2171, 8
      %v4633 = vpop.permute.xlu0 %4632
      %4634 = vrot.lane.b32.xlu0 %v2172, 8
      %v4635 = vpop.permute.xlu0 %4634
      %4636 = vrot.lane.b32.xlu0 %v2173, 8
      %v4637 = vpop.permute.xlu0 %4636
      %4638 = vrot.lane.b32.xlu0 %v2174, 8
      %v4639 = vpop.permute.xlu0 %4638
      %4640 = vrot.lane.b32.xlu0 %v2175, 8
      %v4641 = vpop.permute.xlu0 %4640
      %4642 = vrot.lane.b32.xlu0 %v2176, 8
      %v4643 = vpop.permute.xlu0 %4642
      %4644 = vrot.lane.b32.xlu0 %v2177, 8
      %v4645 = vpop.permute.xlu0 %4644
      %4646 = vrot.lane.b32.xlu0 %v2178, 8
      %v4647 = vpop.permute.xlu0 %4646
      %4648 = vrot.lane.b32.xlu0 %v2179, 8
      %v4649 = vpop.permute.xlu0 %4648
      %4650 = vrot.lane.b32.xlu0 %v2180, 8
      %v4651 = vpop.permute.xlu0 %4650
      %4652 = vrot.lane.b32.xlu0 %v2181, 8
      %v4653 = vpop.permute.xlu0 %4652
      %4654 = vrot.lane.b32.xlu0 %v2182, 8
      %v4655 = vpop.permute.xlu0 %4654
      %4656 = vrot.lane.b32.xlu0 %v2183, 8
      %v4657 = vpop.permute.xlu0 %4656
      %4658 = vrot.lane.b32.xlu0 %v2184, 8
      %v4659 = vpop.permute.xlu0 %4658
      %4660 = vrot.lane.b32.xlu0 %v2185, 8
      %v4661 = vpop.permute.xlu0 %4660
      %4662 = vrot.lane.b32.xlu0 %v2186, 8
      %v4663 = vpop.permute.xlu0 %4662
      %4664 = vrot.lane.b32.xlu0 %v2187, 8
      %v4665 = vpop.permute.xlu0 %4664
      %4666 = vrot.lane.b32.xlu0 %v2188, 8
      %v4667 = vpop.permute.xlu0 %4666
      %4668 = vrot.lane.b32.xlu0 %v2189, 8
      %v4669 = vpop.permute.xlu0 %4668
      %4670 = vrot.lane.b32.xlu0 %v2190, 8
      %v4671 = vpop.permute.xlu0 %4670
      %4672 = vrot.lane.b32.xlu0 %v2191, 8
      %v4673 = vpop.permute.xlu0 %4672
      %4674 = vrot.lane.b32.xlu0 %v2192, 8
      %v4675 = vpop.permute.xlu0 %4674
      %4676 = vrot.lane.b32.xlu0 %v2193, 8
      %v4677 = vpop.permute.xlu0 %4676
      %4678 = vrot.lane.b32.xlu0 %v2194, 8
      %v4679 = vpop.permute.xlu0 %4678
      %4680 = vrot.lane.b32.xlu0 %v2195, 8
      %v4681 = vpop.permute.xlu0 %4680
      %4682 = vrot.lane.b32.xlu0 %v2196, 8
      %v4683 = vpop.permute.xlu0 %4682
      %4684 = vrot.lane.b32.xlu0 %v2197, 8
      %v4685 = vpop.permute.xlu0 %4684
      %4686 = vrot.lane.b32.xlu0 %v2198, 8
      %v4687 = vpop.permute.xlu0 %4686
      %4688 = vrot.lane.b32.xlu0 %v2199, 8
      %v4689 = vpop.permute.xlu0 %4688
      %4690 = vrot.lane.b32.xlu0 %v2200, 8
      %v4691 = vpop.permute.xlu0 %4690
      %4692 = vrot.lane.b32.xlu0 %v2201, 8
      %v4693 = vpop.permute.xlu0 %4692
      %4694 = vrot.lane.b32.xlu0 %v2202, 8
      %v4695 = vpop.permute.xlu0 %4694
      %4760 = vrot.lane.b32.xlu0 %v4568, 16
      %v4761 = vpop.permute.xlu0 %4760
      %4762 = vrot.lane.b32.xlu0 %v4569, 16
      %v4763 = vpop.permute.xlu0 %4762
      %4764 = vrot.lane.b32.xlu0 %v4570, 16
      %v4765 = vpop.permute.xlu0 %4764
      %4766 = vrot.lane.b32.xlu0 %v4571, 16
      %v4767 = vpop.permute.xlu0 %4766
      %4768 = vrot.lane.b32.xlu0 %v4572, 16
      %v4769 = vpop.permute.xlu0 %4768
      %4770 = vrot.lane.b32.xlu0 %v4573, 16
      %v4771 = vpop.permute.xlu0 %4770
      %4772 = vrot.lane.b32.xlu0 %v4574, 16
      %v4773 = vpop.permute.xlu0 %4772
      %4774 = vrot.lane.b32.xlu0 %v4575, 16
      %v4775 = vpop.permute.xlu0 %4774
      %4776 = vrot.lane.b32.xlu0 %v4576, 16
      %v4777 = vpop.permute.xlu0 %4776
      %4778 = vrot.lane.b32.xlu0 %v4577, 16
      %v4779 = vpop.permute.xlu0 %4778
      %4780 = vrot.lane.b32.xlu0 %v4578, 16
      %v4781 = vpop.permute.xlu0 %4780
      %4782 = vrot.lane.b32.xlu0 %v4579, 16
      %v4783 = vpop.permute.xlu0 %4782
      %4784 = vrot.lane.b32.xlu0 %v4580, 16
      %v4785 = vpop.permute.xlu0 %4784
      %4786 = vrot.lane.b32.xlu0 %v4581, 16
      %v4787 = vpop.permute.xlu0 %4786
      %4788 = vrot.lane.b32.xlu0 %v4582, 16
      %v4789 = vpop.permute.xlu0 %4788
      %4790 = vrot.lane.b32.xlu0 %v4583, 16
      %v4791 = vpop.permute.xlu0 %4790
      %4792 = vrot.lane.b32.xlu0 %v4584, 16
      %v4793 = vpop.permute.xlu0 %4792
      %4794 = vrot.lane.b32.xlu0 %v4585, 16
      %v4795 = vpop.permute.xlu0 %4794
      %4796 = vrot.lane.b32.xlu0 %v4586, 16
      %v4797 = vpop.permute.xlu0 %4796
      %4798 = vrot.lane.b32.xlu0 %v4587, 16
      %v4799 = vpop.permute.xlu0 %4798
      %4800 = vrot.lane.b32.xlu0 %v4588, 16
      %v4801 = vpop.permute.xlu0 %4800
      %4802 = vrot.lane.b32.xlu0 %v4589, 16
      %v4803 = vpop.permute.xlu0 %4802
      %4804 = vrot.lane.b32.xlu0 %v4590, 16
      %v4805 = vpop.permute.xlu0 %4804
      %4806 = vrot.lane.b32.xlu0 %v4591, 16
      %v4807 = vpop.permute.xlu0 %4806
      %4808 = vrot.lane.b32.xlu0 %v4592, 16
      %v4809 = vpop.permute.xlu0 %4808
      %4810 = vrot.lane.b32.xlu0 %v4593, 16
      %v4811 = vpop.permute.xlu0 %4810
      %4812 = vrot.lane.b32.xlu0 %v4594, 16
      %v4813 = vpop.permute.xlu0 %4812
      %4814 = vrot.lane.b32.xlu0 %v4595, 16
      %v4815 = vpop.permute.xlu0 %4814
      %4816 = vrot.lane.b32.xlu0 %v4596, 16
      %v4817 = vpop.permute.xlu0 %4816
      %4818 = vrot.lane.b32.xlu0 %v4597, 16
      %v4819 = vpop.permute.xlu0 %4818
      %4820 = vrot.lane.b32.xlu0 %v4598, 16
      %v4821 = vpop.permute.xlu0 %4820
      %4822 = vrot.lane.b32.xlu0 %v4599, 16
      %v4823 = vpop.permute.xlu0 %4822
      %4888 = vrot.lane.b32.xlu0 %v2693, 24
      %v4889 = vpop.permute.xlu0 %4888
      %4890 = vrot.lane.b32.xlu0 %v2694, 24
      %v4891 = vpop.permute.xlu0 %4890
      %4892 = vrot.lane.b32.xlu0 %v2695, 24
      %v4893 = vpop.permute.xlu0 %4892
      %4894 = vrot.lane.b32.xlu0 %v2696, 24
      %v4895 = vpop.permute.xlu0 %4894
      %4896 = vrot.lane.b32.xlu0 %v2697, 24
      %v4897 = vpop.permute.xlu0 %4896
      %4898 = vrot.lane.b32.xlu0 %v2698, 24
      %v4899 = vpop.permute.xlu0 %4898
      %4900 = vrot.lane.b32.xlu0 %v2699, 24
      %v4901 = vpop.permute.xlu0 %4900
      %4902 = vrot.lane.b32.xlu0 %v2700, 24
      %v4903 = vpop.permute.xlu0 %4902
      %4904 = vrot.lane.b32.xlu0 %v2701, 24
      %v4905 = vpop.permute.xlu0 %4904
      %4906 = vrot.lane.b32.xlu0 %v2702, 24
      %v4907 = vpop.permute.xlu0 %4906
      %4908 = vrot.lane.b32.xlu0 %v2703, 24
      %v4909 = vpop.permute.xlu0 %4908
      %4910 = vrot.lane.b32.xlu0 %v2704, 24
      %v4911 = vpop.permute.xlu0 %4910
      %4912 = vrot.lane.b32.xlu0 %v2705, 24
      %v4913 = vpop.permute.xlu0 %4912
      %4914 = vrot.lane.b32.xlu0 %v2706, 24
      %v4915 = vpop.permute.xlu0 %4914
      %4916 = vrot.lane.b32.xlu0 %v2707, 24
      %v4917 = vpop.permute.xlu0 %4916
      %4918 = vrot.lane.b32.xlu0 %v2708, 24
      %v4919 = vpop.permute.xlu0 %4918
      %4920 = vrot.lane.b32.xlu0 %v2709, 24
      %v4921 = vpop.permute.xlu0 %4920
      %4922 = vrot.lane.b32.xlu0 %v2710, 24
      %v4923 = vpop.permute.xlu0 %4922
      %4924 = vrot.lane.b32.xlu0 %v2711, 24
      %v4925 = vpop.permute.xlu0 %4924
      %4926 = vrot.lane.b32.xlu0 %v2712, 24
      %v4927 = vpop.permute.xlu0 %4926
      %4928 = vrot.lane.b32.xlu0 %v2713, 24
      %v4929 = vpop.permute.xlu0 %4928
      %4930 = vrot.lane.b32.xlu0 %v2714, 24
      %v4931 = vpop.permute.xlu0 %4930
      %4932 = vrot.lane.b32.xlu0 %v2715, 24
      %v4933 = vpop.permute.xlu0 %4932
      %4934 = vrot.lane.b32.xlu0 %v2716, 24
      %v4935 = vpop.permute.xlu0 %4934
      %4936 = vrot.lane.b32.xlu0 %v2717, 24
      %v4937 = vpop.permute.xlu0 %4936
      %4938 = vrot.lane.b32.xlu0 %v2718, 24
      %v4939 = vpop.permute.xlu0 %4938
      %4940 = vrot.lane.b32.xlu0 %v2719, 24
      %v4941 = vpop.permute.xlu0 %4940
      %4942 = vrot.lane.b32.xlu0 %v2720, 24
      %v4943 = vpop.permute.xlu0 %4942
      %4944 = vrot.lane.b32.xlu0 %v2721, 24
      %v4945 = vpop.permute.xlu0 %4944
      %4946 = vrot.lane.b32.xlu0 %v2722, 24
      %v4947 = vpop.permute.xlu0 %4946
      %4948 = vrot.lane.b32.xlu0 %v2723, 24
      %v4949 = vpop.permute.xlu0 %4948
      %4950 = vrot.lane.b32.xlu0 %v2724, 24
      %v4951 = vpop.permute.xlu0 %4950
      %v4984 = vsel %vm307, %v450, %v4633
      %v4985 = vsel %vm307, %v451, %v4635
      %v4986 = vsel %vm307, %v454, %v4637
      %v4987 = vsel %vm307, %v455, %v4639
      %v4988 = vsel %vm307, %v458, %v4641
      %v4989 = vsel %vm307, %v459, %v4643
      %v4990 = vsel %vm307, %v462, %v4645
      %v4991 = vsel %vm307, %v463, %v4647
      %v4992 = vsel %vm307, %v466, %v4649
      %v4993 = vsel %vm307, %v467, %v4651
      %v4994 = vsel %vm307, %v470, %v4653
      %v4995 = vsel %vm307, %v471, %v4655
      %v4996 = vsel %vm307, %v474, %v4657
      %v4997 = vsel %vm307, %v475, %v4659
      %v4998 = vsel %vm307, %v478, %v4661
      %v4999 = vsel %vm307, %v479, %v4663
      %v5000 = vsel %vm307, %v482, %v4665
      %v5001 = vsel %vm307, %v483, %v4667
      %v5002 = vsel %vm307, %v486, %v4669
      %v5003 = vsel %vm307, %v487, %v4671
      %v5004 = vsel %vm307, %v490, %v4673
      %v5005 = vsel %vm307, %v491, %v4675
      %v5006 = vsel %vm307, %v494, %v4677
      %v5007 = vsel %vm307, %v495, %v4679
      %v5008 = vsel %vm307, %v498, %v4681
      %v5009 = vsel %vm307, %v499, %v4683
      %v5010 = vsel %vm307, %v502, %v4685
      %v5011 = vsel %vm307, %v503, %v4687
      %v5012 = vsel %vm307, %v506, %v4689
      %v5013 = vsel %vm307, %v507, %v4691
      %v5014 = vsel %vm307, %v510, %v4693
      %v5015 = vsel %vm307, %v511, %v4695
      %v5016 = vsel %vm1603, %v4984, %v4761
      %v5017 = vsel %vm1603, %v4985, %v4763
      %v5018 = vsel %vm1603, %v4986, %v4765
      %v5019 = vsel %vm1603, %v4987, %v4767
      %v5020 = vsel %vm1603, %v4988, %v4769
      %v5021 = vsel %vm1603, %v4989, %v4771
      %v5022 = vsel %vm1603, %v4990, %v4773
      %v5023 = vsel %vm1603, %v4991, %v4775
      %v5024 = vsel %vm1603, %v4992, %v4777
      %v5025 = vsel %vm1603, %v4993, %v4779
      %v5026 = vsel %vm1603, %v4994, %v4781
      %v5027 = vsel %vm1603, %v4995, %v4783
      %v5028 = vsel %vm1603, %v4996, %v4785
      %v5029 = vsel %vm1603, %v4997, %v4787
      %v5030 = vsel %vm1603, %v4998, %v4789
      %v5031 = vsel %vm1603, %v4999, %v4791
      %v5032 = vsel %vm1603, %v5000, %v4793
      %v5033 = vsel %vm1603, %v5001, %v4795
      %v5034 = vsel %vm1603, %v5002, %v4797
      %v5035 = vsel %vm1603, %v5003, %v4799
      %v5036 = vsel %vm1603, %v5004, %v4801
      %v5037 = vsel %vm1603, %v5005, %v4803
      %v5038 = vsel %vm1603, %v5006, %v4805
      %v5039 = vsel %vm1603, %v5007, %v4807
      %v5040 = vsel %vm1603, %v5008, %v4809
      %v5041 = vsel %vm1603, %v5009, %v4811
      %v5042 = vsel %vm1603, %v5010, %v4813
      %v5043 = vsel %vm1603, %v5011, %v4815
      %v5044 = vsel %vm1603, %v5012, %v4817
      %v5045 = vsel %vm1603, %v5013, %v4819
      %v5046 = vsel %vm1603, %v5014, %v4821
      %v5047 = vsel %vm1603, %v5015, %v4823
      %v5048 = vsel %vm1636, %v5016, %v4889
      %v5049 = vsel %vm1636, %v5017, %v4891
      %v5050 = vsel %vm1636, %v5018, %v4893
      %v5051 = vsel %vm1636, %v5019, %v4895
      %v5052 = vsel %vm1636, %v5020, %v4897
      %v5053 = vsel %vm1636, %v5021, %v4899
      %v5054 = vsel %vm1636, %v5022, %v4901
      %v5055 = vsel %vm1636, %v5023, %v4903
      %v5056 = vsel %vm1636, %v5024, %v4905
      %v5057 = vsel %vm1636, %v5025, %v4907
      %v5058 = vsel %vm1636, %v5026, %v4909
      %v5059 = vsel %vm1636, %v5027, %v4911
      %v5060 = vsel %vm1636, %v5028, %v4913
      %v5061 = vsel %vm1636, %v5029, %v4915
      %v5062 = vsel %vm1636, %v5030, %v4917
      %v5063 = vsel %vm1636, %v5031, %v4919
      %v5064 = vsel %vm1636, %v5032, %v4921
      %v5065 = vsel %vm1636, %v5033, %v4923
      %v5066 = vsel %vm1636, %v5034, %v4925
      %v5067 = vsel %vm1636, %v5035, %v4927
      %v5068 = vsel %vm1636, %v5036, %v4929
      %v5069 = vsel %vm1636, %v5037, %v4931
      %v5070 = vsel %vm1636, %v5038, %v4933
      %v5071 = vsel %vm1636, %v5039, %v4935
      %v5072 = vsel %vm1636, %v5040, %v4937
      %v5073 = vsel %vm1636, %v5041, %v4939
      %v5074 = vsel %vm1636, %v5042, %v4941
      %v5075 = vsel %vm1636, %v5043, %v4943
      %v5076 = vsel %vm1636, %v5044, %v4945
      %v5077 = vsel %vm1636, %v5045, %v4947
      %v5078 = vsel %vm1636, %v5046, %v4949
      %v5079 = vsel %vm1636, %v5047, %v4951
      %v5080 = vld [vmem:[%s6] sm:$0xff]
      %v5081 = vld [vmem:[%s6 + $0x8] sm:$0xff]
      %v5082 = vld [vmem:[%s6 + $0x10] sm:$0xff]
      %v5083 = vld [vmem:[%s6 + $0x18] sm:$0xff]
      %v5084 = vld [vmem:[%s7] sm:$0x1]
      %v5086 = vlaneseq
      %v5087 = vshrl.u32 %v5086, 7
      %v5088 = vsub.s32 0, %v5087
      %v5089 = vrot.slane %v5084, %v5088
      %v5092 = vsel %vm1669, %v5048, 0
      %v5095 = vsel %vm1669, %v5049, 0
      %v5098 = vsel %vm1669, %v5050, 0
      %v5101 = vsel %vm1669, %v5051, 0
      %v5104 = vsel %vm1669, %v5052, 0
      %v5107 = vsel %vm1669, %v5053, 0
      %v5110 = vsel %vm1669, %v5054, 0
      %v5113 = vsel %vm1669, %v5055, 0
      %v5116 = vsel %vm1669, %v5056, 0
      %v5119 = vsel %vm1669, %v5057, 0
      %v5122 = vsel %vm1669, %v5058, 0
      %v5125 = vsel %vm1669, %v5059, 0
      %v5128 = vsel %vm1669, %v5060, 0
      %v5131 = vsel %vm1669, %v5061, 0
      %v5134 = vsel %vm1669, %v5062, 0
      %v5137 = vsel %vm1669, %v5063, 0
      %v5140 = vsel %vm1669, %v5064, 0
      %v5143 = vsel %vm1669, %v5065, 0
      %v5146 = vsel %vm1669, %v5066, 0
      %v5149 = vsel %vm1669, %v5067, 0
      %v5152 = vsel %vm1669, %v5068, 0
      %v5155 = vsel %vm1669, %v5069, 0
      %v5158 = vsel %vm1669, %v5070, 0
      %v5161 = vsel %vm1669, %v5071, 0
      %v5164 = vsel %vm1669, %v5072, 0
      %v5167 = vsel %vm1669, %v5073, 0
      %v5170 = vsel %vm1669, %v5074, 0
      %v5173 = vsel %vm1669, %v5075, 0
      %v5176 = vsel %vm1669, %v5076, 0
      %v5179 = vsel %vm1669, %v5077, 0
      %v5182 = vsel %vm1669, %v5078, 0
      %v5185 = vsel %vm1669, %v5079, 0
      %5187 = vmatprep.subr.mxu0 0.0
      %5188 = vmatpush1.msra.mxu0 %v5080
      %5189 = vmatprep.subr.mxu0 0.0
      %5190 = vmatpush1.msra.mxu0 %v5081
      %5191 = vmatprep.subr.mxu0 0.0
      %5192 = vmatpush1.msra.mxu0 %v5082
      %5193 = vmatprep.subr.mxu0 0.0
      %5194 = vmatpush1.msra.mxu0 %v5083
      %5195 = vmatprep.subr.mxu0 0.0
      %5196 = vmatpush1.msra.mxu0 0.0
      %5197 = vmatprep.subr.mxu0 0.0
      %5198 = vmatpush1.msra.mxu0 0.0
      %5199 = vmatprep.subr.mxu0 0.0
      %5200 = vmatpush1.msra.mxu0 0.0
      %5201 = vmatprep.subr.mxu0 0.0
      %5202 = vmatpush1.msra.mxu0 0.0
      %5203 = vmatprep.subr.mxu0 0.0
      %5204 = vmatpush1.msra.mxu0 0.0
      %5205 = vmatprep.subr.mxu0 0.0
      %5206 = vmatpush1.msra.mxu0 0.0
      %5207 = vmatprep.subr.mxu0 0.0
      %5208 = vmatpush1.msra.mxu0 0.0
      %5209 = vmatprep.subr.mxu0 0.0
      %5210 = vmatpush1.msra.mxu0 0.0
      %5211 = vmatprep.subr.mxu0 0.0
      %5212 = vmatpush1.msra.mxu0 0.0
      %5213 = vmatprep.subr.mxu0 0.0
      %5214 = vmatpush1.msra.mxu0 0.0
      %5215 = vmatprep.subr.mxu0 0.0
      %5216 = vmatpush1.msra.mxu0 0.0
      %5217 = vmatprep.subr.mxu0 0.0
      %5218 = vmatpush1.msra.mxu0 0.0
      %5219 = vmatprep.subr.mxu0 0.0
      %5220 = vmatpush1.msra.mxu0 0.0
      %5221 = vmatprep.subr.mxu0 0.0
      %5222 = vmatpush1.msra.mxu0 0.0
      %5223 = vmatprep.subr.mxu0 0.0
      %5224 = vmatpush1.msra.mxu0 0.0
      %5225 = vmatprep.subr.mxu0 0.0
      %5226 = vmatpush1.msra.mxu0 0.0
      %5227 = vmatprep.subr.mxu0 0.0
      %5228 = vmatpush1.msra.mxu0 0.0
      %5229 = vmatprep.subr.mxu0 0.0
      %5230 = vmatpush1.msra.mxu0 0.0
      %5231 = vmatprep.subr.mxu0 0.0
      %5232 = vmatpush1.msra.mxu0 0.0
      %5233 = vmatprep.subr.mxu0 0.0
      %5234 = vmatpush1.msra.mxu0 0.0
      %5235 = vmatprep.subr.mxu0 0.0
      %5236 = vmatpush1.msra.mxu0 0.0
      %5237 = vmatprep.subr.mxu0 0.0
      %5238 = vmatpush1.msra.mxu0 0.0
      %5239 = vmatprep.subr.mxu0 0.0
      %5240 = vmatpush1.msra.mxu0 0.0
      %5241 = vmatprep.subr.mxu0 0.0
      %5242 = vmatpush1.msra.mxu0 0.0
      %5243 = vmatprep.subr.mxu0 0.0
      %5244 = vmatpush1.msra.mxu0 0.0
      %5245 = vmatprep.subr.mxu0 0.0
      %5246 = vmatpush1.msra.mxu0 0.0
      %5247 = vmatprep.subr.mxu0 0.0
      %5248 = vmatpush1.msra.mxu0 0.0
      %5249 = vmatprep.subr.mxu0 0.0
      %5250 = vmatpush1.msra.mxu0 0.0
      %5251 = vmatprep.mubr.f32.mxu0 0.0
      %5252 = vmatmul.mubr.f32.gmra.mrb[0].mxu0 %v5092
      %v5253 = vpop.f32.mrb[0].mxu0
      %v5254 = vadd.f32 %v5089, %v5253
      %v5255 = vpop.f32.mrb[0].mxu0
      %5256 = vmatprep.mubr.f32.mxu0 0.0
      %5257 = vmatmul.mubr.f32.gmra.mrb[0].mxu0 %v5095
      %v5258 = vpop.f32.mrb[0].mxu0
      %v5259 = vadd.f32 %v5089, %v5258
      %v5260 = vpop.f32.mrb[0].mxu0
      %5261 = vmatprep.mubr.f32.mxu0 0.0
      %5262 = vmatmul.mubr.f32.gmra.mrb[0].mxu0 %v5098
      %v5263 = vpop.f32.mrb[0].mxu0
      %v5264 = vadd.f32 %v5089, %v5263
      %v5265 = vpop.f32.mrb[0].mxu0
      %5266 = vmatprep.mubr.f32.mxu0 0.0
      %5267 = vmatmul.mubr.f32.gmra.mrb[0].mxu0 %v5101
      %v5268 = vpop.f32.mrb[0].mxu0
      %v5269 = vadd.f32 %v5089, %v5268
      %v5270 = vpop.f32.mrb[0].mxu0
      %5271 = vmatprep.mubr.f32.mxu0 0.0
      %5272 = vmatmul.mubr.f32.gmra.mrb[0].mxu0 %v5104
      %v5273 = vpop.f32.mrb[0].mxu0
      %v5274 = vadd.f32 %v5089, %v5273
      %v5275 = vpop.f32.mrb[0].mxu0
      %5276 = vmatprep.mubr.f32.mxu0 0.0
      %5277 = vmatmul.mubr.f32.gmra.mrb[0].mxu0 %v5107
      %v5278 = vpop.f32.mrb[0].mxu0
      %v5279 = vadd.f32 %v5089, %v5278
      %v5280 = vpop.f32.mrb[0].mxu0
      %5281 = vmatprep.mubr.f32.mxu0 0.0
      %5282 = vmatmul.mubr.f32.gmra.mrb[0].mxu0 %v5110
      %v5283 = vpop.f32.mrb[0].mxu0
      %v5284 = vadd.f32 %v5089, %v5283
      %v5285 = vpop.f32.mrb[0].mxu0
      %5286 = vmatprep.mubr.f32.mxu0 0.0
      %5287 = vmatmul.mubr.f32.gmra.mrb[0].mxu0 %v5113
      %v5288 = vpop.f32.mrb[0].mxu0
      %v5289 = vadd.f32 %v5089, %v5288
      %v5290 = vpop.f32.mrb[0].mxu0
      %5291 = vmatprep.mubr.f32.mxu0 0.0
      %5292 = vmatmul.mubr.f32.gmra.mrb[0].mxu0 %v5116
      %v5293 = vpop.f32.mrb[0].mxu0
      %v5294 = vadd.f32 %v5089, %v5293
      %v5295 = vpop.f32.mrb[0].mxu0
      %5296 = vmatprep.mubr.f32.mxu0 0.0
      %5297 = vmatmul.mubr.f32.gmra.mrb[0].mxu0 %v5119
      %v5298 = vpop.f32.mrb[0].mxu0
      %v5299 = vadd.f32 %v5089, %v5298
      %v5300 = vpop.f32.mrb[0].mxu0
      %5301 = vmatprep.mubr.f32.mxu0 0.0
      %5302 = vmatmul.mubr.f32.gmra.mrb[0].mxu0 %v5122
      %v5303 = vpop.f32.mrb[0].mxu0
      %v5304 = vadd.f32 %v5089, %v5303
      %v5305 = vpop.f32.mrb[0].mxu0
      %5306 = vmatprep.mubr.f32.mxu0 0.0
      %5307 = vmatmul.mubr.f32.gmra.mrb[0].mxu0 %v5125
      %v5308 = vpop.f32.mrb[0].mxu0
      %v5309 = vadd.f32 %v5089, %v5308
      %v5310 = vpop.f32.mrb[0].mxu0
      %5311 = vmatprep.mubr.f32.mxu0 0.0
      %5312 = vmatmul.mubr.f32.gmra.mrb[0].mxu0 %v5128
      %v5313 = vpop.f32.mrb[0].mxu0
      %v5314 = vadd.f32 %v5089, %v5313
      %v5315 = vpop.f32.mrb[0].mxu0
      %5316 = vmatprep.mubr.f32.mxu0 0.0
      %5317 = vmatmul.mubr.f32.gmra.mrb[0].mxu0 %v5131
      %v5318 = vpop.f32.mrb[0].mxu0
      %v5319 = vadd.f32 %v5089, %v5318
      %v5320 = vpop.f32.mrb[0].mxu0
      %5321 = vmatprep.mubr.f32.mxu0 0.0
      %5322 = vmatmul.mubr.f32.gmra.mrb[0].mxu0 %v5134
      %v5323 = vpop.f32.mrb[0].mxu0
      %v5324 = vadd.f32 %v5089, %v5323
      %v5325 = vpop.f32.mrb[0].mxu0
      %5326 = vmatprep.mubr.f32.mxu0 0.0
      %5327 = vmatmul.mubr.f32.gmra.mrb[0].mxu0 %v5137
      %v5328 = vpop.f32.mrb[0].mxu0
      %v5329 = vadd.f32 %v5089, %v5328
      %v5330 = vpop.f32.mrb[0].mxu0
      %5331 = vmatprep.mubr.f32.mxu0 0.0
      %5332 = vmatmul.mubr.f32.gmra.mrb[0].mxu0 %v5140
      %v5333 = vpop.f32.mrb[0].mxu0
      %v5334 = vadd.f32 %v5089, %v5333
      %v5335 = vpop.f32.mrb[0].mxu0
      %5336 = vmatprep.mubr.f32.mxu0 0.0
      %5337 = vmatmul.mubr.f32.gmra.mrb[0].mxu0 %v5143
      %v5338 = vpop.f32.mrb[0].mxu0
      %v5339 = vadd.f32 %v5089, %v5338
      %v5340 = vpop.f32.mrb[0].mxu0
      %5341 = vmatprep.mubr.f32.mxu0 0.0
      %5342 = vmatmul.mubr.f32.gmra.mrb[0].mxu0 %v5146
      %v5343 = vpop.f32.mrb[0].mxu0
      %v5344 = vadd.f32 %v5089, %v5343
      %v5345 = vpop.f32.mrb[0].mxu0
      %5346 = vmatprep.mubr.f32.mxu0 0.0
      %5347 = vmatmul.mubr.f32.gmra.mrb[0].mxu0 %v5149
      %v5348 = vpop.f32.mrb[0].mxu0
      %v5349 = vadd.f32 %v5089, %v5348
      %v5350 = vpop.f32.mrb[0].mxu0
      %5351 = vmatprep.mubr.f32.mxu0 0.0
      %5352 = vmatmul.mubr.f32.gmra.mrb[0].mxu0 %v5152
      %v5353 = vpop.f32.mrb[0].mxu0
      %v5354 = vadd.f32 %v5089, %v5353
      %v5355 = vpop.f32.mrb[0].mxu0
      %5356 = vmatprep.mubr.f32.mxu0 0.0
      %5357 = vmatmul.mubr.f32.gmra.mrb[0].mxu0 %v5155
      %v5358 = vpop.f32.mrb[0].mxu0
      %v5359 = vadd.f32 %v5089, %v5358
      %v5360 = vpop.f32.mrb[0].mxu0
      %5361 = vmatprep.mubr.f32.mxu0 0.0
      %5362 = vmatmul.mubr.f32.gmra.mrb[0].mxu0 %v5158
      %v5363 = vpop.f32.mrb[0].mxu0
      %v5364 = vadd.f32 %v5089, %v5363
      %v5365 = vpop.f32.mrb[0].mxu0
      %5366 = vmatprep.mubr.f32.mxu0 0.0
      %5367 = vmatmul.mubr.f32.gmra.mrb[0].mxu0 %v5161
      %v5368 = vpop.f32.mrb[0].mxu0
      %v5369 = vadd.f32 %v5089, %v5368
      %v5370 = vpop.f32.mrb[0].mxu0
      %5371 = vmatprep.mubr.f32.mxu0 0.0
      %5372 = vmatmul.mubr.f32.gmra.mrb[0].mxu0 %v5164
      %v5373 = vpop.f32.mrb[0].mxu0
      %v5374 = vadd.f32 %v5089, %v5373
      %v5375 = vpop.f32.mrb[0].mxu0
      %5376 = vmatprep.mubr.f32.mxu0 0.0
      %5377 = vmatmul.mubr.f32.gmra.mrb[0].mxu0 %v5167
      %v5378 = vpop.f32.mrb[0].mxu0
      %v5379 = vadd.f32 %v5089, %v5378
      %v5380 = vpop.f32.mrb[0].mxu0
      %5381 = vmatprep.mubr.f32.mxu0 0.0
      %5382 = vmatmul.mubr.f32.gmra.mrb[0].mxu0 %v5170
      %v5383 = vpop.f32.mrb[0].mxu0
      %v5384 = vadd.f32 %v5089, %v5383
      %v5385 = vpop.f32.mrb[0].mxu0
      %5386 = vmatprep.mubr.f32.mxu0 0.0
      %5387 = vmatmul.mubr.f32.gmra.mrb[0].mxu0 %v5173
      %v5388 = vpop.f32.mrb[0].mxu0
      %v5389 = vadd.f32 %v5089, %v5388
      %v5390 = vpop.f32.mrb[0].mxu0
      %5391 = vmatprep.mubr.f32.mxu0 0.0
      %5392 = vmatmul.mubr.f32.gmra.mrb[0].mxu0 %v5176
      %v5393 = vpop.f32.mrb[0].mxu0
      %v5394 = vadd.f32 %v5089, %v5393
      %v5395 = vpop.f32.mrb[0].mxu0
      %5396 = vmatprep.mubr.f32.mxu0 0.0
      %5397 = vmatmul.mubr.f32.gmra.mrb[0].mxu0 %v5179
      %v5398 = vpop.f32.mrb[0].mxu0
      %v5399 = vadd.f32 %v5089, %v5398
      %v5400 = vpop.f32.mrb[0].mxu0
      %5401 = vmatprep.mubr.f32.mxu0 0.0
      %5402 = vmatmul.mubr.f32.gmra.mrb[0].mxu0 %v5182
      %v5403 = vpop.f32.mrb[0].mxu0
      %v5404 = vadd.f32 %v5089, %v5403
      %v5405 = vpop.f32.mrb[0].mxu0
      %5406 = vmatprep.mubr.f32.mxu0 0.0
      %5407 = vmatmul.mubr.f32.gmra.mrb[0].mxu0 %v5185
      %v5408 = vpop.f32.mrb[0].mxu0
      %v5409 = vadd.f32 %v5089, %v5408
      %v5410 = vpop.f32.mrb[0].mxu0
      %5411 = vdwg.mxu0
      %vm5412 = vcmp.ge.f32.partialorder %v5254, 0.0
      %vm5413 = vcmp.ge.f32.partialorder %v5259, 0.0
      %vm5414 = vcmp.ge.f32.partialorder %v5264, 0.0
      %vm5415 = vcmp.ge.f32.partialorder %v5269, 0.0
      %vm5416 = vcmp.ge.f32.partialorder %v5274, 0.0
      %vm5417 = vcmp.ge.f32.partialorder %v5279, 0.0
      %vm5418 = vcmp.ge.f32.partialorder %v5284, 0.0
      %vm5419 = vcmp.ge.f32.partialorder %v5289, 0.0
      %vm5420 = vcmp.ge.f32.partialorder %v5294, 0.0
      %vm5421 = vcmp.ge.f32.partialorder %v5299, 0.0
      %vm5422 = vcmp.ge.f32.partialorder %v5304, 0.0
      %vm5423 = vcmp.ge.f32.partialorder %v5309, 0.0
      %vm5424 = vcmp.ge.f32.partialorder %v5314, 0.0
      %vm5425 = vcmp.ge.f32.partialorder %v5319, 0.0
      %vm5426 = vcmp.ge.f32.partialorder %v5324, 0.0
      %vm5427 = vcmp.ge.f32.partialorder %v5329, 0.0
      %vm5428 = vcmp.ge.f32.partialorder %v5334, 0.0
      %vm5429 = vcmp.ge.f32.partialorder %v5339, 0.0
      %vm5430 = vcmp.ge.f32.partialorder %v5344, 0.0
      %vm5431 = vcmp.ge.f32.partialorder %v5349, 0.0
      %vm5432 = vcmp.ge.f32.partialorder %v5354, 0.0
      %vm5433 = vcmp.ge.f32.partialorder %v5359, 0.0
      %vm5434 = vcmp.ge.f32.partialorder %v5364, 0.0
      %vm5435 = vcmp.ge.f32.partialorder %v5369, 0.0
      %vm5436 = vcmp.ge.f32.partialorder %v5374, 0.0
      %vm5437 = vcmp.ge.f32.partialorder %v5379, 0.0
      %vm5438 = vcmp.ge.f32.partialorder %v5384, 0.0
      %vm5439 = vcmp.ge.f32.partialorder %v5389, 0.0
      %vm5440 = vcmp.ge.f32.partialorder %v5394, 0.0
      %vm5441 = vcmp.ge.f32.partialorder %v5399, 0.0
      %vm5442 = vcmp.ge.f32.partialorder %v5404, 0.0
      %vm5443 = vcmp.ge.f32.partialorder %v5409, 0.0
      %v5444 = vmul.f32 %v5254, 0.1
      %v5445 = vmul.f32 %v5259, 0.1
      %v5446 = vmul.f32 %v5264, 0.1
      %v5447 = vmul.f32 %v5269, 0.1
      %v5448 = vmul.f32 %v5274, 0.1
      %v5449 = vmul.f32 %v5279, 0.1
      %v5450 = vmul.f32 %v5284, 0.1
      %v5451 = vmul.f32 %v5289, 0.1
      %v5452 = vmul.f32 %v5294, 0.1
      %v5453 = vmul.f32 %v5299, 0.1
      %v5454 = vmul.f32 %v5304, 0.1
      %v5455 = vmul.f32 %v5309, 0.1
      %v5456 = vmul.f32 %v5314, 0.1
      %v5457 = vmul.f32 %v5319, 0.1
      %v5458 = vmul.f32 %v5324, 0.1
      %v5459 = vmul.f32 %v5329, 0.1
      %v5460 = vmul.f32 %v5334, 0.1
      %v5461 = vmul.f32 %v5339, 0.1
      %v5462 = vmul.f32 %v5344, 0.1
      %v5463 = vmul.f32 %v5349, 0.1
      %v5464 = vmul.f32 %v5354, 0.1
      %v5465 = vmul.f32 %v5359, 0.1
      %v5466 = vmul.f32 %v5364, 0.1
      %v5467 = vmul.f32 %v5369, 0.1
      %v5468 = vmul.f32 %v5374, 0.1
      %v5469 = vmul.f32 %v5379, 0.1
      %v5470 = vmul.f32 %v5384, 0.1
      %v5471 = vmul.f32 %v5389, 0.1
      %v5472 = vmul.f32 %v5394, 0.1
      %v5473 = vmul.f32 %v5399, 0.1
      %v5474 = vmul.f32 %v5404, 0.1
      %v5475 = vmul.f32 %v5409, 0.1
      %v5476 = vsel %vm5412, %v5254, %v5444
      %v5477 = vsel %vm5413, %v5259, %v5445
      %v5478 = vsel %vm5414, %v5264, %v5446
      %v5479 = vsel %vm5415, %v5269, %v5447
      %v5480 = vsel %vm5416, %v5274, %v5448
      %v5481 = vsel %vm5417, %v5279, %v5449
      %v5482 = vsel %vm5418, %v5284, %v5450
      %v5483 = vsel %vm5419, %v5289, %v5451
      %v5484 = vsel %vm5420, %v5294, %v5452
      %v5485 = vsel %vm5421, %v5299, %v5453
      %v5486 = vsel %vm5422, %v5304, %v5454
      %v5487 = vsel %vm5423, %v5309, %v5455
      %v5488 = vsel %vm5424, %v5314, %v5456
      %v5489 = vsel %vm5425, %v5319, %v5457
      %v5490 = vsel %vm5426, %v5324, %v5458
      %v5491 = vsel %vm5427, %v5329, %v5459
      %v5492 = vsel %vm5428, %v5334, %v5460
      %v5493 = vsel %vm5429, %v5339, %v5461
      %v5494 = vsel %vm5430, %v5344, %v5462
      %v5495 = vsel %vm5431, %v5349, %v5463
      %v5496 = vsel %vm5432, %v5354, %v5464
      %v5497 = vsel %vm5433, %v5359, %v5465
      %v5498 = vsel %vm5434, %v5364, %v5466
      %v5499 = vsel %vm5435, %v5369, %v5467
      %v5500 = vsel %vm5436, %v5374, %v5468
      %v5501 = vsel %vm5437, %v5379, %v5469
      %v5502 = vsel %vm5438, %v5384, %v5470
      %v5503 = vsel %vm5439, %v5389, %v5471
      %v5504 = vsel %vm5440, %v5394, %v5472
      %v5505 = vsel %vm5441, %v5399, %v5473
      %v5506 = vsel %vm5442, %v5404, %v5474
      %v5507 = vsel %vm5443, %v5409, %v5475
      %5508 = vst.msk [vmem:[%s305] sm:$0xff] %vm1603, %v5476
      %5509 = vst.msk [vmem:[%s305 + $0x8] sm:$0xff] %vm1603, %v5477
      %5510 = vst.msk [vmem:[%s305 + $0x10] sm:$0xff] %vm1603, %v5478
      %5511 = vst.msk [vmem:[%s305 + $0x18] sm:$0xff] %vm1603, %v5479
      %5512 = vst.msk [vmem:[%s305 + $0x20] sm:$0xff] %vm1603, %v5480
      %5513 = vst.msk [vmem:[%s305 + $0x28] sm:$0xff] %vm1603, %v5481
      %5514 = vst.msk [vmem:[%s305 + $0x30] sm:$0xff] %vm1603, %v5482
      %5515 = vst.msk [vmem:[%s305 + $0x38] sm:$0xff] %vm1603, %v5483
      %5516 = vst.msk [vmem:[%s305 + $0x40] sm:$0xff] %vm1603, %v5484
      %5517 = vst.msk [vmem:[%s305 + $0x48] sm:$0xff] %vm1603, %v5485
      %5518 = vst.msk [vmem:[%s305 + $0x50] sm:$0xff] %vm1603, %v5486
      %5519 = vst.msk [vmem:[%s305 + $0x58] sm:$0xff] %vm1603, %v5487
      %5520 = vst.msk [vmem:[%s305 + $0x60] sm:$0xff] %vm1603, %v5488
      %5521 = vst.msk [vmem:[%s305 + $0x68] sm:$0xff] %vm1603, %v5489
      %5522 = vst.msk [vmem:[%s305 + $0x70] sm:$0xff] %vm1603, %v5490
      %5523 = vst.msk [vmem:[%s305 + $0x78] sm:$0xff] %vm1603, %v5491
      %5524 = vst.msk [vmem:[%s305 + $0x80] sm:$0xff] %vm1603, %v5492
      %5525 = vst.msk [vmem:[%s305 + $0x88] sm:$0xff] %vm1603, %v5493
      %5526 = vst.msk [vmem:[%s305 + $0x90] sm:$0xff] %vm1603, %v5494
      %5527 = vst.msk [vmem:[%s305 + $0x98] sm:$0xff] %vm1603, %v5495
      %5528 = vst.msk [vmem:[%s305 + $0xa0] sm:$0xff] %vm1603, %v5496
      %5529 = vst.msk [vmem:[%s305 + $0xa8] sm:$0xff] %vm1603, %v5497
      %5530 = vst.msk [vmem:[%s305 + $0xb0] sm:$0xff] %vm1603, %v5498
      %5531 = vst.msk [vmem:[%s305 + $0xb8] sm:$0xff] %vm1603, %v5499
      %5532 = vst.msk [vmem:[%s305 + $0xc0] sm:$0xff] %vm1603, %v5500
      %5533 = vst.msk [vmem:[%s305 + $0xc8] sm:$0xff] %vm1603, %v5501
      %5534 = vst.msk [vmem:[%s305 + $0xd0] sm:$0xff] %vm1603, %v5502
      %5535 = vst.msk [vmem:[%s305 + $0xd8] sm:$0xff] %vm1603, %v5503
      %5536 = vst.msk [vmem:[%s305 + $0xe0] sm:$0xff] %vm1603, %v5504
      %5537 = vst.msk [vmem:[%s305 + $0xe8] sm:$0xff] %vm1603, %v5505
      %5538 = vst.msk [vmem:[%s305 + $0xf0] sm:$0xff] %vm1603, %v5506
      %5539 = vst.msk [vmem:[%s305 + $0xf8] sm:$0xff] %vm1603, %v5507
      %p5540 = scmp.lt.s32.totalorder %s19, 1
      %s5541 = scalar_select %p5540, %s19, 1
      %s5542 = smul.addr %s5541, 32
      %s5543 = smul.addr %s5542, 8
      %s5544 = scalar_lea.vmem %s8, %s5543
      // Predicated region
      $region53: #{gra_denseblock_forward.1} parent=51 // pred_check
        %p5545 = pneg %p210
      $region54: #{gra_denseblock_forward.1} parent=51 // pred_check_branch
        %5547 = sbr.rel (%p5545) target = $region56
      $region55: #{gra_denseblock_forward.1} parent=51 // pred_region
        _
      $region56: #{gra_denseblock_forward.1} parent=51 // pred_fallthru
        _
    $region52: #{gra_denseblock_forward.1} parent=5 // pred_fallthru
      _
    %p5548 = scmp.le.s32.totalorder 2, %s14
    // Predicated region
    $region57: #{gra_denseblock_forward.1} parent=5 // pred_check
      %p5549 = pneg %p5548
    $region58: #{gra_denseblock_forward.1} parent=5 // pred_check_branch
      %5551 = sbr.rel (%p5549) target = $region60
    $region59: #{gra_denseblock_forward.1} parent=5 // pred_region
      %s5552 = ssub.s32 %s14, 2
      // Predicated region
      $region61: #{gra_denseblock_forward.1} parent=59 // pred_check
        %p5553 = pneg %p216
      $region62: #{gra_denseblock_forward.1} parent=59 // pred_check_branch
        %5555 = sbr.rel (%p5553) target = $region64
      $region63: #{gra_denseblock_forward.1} parent=59 // pred_region
        %p5556 = scmp.lt.s32.totalorder %s20, 1
        %s5557 = scalar_select %p5556, %s20, 1
        %s5558 = smul.addr %s5557, 32
        %s5559 = smul.addr %s5558, 8
        %s5560 = scalar_lea.vmem %s8, %s5559
      $region64: #{gra_denseblock_forward.1} parent=59 // pred_fallthru
        _
    $region60: #{gra_denseblock_forward.1} parent=5 // pred_fallthru
      _
  $region6: #{gra_denseblock_forward.1} parent=0 // loop_footer
    %s18 = sadd.s32 1, %s14
  $region7: #{gra_denseblock_forward.1} parent=0 // loop_footer_branch
    %13 = sbr.rel target = $region3
  $region8: #{gra_denseblock_forward.1} parent=0 // loop_exit
    _

</llo_original>
